<compile_context>
chip_gen: v5e
topology: v5e:2x2
jax: 0.10.0
libtpu: 0.0.40
codegen_flags: <defaults>
</compile_context>

<pallas_src>
import functools
import math

import jax
import jax.numpy as jnp
from jax.experimental import pallas as pl
from jax.experimental.pallas import tpu as pltpu


# --------------------------------------------------------------------------
# helpers used INSIDE the kernel
# --------------------------------------------------------------------------
def _gelu(x):
    # tanh approximation of PyTorch nn.GELU (erf-based); tanh rides the EUP slot.
    c = math.sqrt(2.0 / math.pi)
    return 0.5 * x * (1.0 + jnp.tanh(c * (x + 0.044715 * x * x * x)))


def _layernorm(x, g_ref, b_ref, eps=1e-5):
    mu = jnp.mean(x, axis=-1, keepdims=True)
    xc = x - mu
    var = jnp.mean(xc * xc, axis=-1, keepdims=True)
    return xc * jax.lax.rsqrt(var + eps) * g_ref[...] + b_ref[...]


def _dw3x3_tokens(pad_ref, x_tok, w_ref, b_ref, not_left, not_right, W):
    """Depthwise 3x3 conv (stride 1, zero pad 1) on row-major (N, Cc) tokens.

    pad_ref: VMEM scratch (N + 2*(W+1), Cc).  Vertical out-of-range taps land
    in its zero borders; horizontal wrap-around across rows is killed with the
    column masks.  Returns conv(x) + bias in f32.
    """
    N, Cc = x_tok.shape
    P = W + 1
    zeros_border = jnp.zeros((P, Cc), jnp.float32)
    # Re-zero borders every step: scratch persists per-core and under megacore
    # "parallel" partitioning program_id==0 never runs on the second core.
    pad_ref[0:P, :] = zeros_border
    pad_ref[P + N:P + N + P, :] = zeros_border
    pad_ref[P:P + N, :] = x_tok
    w = w_ref[...].astype(jnp.float32)               # (9, Cc), row = dy*3+dx
    acc = x_tok * w[4:5, :] + b_ref[...]             # center tap + bias
    for dy in range(3):
        for dx in range(3):
            if dy == 1 and dx == 1:
                continue
            k = dy * 3 + dx
            start = P + (dy - 1) * W + (dx - 1)
            tap = pad_ref[start:start + N, :] * w[k:k + 1, :]
            if dx == 0:
                tap = jnp.where(not_left, tap, 0.0)
            elif dx == 2:
                tap = jnp.where(not_right, tap, 0.0)
            acc = acc + tap
    return acc


# --------------------------------------------------------------------------
# fused CMTBlock kernel (one grid step == one batch element, all in VMEM)
# --------------------------------------------------------------------------
def _cmt_block_kernel(x_ref, rel_ref,
                      dw0w_ref, dw0b_ref,
                      ln1g_ref, ln1b_ref,
                      wq_ref, wk_ref, wv_ref, wp_ref, bp_ref,
                      ln2g_ref, ln2b_ref,
                      wc1_ref, bc1_ref, s1_ref, t1_ref,
                      dw1w_ref, dw1b_ref, s2_ref, t2_ref,
                      wc2_ref, c2b_ref,
                      o_ref,
                      pad0_ref, pad1_ref, ocat_ref,
                      *, H, W, heads, vhd):
    N = H * W
    C = x_ref.shape[-1]

    # column masks (shared by both depthwise convs)
    col = jax.lax.broadcasted_iota(jnp.int32, (N, 1), 0) % W
    not_left = col > 0
    not_right = col < (W - 1)

    # --- 1) local perception unit: x = dwconv3x3(x) + x --------------------
    x_tok = x_ref[0].astype(jnp.float32)                         # (N, C)
    x1 = x_tok + _dw3x3_tokens(pad0_ref, x_tok, dw0w_ref, dw0b_ref,
                               not_left, not_right, W)

    # --- 2) attention branch: x = x + proj(attn(LN1(x))) -------------------
    xn_b = _layernorm(x1, ln1g_ref, ln1b_ref).astype(jnp.bfloat16)
    # TODO(synk): for large head counts roll this loop with lax.fori_loop to
    # bound live ranges (needs dynamic lane-offset stores into ocat_ref).
    for h in range(heads):
        # per-head weights indexed on the leading axis (no lane slicing);
        # softmax scale is pre-folded into wq.
        qh = jnp.dot(xn_b, wq_ref[h], preferred_element_type=jnp.float32)
        kh = jnp.dot(xn_b, wk_ref[h], preferred_element_type=jnp.float32)
        vh = jnp.dot(xn_b, wv_ref[h], preferred_element_type=jnp.float32)
        s = jax.lax.dot_general(qh.astype(jnp.bfloat16), kh.astype(jnp.bfloat16),
                                (((1,), (1,)), ((), ())),
                                preferred_element_type=jnp.float32)   # (N, N)
        s = s + rel_ref[h].astype(jnp.float32)
        s = s - jnp.max(s, axis=-1, keepdims=True)
        p = jnp.exp(s)
        p = p * pl.reciprocal(jnp.sum(p, axis=-1, keepdims=True), approx=True)
        oh = jnp.dot(p.astype(jnp.bfloat16), vh.astype(jnp.bfloat16),
                     preferred_element_type=jnp.float32)              # (N, vhd)
        ocat_ref[:, h * vhd:(h + 1) * vhd] = oh
    # merged output projection: ONE (N,C)@(C,C) matmul + bias
    attn_out = jnp.dot(ocat_ref[...].astype(jnp.bfloat16), wp_ref[...],
                       preferred_element_type=jnp.float32) + bp_ref[...]
    x2 = x1 + attn_out

    # --- 3) MLP branch: x = x + mlp(LN2(x)) ---------------------------------
    xn2 = _layernorm(x2, ln2g_ref, ln2b_ref)
    h1 = jnp.dot(xn2.astype(jnp.bfloat16), wc1_ref[...],
                 preferred_element_type=jnp.float32) + bc1_ref[...]
    h1 = _gelu(h1) * s1_ref[...] + t1_ref[...]                   # 1x1+GELU+BN
    h2 = h1 + _dw3x3_tokens(pad1_ref, h1, dw1w_ref, dw1b_ref,
                            not_left, not_right, W)              # dw3x3 + res
    h2 = _gelu(h2) * s2_ref[...] + t2_ref[...]                   # GELU + BN
    m = jnp.dot(h2.astype(jnp.bfloat16), wc2_ref[...],
                preferred_element_type=jnp.float32) + c2b_ref[...]  # 1x1+BN
    o_ref[0] = (x2 + m).astype(o_ref.dtype)


# --------------------------------------------------------------------------
# JAX wrapper: fold BN / pack weights once, launch the fused kernel
# --------------------------------------------------------------------------
def cmt_block_forward(x, H, W, relative_pos, p):
    B, N, C = x.shape
    assert N == H * W
    assert H >= 2 and W >= 2, "3x3 dwconv token-shift path assumes H, W >= 2"
    heads = p["num_heads"]
    qk_dim = p["Wq"].shape[1]
    assert qk_dim % heads == 0 and C % heads == 0
    qhd = qk_dim // heads
    vhd = C // heads
    hid = p["Wc1"].shape[1]
    scale = float((C // heads) ** -0.5)        # PyTorch: (dim//num_heads)**-0.5
    eps = 1e-5

    def bn_fold(g, b, mean, var):              # eval-mode BN -> scale/shift
        s = g / jnp.sqrt(var + eps)
        return s.astype(jnp.float32), (b - mean * s).astype(jnp.float32)

    s1, t1 = bn_fold(p["bn1_g"], p["bn1_b"], p["bn1_m"], p["bn1_v"])
    s2, t2 = bn_fold(p["bnp_g"], p["bnp_b"], p["bnp_m"], p["bnp_v"])
    s3, t3 = bn_fold(p["bn2_g"], p["bn2_b"], p["bn2_m"], p["bn2_v"])

    r1 = lambda a: jnp.asarray(a, jnp.float32).reshape(1, -1)

    def per_head(w, d):                        # (C, heads*d) -> (heads, C, d) bf16
        w = jnp.asarray(w, jnp.float32).reshape(C, heads, d)
        return jnp.transpose(w, (1, 0, 2)).astype(jnp.bfloat16)

    # per-head bf16 MXU weight stacks (leading head axis; scale folded into Wq)
    wq3 = per_head(p["Wq"] * scale, qhd)
    wk3 = per_head(p["Wk"], qhd)
    wv3 = per_head(p["Wv"], vhd)
    wp = p["Wp"].astype(jnp.bfloat16)
    wc1 = p["Wc1"].astype(jnp.bfloat16)
    wc2 = (p["Wc2"] * s3[None, :]).astype(jnp.bfloat16)   # fold final BN scale
    c2b = r1(p["bc2"] * s3 + t3)                          # fold bias + BN shift

    dw0w = p["dw0_w"].reshape(9, C).astype(jnp.float32)   # row = dy*3+dx
    dw1w = p["dw1_w"].reshape(9, hid).astype(jnp.float32)
    rel_b = relative_pos.astype(jnp.bfloat16)             # bf16 resident rel_pos

    args = (x, rel_b, dw0w, r1(p["dw0_b"]), r1(p["ln1_g"]), r1(p["ln1_b"]),
            wq3, wk3, wv3, wp, r1(p["bp"]), r1(p["ln2_g"]), r1(p["ln2_b"]),
            wc1, r1(p["bc1"]), r1(s1), r1(t1),
            dw1w, r1(p["dw1_b"]), r1(s2), r1(t2), wc2, c2b)

    # explicit VMEM budget from the resident footprint (double-buffered blocks
    # + weights + scratches) plus margin for live f32 intermediates.
    P = W + 1
    blk_bytes = 2 * N * C * x.dtype.itemsize                     # x + out block
    wgt_bytes = sum(int(a.size) * a.dtype.itemsize for a in args[1:])
    scratch_bytes = (N + 2 * P) * (C + hid) * 4 + N * C * 4
    live_bytes = (N * N + 4 * N * hid + 6 * N * C) * 4
    est = 2 * (blk_bytes + wgt_bytes) + scratch_bytes + live_bytes
    vmem_limit = int(min(48 * 2**20, est + 8 * 2**20))           # < v7x 64 MiB

    kernel = functools.partial(_cmt_block_kernel, H=H, W=W, heads=heads, vhd=vhd)
    const2 = lambda b: (0, 0)
    const3 = lambda b: (0, 0, 0)
    return pl.pallas_call(
        kernel,
        out_shape=jax.ShapeDtypeStruct((B, N, C), x.dtype),
        grid=(B,),
        in_specs=[
            pl.BlockSpec((1, N, C), lambda b: (b, 0, 0)),     # x
            pl.BlockSpec((heads, N, N), const3),              # rel_pos (bf16, resident)
            pl.BlockSpec((9, C), const2),                     # dw0 weight
            pl.BlockSpec((1, C), const2),                     # dw0 bias
            pl.BlockSpec((1, C), const2),                     # ln1 gamma
            pl.BlockSpec((1, C), const2),                     # ln1 beta
            pl.BlockSpec((heads, C, qhd), const3),            # Wq per head (scaled)
            pl.BlockSpec((heads, C, qhd), const3),            # Wk per head
            pl.BlockSpec((heads, C, vhd), const3),            # Wv per head
            pl.BlockSpec((C, C), const2),                     # Wp
            pl.BlockSpec((1, C), const2),                     # bp
            pl.BlockSpec((1, C), const2),                     # ln2 gamma
            pl.BlockSpec((1, C), const2),                     # ln2 beta
            pl.BlockSpec((C, hid), const2),                   # Wc1
            pl.BlockSpec((1, hid), const2),                   # bc1
            pl.BlockSpec((1, hid), const2),                   # bn1 scale
            pl.BlockSpec((1, hid), const2),                   # bn1 shift
            pl.BlockSpec((9, hid), const2),                   # dw1 weight
            pl.BlockSpec((1, hid), const2),                   # dw1 bias
            pl.BlockSpec((1, hid), const2),                   # bnp scale
            pl.BlockSpec((1, hid), const2),                   # bnp shift
            pl.BlockSpec((hid, C), const2),                   # Wc2 (BN folded)
            pl.BlockSpec((1, C), const2),                     # conv2 bias (folded)
        ],
        out_specs=pl.BlockSpec((1, N, C), lambda b: (b, 0, 0)),
        scratch_shapes=[pltpu.VMEM((N + 2 * P, C), jnp.float32),    # dwconv0 pad
                        pltpu.VMEM((N + 2 * P, hid), jnp.float32),  # dwconv1 pad
                        pltpu.VMEM((N, C), jnp.float32)],           # head concat
        compiler_params=pltpu.CompilerParams(
            dimension_semantics=("parallel",),                # megacore on v7x
            vmem_limit_bytes=vmem_limit),
    )(*args)


# --------------------------------------------------------------------------
# pure-JAX (f32, XLA) reference for correctness checking
# --------------------------------------------------------------------------
def cmt_block_reference(x, H, W, rel_pos, p):
    B, N, C = x.shape
    heads = p["num_heads"]
    qk_dim = p["Wq"].shape[1]
    qhd = qk_dim // heads
    vhd = C // heads
    scale = (C // heads) ** -0.5
    eps = 1e-5

    def ln(y, g, b):
        mu = jnp.mean(y, -1, keepdims=True)
        var = jnp.mean((y - mu) ** 2, -1, keepdims=True)
        return (y - mu) / jnp.sqrt(var + eps) * g + b

    def bn(y, g, b, m, v):
        return (y - m) / jnp.sqrt(v + eps) * g + b

    def gelu(y):
        return jax.nn.gelu(y, approximate=False)

    def dwconv(tok, w, bias):
        Cc = tok.shape[-1]
        img = tok.reshape(B, H, W, Cc)
        imgp = jnp.pad(img, ((0, 0), (1, 1), (1, 1), (0, 0)))
        acc = jnp.zeros_like(img)
        for dy in range(3):
            for dx in range(3):
                acc = acc + imgp[:, dy:dy + H, dx:dx + W, :] * w[dy, dx]
        return (acc + bias).reshape(B, N, Cc)

    x1 = x + dwconv(x, p["dw0_w"], p["dw0_b"])

    xn = ln(x1, p["ln1_g"], p["ln1_b"])
    q = (xn @ p["Wq"]).reshape(B, N, heads, qhd).transpose(0, 2, 1, 3)
    k = (xn @ p["Wk"]).reshape(B, N, heads, qhd).transpose(0, 2, 1, 3)
    v = (xn @ p["Wv"]).reshape(B, N, heads, vhd).transpose(0, 2, 1, 3)
    attn = jnp.einsum("bhnd,bhmd->bhnm", q, k) * scale + rel_pos[None]
    attn = jax.nn.softmax(attn, axis=-1)
    o = jnp.einsum("bhnm,bhmd->bhnd", attn, v).transpose(0, 2, 1, 3).reshape(B, N, C)
    x2 = x1 + (o @ p["Wp"] + p["bp"])

    xn2 = ln(x2, p["ln2_g"], p["ln2_b"])
    h1 = bn(gelu(xn2 @ p["Wc1"] + p["bc1"]),
            p["bn1_g"], p["bn1_b"], p["bn1_m"], p["bn1_v"])
    h2 = bn(gelu(h1 + dwconv(h1, p["dw1_w"], p["dw1_b"])),
            p["bnp_g"], p["bnp_b"], p["bnp_m"], p["bnp_v"])
    m = bn(h2 @ p["Wc2"] + p["bc2"],
           p["bn2_g"], p["bn2_b"], p["bn2_m"], p["bn2_v"])
    return x2 + m


# --------------------------------------------------------------------------
# deterministic synthetic parameters (shapes per CMTBlock.__init__)
# --------------------------------------------------------------------------
def init_params(key, dim, num_heads, mlp_ratio):
    hid = int(dim * mlp_ratio)
    ks = jax.random.split(key, 29)
    n = lambda k, s, sc=0.05: jax.random.normal(k, s, jnp.float32) * sc
    return dict(
        num_heads=num_heads,
        # CMTBlock.proj : depthwise Conv2d(dim, dim, 3, groups=dim)
        dw0_w=n(ks[0], (3, 3, dim)), dw0_b=n(ks[1], (dim,)),
        # norm1 / Attention (qk_ratio = 1, qkv_bias = False)
        ln1_g=1.0 + n(ks[2], (dim,)), ln1_b=n(ks[3], (dim,)),
        Wq=n(ks[4], (dim, dim)), Wk=n(ks[5], (dim, dim)), Wv=n(ks[6], (dim, dim)),
        Wp=n(ks[7], (dim, dim)), bp=n(ks[8], (dim,)),
        # norm2 / Mlp
        ln2_g=1.0 + n(ks[9], (dim,)), ln2_b=n(ks[10], (dim,)),
        Wc1=n(ks[11], (dim, hid)), bc1=n(ks[12], (hid,)),
        bn1_g=1.0 + n(ks[13], (hid,)), bn1_b=n(ks[14], (hid,)),
        bn1_m=n(ks[15], (hid,)), bn1_v=1.0 + jnp.abs(n(ks[16], (hid,))),
        dw1_w=n(ks[17], (3, 3, hid)), dw1_b=n(ks[18], (hid,)),
        bnp_g=1.0 + n(ks[19], (hid,)), bnp_b=n(ks[20], (hid,)),
        bnp_m=n(ks[21], (hid,)), bnp_v=1.0 + jnp.abs(n(ks[22], (hid,))),
        Wc2=n(ks[23], (hid, dim)), bc2=n(ks[24], (dim,)),
        bn2_g=1.0 + n(ks[25], (dim,)), bn2_b=n(ks[26], (dim,)),
        bn2_m=n(ks[27], (dim,)), bn2_v=1.0 + jnp.abs(n(ks[28], (dim,))),
    )


if __name__ == "__main__":
    B, dim, num_heads, H, W = 2, 32, 4, 8, 8
    N = H * W
    key = jax.random.PRNGKey(0)
    kx, kr, kp = jax.random.split(key, 3)
    x = jax.random.normal(kx, (B, N, dim), jnp.float32)
    # relative_pos shape (num_heads, N, N) with sr_ratio = 1
    rel_pos = jax.random.normal(kr, (num_heads, N, N), jnp.float32) * 0.1
    params = init_params(kp, dim, num_heads, mlp_ratio=4.0)

    out = jax.block_until_ready(cmt_block_forward(x, H, W, rel_pos, params))
    ref = jax.block_until_ready(cmt_block_reference(x, H, W, rel_pos, params))

    assert out.shape == (B, N, dim)
    assert bool(jnp.all(jnp.isfinite(out)))
    # bf16 MXU + tanh-GELU / approx-reciprocal tolerance
    assert float(jnp.max(jnp.abs(out - ref))) < 1e-1
    print("KERNEL_OK")
</pallas_src>

<mosaic_0001>
module attributes {stable_mosaic.version = 11 : i64} {
  func.func @_cmt_block_kernel(%arg0: i32, %arg1: memref<1x64x32xf32, #tpu.memory_space<vmem>>, %arg2: memref<4x64x64xbf16, #tpu.memory_space<vmem>>, %arg3: memref<9x32xf32, #tpu.memory_space<vmem>>, %arg4: memref<1x32xf32, #tpu.memory_space<vmem>>, %arg5: memref<1x32xf32, #tpu.memory_space<vmem>>, %arg6: memref<1x32xf32, #tpu.memory_space<vmem>>, %arg7: memref<4x32x8xbf16, #tpu.memory_space<vmem>>, %arg8: memref<4x32x8xbf16, #tpu.memory_space<vmem>>, %arg9: memref<4x32x8xbf16, #tpu.memory_space<vmem>>, %arg10: memref<32x32xbf16, #tpu.memory_space<vmem>>, %arg11: memref<1x32xf32, #tpu.memory_space<vmem>>, %arg12: memref<1x32xf32, #tpu.memory_space<vmem>>, %arg13: memref<1x32xf32, #tpu.memory_space<vmem>>, %arg14: memref<32x128xbf16, #tpu.memory_space<vmem>>, %arg15: memref<1x128xf32, #tpu.memory_space<vmem>>, %arg16: memref<1x128xf32, #tpu.memory_space<vmem>>, %arg17: memref<1x128xf32, #tpu.memory_space<vmem>>, %arg18: memref<9x128xf32, #tpu.memory_space<vmem>>, %arg19: memref<1x128xf32, #tpu.memory_space<vmem>>, %arg20: memref<1x128xf32, #tpu.memory_space<vmem>>, %arg21: memref<1x128xf32, #tpu.memory_space<vmem>>, %arg22: memref<128x32xbf16, #tpu.memory_space<vmem>>, %arg23: memref<1x32xf32, #tpu.memory_space<vmem>>, %arg24: memref<1x64x32xf32, #tpu.memory_space<vmem>>, %arg25: memref<82x32xf32, #tpu.memory_space<vmem>>, %arg26: memref<82x128xf32, #tpu.memory_space<vmem>>, %arg27: memref<64x32xf32, #tpu.memory_space<vmem>>) attributes {dimension_semantics = [#tpu.dimension_semantics<parallel>], iteration_bounds = array<i64: 2>, scalar_prefetch = 0 : i64, scratch_operands = 3 : i64, tpu.core_type = #tpu.core_type<tc>, window_params = [{transform_indices = @transform_0, window_bounds = array<i64: 1, 64, 32>}, {pipeline_mode = #tpu.pipeline_mode<synchronous>, transform_indices = @transform_1, window_bounds = array<i64: 4, 64, 64>}, {pipeline_mode = #tpu.pipeline_mode<synchronous>, transform_indices = @transform_2, window_bounds = array<i64: 9, 32>}, {pipeline_mode = #tpu.pipeline_mode<synchronous>, transform_indices = @transform_3, window_bounds = array<i64: 1, 32>}, {pipeline_mode = #tpu.pipeline_mode<synchronous>, transform_indices = @transform_4, window_bounds = array<i64: 1, 32>}, {pipeline_mode = #tpu.pipeline_mode<synchronous>, transform_indices = @transform_5, window_bounds = array<i64: 1, 32>}, {pipeline_mode = #tpu.pipeline_mode<synchronous>, transform_indices = @transform_6, window_bounds = array<i64: 4, 32, 8>}, {pipeline_mode = #tpu.pipeline_mode<synchronous>, transform_indices = @transform_7, window_bounds = array<i64: 4, 32, 8>}, {pipeline_mode = #tpu.pipeline_mode<synchronous>, transform_indices = @transform_8, window_bounds = array<i64: 4, 32, 8>}, {pipeline_mode = #tpu.pipeline_mode<synchronous>, transform_indices = @transform_9, window_bounds = array<i64: 32, 32>}, {pipeline_mode = #tpu.pipeline_mode<synchronous>, transform_indices = @transform_10, window_bounds = array<i64: 1, 32>}, {pipeline_mode = #tpu.pipeline_mode<synchronous>, transform_indices = @transform_11, window_bounds = array<i64: 1, 32>}, {pipeline_mode = #tpu.pipeline_mode<synchronous>, transform_indices = @transform_12, window_bounds = array<i64: 1, 32>}, {pipeline_mode = #tpu.pipeline_mode<synchronous>, transform_indices = @transform_13, window_bounds = array<i64: 32, 128>}, {pipeline_mode = #tpu.pipeline_mode<synchronous>, transform_indices = @transform_14, window_bounds = array<i64: 1, 128>}, {pipeline_mode = #tpu.pipeline_mode<synchronous>, transform_indices = @transform_15, window_bounds = array<i64: 1, 128>}, {pipeline_mode = #tpu.pipeline_mode<synchronous>, transform_indices = @transform_16, window_bounds = array<i64: 1, 128>}, {pipeline_mode = #tpu.pipeline_mode<synchronous>, transform_indices = @transform_17, window_bounds = array<i64: 9, 128>}, {pipeline_mode = #tpu.pipeline_mode<synchronous>, transform_indices = @transform_18, window_bounds = array<i64: 1, 128>}, {pipeline_mode = #tpu.pipeline_mode<synchronous>, transform_indices = @transform_19, window_bounds = array<i64: 1, 128>}, {pipeline_mode = #tpu.pipeline_mode<synchronous>, transform_indices = @transform_20, window_bounds = array<i64: 1, 128>}, {pipeline_mode = #tpu.pipeline_mode<synchronous>, transform_indices = @transform_21, window_bounds = array<i64: 128, 32>}, {pipeline_mode = #tpu.pipeline_mode<synchronous>, transform_indices = @transform_22, window_bounds = array<i64: 1, 32>}, {transform_indices = @transform_23, window_bounds = array<i64: 1, 64, 32>}]} {
    %0 = tpu.iota {dimensions = array<i32: 0>} : vector<64x1xi32>
    %c8_i32 = arith.constant 8 : i32
    %c0_i32 = arith.constant 0 : i32
    %1 = arith.cmpi eq, %c8_i32, %c0_i32 : i32
    %c1_i32 = arith.constant 1 : i32
    %2 = arith.select %1, %c1_i32, %c8_i32 : i32
    %3 = vector.broadcast %2 : i32 to vector<64x1xi32>
    %4 = arith.remsi %0, %3 : vector<64x1xi32>
    %c0_i32_0 = arith.constant 0 : i32
    %5 = vector.broadcast %c0_i32_0 : i32 to vector<64x1xi32>
    %6 = arith.cmpi ne, %4, %5 : vector<64x1xi32>
    %c0_i32_1 = arith.constant 0 : i32
    %7 = vector.broadcast %c0_i32_1 : i32 to vector<64x1xi32>
    %8 = arith.cmpi slt, %4, %7 : vector<64x1xi32>
    %c0_i32_2 = arith.constant 0 : i32
    %9 = arith.cmpi slt, %2, %c0_i32_2 : i32
    %10 = vector.broadcast %9 : i1 to vector<64x1xi1>
    %11 = vector.broadcast %10 : vector<64x1xi1> to vector<64x1xi1>
    %12 = arith.xori %8, %11 : vector<64x1xi1>
    %13 = arith.andi %12, %6 : vector<64x1xi1>
    %14 = vector.broadcast %2 : i32 to vector<64x1xi32>
    %15 = arith.addi %4, %14 : vector<64x1xi32>
    %16 = arith.select %13, %15, %4 : vector<64x1xi1>, vector<64x1xi32>
    %c0_i32_3 = arith.constant 0 : i32
    %17 = vector.broadcast %c0_i32_3 : i32 to vector<64x1xi32>
    %18 = arith.cmpi sgt, %16, %17 : vector<64x1xi32>
    %c7_i32 = arith.constant 7 : i32
    %19 = vector.broadcast %c7_i32 : i32 to vector<64x1xi32>
    %20 = arith.cmpi slt, %16, %19 : vector<64x1xi32>
    %c0 = arith.constant 0 : index
    %c0_4 = arith.constant 0 : index
    %c0_5 = arith.constant 0 : index
    %21 = vector.load %arg1[%c0, %c0_4, %c0_5] : memref<1x64x32xf32, #tpu.memory_space<vmem>>, vector<1x64x32xf32>
    %22 = vector.shape_cast %21 : vector<1x64x32xf32> to vector<64x32xf32>
    %cst = arith.constant 0.000000e+00 : f32
    %23 = vector.broadcast %cst : f32 to vector<9x32xf32>
    %c0_6 = arith.constant 0 : index
    %c0_7 = arith.constant 0 : index
    %24 = vector.load %arg25[%c0_6, %c0_7] : memref<82x32xf32, #tpu.memory_space<vmem>>, vector<9x32xf32>
    tpu.vector_store %arg25[%c0_6, %c0_7], %23 {strides = array<i32>} : memref<82x32xf32, #tpu.memory_space<vmem>>, vector<9x32xf32>,
    %c73 = arith.constant 73 : index
    %c0_8 = arith.constant 0 : index
    %25 = vector.load %arg25[%c73, %c0_8] : memref<82x32xf32, #tpu.memory_space<vmem>>, vector<9x32xf32>
    tpu.vector_store %arg25[%c73, %c0_8], %23 {strides = array<i32>} : memref<82x32xf32, #tpu.memory_space<vmem>>, vector<9x32xf32>,
    %c9 = arith.constant 9 : index
    %c0_9 = arith.constant 0 : index
    %26 = vector.load %arg25[%c9, %c0_9] : memref<82x32xf32, #tpu.memory_space<vmem>>, vector<64x32xf32>
    tpu.vector_store %arg25[%c9, %c0_9], %22 {strides = array<i32>} : memref<82x32xf32, #tpu.memory_space<vmem>>, vector<64x32xf32>,
    %c0_10 = arith.constant 0 : index
    %c0_11 = arith.constant 0 : index
    %27 = vector.load %arg3[%c0_10, %c0_11] : memref<9x32xf32, #tpu.memory_space<vmem>>, vector<9x32xf32>
    %28 = vector.extract_strided_slice %27 {offsets = [4, 0], sizes = [1, 32], strides = [1, 1]} : vector<9x32xf32> to vector<1x32xf32>
    %29 = vector.broadcast %28 : vector<1x32xf32> to vector<64x32xf32>
    %30 = arith.mulf %22, %29 : vector<64x32xf32>
    %c0_12 = arith.constant 0 : index
    %c0_13 = arith.constant 0 : index
    %31 = vector.load %arg4[%c0_12, %c0_13] : memref<1x32xf32, #tpu.memory_space<vmem>>, vector<1x32xf32>
    %32 = vector.broadcast %31 : vector<1x32xf32> to vector<64x32xf32>
    %33 = arith.addf %30, %32 : vector<64x32xf32>
    %c0_14 = arith.constant 0 : index
    %c0_15 = arith.constant 0 : index
    %34 = vector.load %arg25[%c0_14, %c0_15] : memref<82x32xf32, #tpu.memory_space<vmem>>, vector<64x32xf32>
    %35 = vector.extract_strided_slice %27 {offsets = [0, 0], sizes = [1, 32], strides = [1, 1]} : vector<9x32xf32> to vector<1x32xf32>
    %36 = vector.broadcast %35 : vector<1x32xf32> to vector<64x32xf32>
    %37 = arith.mulf %34, %36 : vector<64x32xf32>
    %cst_16 = arith.constant 0.000000e+00 : f32
    %38 = vector.shape_cast %18 : vector<64x1xi1> to vector<64x1xi1>
    %39 = vector.broadcast %38 : vector<64x1xi1> to vector<64x32xi1>
    %40 = vector.broadcast %cst_16 : f32 to vector<64x32xf32>
    %41 = arith.select %39, %37, %40 : vector<64x32xi1>, vector<64x32xf32>
    %42 = arith.addf %33, %41 : vector<64x32xf32>
    %c1 = arith.constant 1 : index
    %c0_17 = arith.constant 0 : index
    %43 = vector.load %arg25[%c1, %c0_17] : memref<82x32xf32, #tpu.memory_space<vmem>>, vector<64x32xf32>
    %44 = vector.extract_strided_slice %27 {offsets = [1, 0], sizes = [1, 32], strides = [1, 1]} : vector<9x32xf32> to vector<1x32xf32>
    %45 = vector.broadcast %44 : vector<1x32xf32> to vector<64x32xf32>
    %46 = arith.mulf %43, %45 : vector<64x32xf32>
    %47 = arith.addf %42, %46 : vector<64x32xf32>
    %c2 = arith.constant 2 : index
    %c0_18 = arith.constant 0 : index
    %48 = vector.load %arg25[%c2, %c0_18] : memref<82x32xf32, #tpu.memory_space<vmem>>, vector<64x32xf32>
    %49 = vector.extract_strided_slice %27 {offsets = [2, 0], sizes = [1, 32], strides = [1, 1]} : vector<9x32xf32> to vector<1x32xf32>
    %50 = vector.broadcast %49 : vector<1x32xf32> to vector<64x32xf32>
    %51 = arith.mulf %48, %50 : vector<64x32xf32>
    %cst_19 = arith.constant 0.000000e+00 : f32
    %52 = vector.shape_cast %20 : vector<64x1xi1> to vector<64x1xi1>
    %53 = vector.broadcast %52 : vector<64x1xi1> to vector<64x32xi1>
    %54 = vector.broadcast %cst_19 : f32 to vector<64x32xf32>
    %55 = arith.select %53, %51, %54 : vector<64x32xi1>, vector<64x32xf32>
    %56 = arith.addf %47, %55 : vector<64x32xf32>
    %c8 = arith.constant 8 : index
    %c0_20 = arith.constant 0 : index
    %57 = vector.load %arg25[%c8, %c0_20] : memref<82x32xf32, #tpu.memory_space<vmem>>, vector<64x32xf32>
    %58 = vector.extract_strided_slice %27 {offsets = [3, 0], sizes = [1, 32], strides = [1, 1]} : vector<9x32xf32> to vector<1x32xf32>
    %59 = vector.broadcast %58 : vector<1x32xf32> to vector<64x32xf32>
    %60 = arith.mulf %57, %59 : vector<64x32xf32>
    %cst_21 = arith.constant 0.000000e+00 : f32
    %61 = vector.shape_cast %18 : vector<64x1xi1> to vector<64x1xi1>
    %62 = vector.broadcast %61 : vector<64x1xi1> to vector<64x32xi1>
    %63 = vector.broadcast %cst_21 : f32 to vector<64x32xf32>
    %64 = arith.select %62, %60, %63 : vector<64x32xi1>, vector<64x32xf32>
    %65 = arith.addf %56, %64 : vector<64x32xf32>
    %c10 = arith.constant 10 : index
    %c0_22 = arith.constant 0 : index
    %66 = vector.load %arg25[%c10, %c0_22] : memref<82x32xf32, #tpu.memory_space<vmem>>, vector<64x32xf32>
    %67 = vector.extract_strided_slice %27 {offsets = [5, 0], sizes = [1, 32], strides = [1, 1]} : vector<9x32xf32> to vector<1x32xf32>
    %68 = vector.broadcast %67 : vector<1x32xf32> to vector<64x32xf32>
    %69 = arith.mulf %66, %68 : vector<64x32xf32>
    %cst_23 = arith.constant 0.000000e+00 : f32
    %70 = vector.shape_cast %20 : vector<64x1xi1> to vector<64x1xi1>
    %71 = vector.broadcast %70 : vector<64x1xi1> to vector<64x32xi1>
    %72 = vector.broadcast %cst_23 : f32 to vector<64x32xf32>
    %73 = arith.select %71, %69, %72 : vector<64x32xi1>, vector<64x32xf32>
    %74 = arith.addf %65, %73 : vector<64x32xf32>
    %c16 = arith.constant 16 : index
    %c0_24 = arith.constant 0 : index
    %75 = vector.load %arg25[%c16, %c0_24] : memref<82x32xf32, #tpu.memory_space<vmem>>, vector<64x32xf32>
    %76 = vector.extract_strided_slice %27 {offsets = [6, 0], sizes = [1, 32], strides = [1, 1]} : vector<9x32xf32> to vector<1x32xf32>
    %77 = vector.broadcast %76 : vector<1x32xf32> to vector<64x32xf32>
    %78 = arith.mulf %75, %77 : vector<64x32xf32>
    %cst_25 = arith.constant 0.000000e+00 : f32
    %79 = vector.shape_cast %18 : vector<64x1xi1> to vector<64x1xi1>
    %80 = vector.broadcast %79 : vector<64x1xi1> to vector<64x32xi1>
    %81 = vector.broadcast %cst_25 : f32 to vector<64x32xf32>
    %82 = arith.select %80, %78, %81 : vector<64x32xi1>, vector<64x32xf32>
    %83 = arith.addf %74, %82 : vector<64x32xf32>
    %c17 = arith.constant 17 : index
    %c0_26 = arith.constant 0 : index
    %84 = vector.load %arg25[%c17, %c0_26] : memref<82x32xf32, #tpu.memory_space<vmem>>, vector<64x32xf32>
    %85 = vector.extract_strided_slice %27 {offsets = [7, 0], sizes = [1, 32], strides = [1, 1]} : vector<9x32xf32> to vector<1x32xf32>
    %86 = vector.broadcast %85 : vector<1x32xf32> to vector<64x32xf32>
    %87 = arith.mulf %84, %86 : vector<64x32xf32>
    %88 = arith.addf %83, %87 : vector<64x32xf32>
    %c18 = arith.constant 18 : index
    %c0_27 = arith.constant 0 : index
    %89 = vector.load %arg25[%c18, %c0_27] : memref<82x32xf32, #tpu.memory_space<vmem>>, vector<64x32xf32>
    %90 = vector.extract_strided_slice %27 {offsets = [8, 0], sizes = [1, 32], strides = [1, 1]} : vector<9x32xf32> to vector<1x32xf32>
    %91 = vector.broadcast %90 : vector<1x32xf32> to vector<64x32xf32>
    %92 = arith.mulf %89, %91 : vector<64x32xf32>
    %cst_28 = arith.constant 0.000000e+00 : f32
    %93 = vector.shape_cast %20 : vector<64x1xi1> to vector<64x1xi1>
    %94 = vector.broadcast %93 : vector<64x1xi1> to vector<64x32xi1>
    %95 = vector.broadcast %cst_28 : f32 to vector<64x32xf32>
    %96 = arith.select %94, %92, %95 : vector<64x32xi1>, vector<64x32xf32>
    %97 = arith.addf %88, %96 : vector<64x32xf32>
    %98 = arith.addf %22, %97 : vector<64x32xf32>
    %cst_29 = arith.constant dense<0.000000e+00> : vector<64xf32>
    %99 = vector.multi_reduction <add>, %98, %cst_29 [1] : vector<64x32xf32> to vector<64xf32>
    %100 = vector.shape_cast %99 : vector<64xf32> to vector<64x1xf32>
    %cst_30 = arith.constant 3.200000e+01 : f32
    %101 = vector.broadcast %cst_30 : f32 to vector<64x1xf32>
    %102 = arith.divf %100, %101 : vector<64x1xf32>
    %103 = vector.broadcast %102 : vector<64x1xf32> to vector<64x32xf32>
    %104 = arith.subf %98, %103 : vector<64x32xf32>
    %105 = arith.mulf %104, %104 : vector<64x32xf32>
    %cst_31 = arith.constant dense<0.000000e+00> : vector<64xf32>
    %106 = vector.multi_reduction <add>, %105, %cst_31 [1] : vector<64x32xf32> to vector<64xf32>
    %107 = vector.shape_cast %106 : vector<64xf32> to vector<64x1xf32>
    %cst_32 = arith.constant 3.200000e+01 : f32
    %108 = vector.broadcast %cst_32 : f32 to vector<64x1xf32>
    %109 = arith.divf %107, %108 : vector<64x1xf32>
    %cst_33 = arith.constant 9.99999974E-6 : f32
    %110 = vector.broadcast %cst_33 : f32 to vector<64x1xf32>
    %111 = arith.addf %109, %110 : vector<64x1xf32>
    %112 = math.rsqrt %111 : vector<64x1xf32>
    %113 = vector.broadcast %112 : vector<64x1xf32> to vector<64x32xf32>
    %114 = arith.mulf %104, %113 : vector<64x32xf32>
    %c0_34 = arith.constant 0 : index
    %c0_35 = arith.constant 0 : index
    %115 = vector.load %arg5[%c0_34, %c0_35] : memref<1x32xf32, #tpu.memory_space<vmem>>, vector<1x32xf32>
    %116 = vector.broadcast %115 : vector<1x32xf32> to vector<64x32xf32>
    %117 = arith.mulf %114, %116 : vector<64x32xf32>
    %c0_36 = arith.constant 0 : index
    %c0_37 = arith.constant 0 : index
    %118 = vector.load %arg6[%c0_36, %c0_37] : memref<1x32xf32, #tpu.memory_space<vmem>>, vector<1x32xf32>
    %119 = vector.broadcast %118 : vector<1x32xf32> to vector<64x32xf32>
    %120 = arith.addf %117, %119 : vector<64x32xf32>
    %121 = arith.truncf %120 : vector<64x32xf32> to vector<64x32xbf16>
    %c0_38 = arith.constant 0 : index
    %c0_39 = arith.constant 0 : index
    %c0_40 = arith.constant 0 : index
    %122 = vector.load %arg7[%c0_38, %c0_39, %c0_40] : memref<4x32x8xbf16, #tpu.memory_space<vmem>>, vector<1x32x8xbf16>
    %123 = vector.shape_cast %122 : vector<1x32x8xbf16> to vector<32x8xbf16>
    %cst_41 = arith.constant dense<0.000000e+00> : vector<64x8xf32>
    %124 = tpu.matmul %121, %123, %cst_41 {dimension_numbers = #tpu.dot_dimension_numbers<[1], [0], [0], [1], [0, 0, 1, 1], [], []>} : vector<64x32xbf16>, vector<32x8xbf16>, vector<64x8xf32> -> vector<64x8xf32>
    %c0_42 = arith.constant 0 : index
    %c0_43 = arith.constant 0 : index
    %c0_44 = arith.constant 0 : index
    %125 = vector.load %arg8[%c0_42, %c0_43, %c0_44] : memref<4x32x8xbf16, #tpu.memory_space<vmem>>, vector<1x32x8xbf16>
    %126 = vector.shape_cast %125 : vector<1x32x8xbf16> to vector<32x8xbf16>
    %cst_45 = arith.constant dense<0.000000e+00> : vector<64x8xf32>
    %127 = tpu.matmul %121, %126, %cst_45 {dimension_numbers = #tpu.dot_dimension_numbers<[1], [0], [0], [1], [0, 0, 1, 1], [], []>} : vector<64x32xbf16>, vector<32x8xbf16>, vector<64x8xf32> -> vector<64x8xf32>
    %c0_46 = arith.constant 0 : index
    %c0_47 = arith.constant 0 : index
    %c0_48 = arith.constant 0 : index
    %128 = vector.load %arg9[%c0_46, %c0_47, %c0_48] : memref<4x32x8xbf16, #tpu.memory_space<vmem>>, vector<1x32x8xbf16>
    %129 = vector.shape_cast %128 : vector<1x32x8xbf16> to vector<32x8xbf16>
    %cst_49 = arith.constant dense<0.000000e+00> : vector<64x8xf32>
    %130 = tpu.matmul %121, %129, %cst_49 {dimension_numbers = #tpu.dot_dimension_numbers<[1], [0], [0], [1], [0, 0, 1, 1], [], []>} : vector<64x32xbf16>, vector<32x8xbf16>, vector<64x8xf32> -> vector<64x8xf32>
    %131 = arith.truncf %124 : vector<64x8xf32> to vector<64x8xbf16>
    %132 = arith.truncf %127 : vector<64x8xf32> to vector<64x8xbf16>
    %cst_50 = arith.constant dense<0.000000e+00> : vector<64x64xf32>
    %133 = tpu.matmul %131, %132, %cst_50 {dimension_numbers = #tpu.dot_dimension_numbers<[1], [1], [0], [0], [0, 0, 1, 0], [], []>} : vector<64x8xbf16>, vector<64x8xbf16>, vector<64x64xf32> -> vector<64x64xf32>
    %c0_51 = arith.constant 0 : index
    %c0_52 = arith.constant 0 : index
    %c0_53 = arith.constant 0 : index
    %134 = vector.load %arg2[%c0_51, %c0_52, %c0_53] : memref<4x64x64xbf16, #tpu.memory_space<vmem>>, vector<1x64x64xbf16>
    %135 = vector.shape_cast %134 : vector<1x64x64xbf16> to vector<64x64xbf16>
    %136 = arith.extf %135 : vector<64x64xbf16> to vector<64x64xf32>
    %137 = arith.addf %133, %136 : vector<64x64xf32>
    %cst_54 = arith.constant dense<0xFF800000> : vector<64xf32>
    %138 = vector.multi_reduction <maximumf>, %137, %cst_54 [1] : vector<64x64xf32> to vector<64xf32>
    %139 = vector.shape_cast %138 : vector<64xf32> to vector<64x1xf32>
    %140 = vector.broadcast %139 : vector<64x1xf32> to vector<64x64xf32>
    %141 = arith.subf %137, %140 : vector<64x64xf32>
    %142 = math.exp %141 : vector<64x64xf32>
    %cst_55 = arith.constant dense<0.000000e+00> : vector<64xf32>
    %143 = vector.multi_reduction <add>, %142, %cst_55 [1] : vector<64x64xf32> to vector<64xf32>
    %144 = vector.shape_cast %143 : vector<64xf32> to vector<64x1xf32>
    %145 = tpu.reciprocal %144 {approx = true} : vector<64x1xf32> -> vector<64x1xf32>
    %146 = vector.broadcast %145 : vector<64x1xf32> to vector<64x64xf32>
    %147 = arith.mulf %142, %146 : vector<64x64xf32>
    %148 = arith.truncf %147 : vector<64x64xf32> to vector<64x64xbf16>
    %149 = arith.truncf %130 : vector<64x8xf32> to vector<64x8xbf16>
    %cst_56 = arith.constant dense<0.000000e+00> : vector<64x8xf32>
    %150 = tpu.matmul %148, %149, %cst_56 {dimension_numbers = #tpu.dot_dimension_numbers<[1], [0], [0], [1], [0, 0, 1, 1], [], []>} : vector<64x64xbf16>, vector<64x8xbf16>, vector<64x8xf32> -> vector<64x8xf32>
    %c0_57 = arith.constant 0 : index
    %c0_58 = arith.constant 0 : index
    %151 = vector.load %arg27[%c0_57, %c0_58] : memref<64x32xf32, #tpu.memory_space<vmem>>, vector<64x8xf32>
    tpu.vector_store %arg27[%c0_57, %c0_58], %150 {strides = array<i32>} : memref<64x32xf32, #tpu.memory_space<vmem>>, vector<64x8xf32>,
    %c1_59 = arith.constant 1 : index
    %c0_60 = arith.constant 0 : index
    %c0_61 = arith.constant 0 : index
    %152 = vector.load %arg7[%c1_59, %c0_60, %c0_61] : memref<4x32x8xbf16, #tpu.memory_space<vmem>>, vector<1x32x8xbf16>
    %153 = vector.shape_cast %152 : vector<1x32x8xbf16> to vector<32x8xbf16>
    %cst_62 = arith.constant dense<0.000000e+00> : vector<64x8xf32>
    %154 = tpu.matmul %121, %153, %cst_62 {dimension_numbers = #tpu.dot_dimension_numbers<[1], [0], [0], [1], [0, 0, 1, 1], [], []>} : vector<64x32xbf16>, vector<32x8xbf16>, vector<64x8xf32> -> vector<64x8xf32>
    %c1_63 = arith.constant 1 : index
    %c0_64 = arith.constant 0 : index
    %c0_65 = arith.constant 0 : index
    %155 = vector.load %arg8[%c1_63, %c0_64, %c0_65] : memref<4x32x8xbf16, #tpu.memory_space<vmem>>, vector<1x32x8xbf16>
    %156 = vector.shape_cast %155 : vector<1x32x8xbf16> to vector<32x8xbf16>
    %cst_66 = arith.constant dense<0.000000e+00> : vector<64x8xf32>
    %157 = tpu.matmul %121, %156, %cst_66 {dimension_numbers = #tpu.dot_dimension_numbers<[1], [0], [0], [1], [0, 0, 1, 1], [], []>} : vector<64x32xbf16>, vector<32x8xbf16>, vector<64x8xf32> -> vector<64x8xf32>
    %c1_67 = arith.constant 1 : index
    %c0_68 = arith.constant 0 : index
    %c0_69 = arith.constant 0 : index
    %158 = vector.load %arg9[%c1_67, %c0_68, %c0_69] : memref<4x32x8xbf16, #tpu.memory_space<vmem>>, vector<1x32x8xbf16>
    %159 = vector.shape_cast %158 : vector<1x32x8xbf16> to vector<32x8xbf16>
    %cst_70 = arith.constant dense<0.000000e+00> : vector<64x8xf32>
    %160 = tpu.matmul %121, %159, %cst_70 {dimension_numbers = #tpu.dot_dimension_numbers<[1], [0], [0], [1], [0, 0, 1, 1], [], []>} : vector<64x32xbf16>, vector<32x8xbf16>, vector<64x8xf32> -> vector<64x8xf32>
    %161 = arith.truncf %154 : vector<64x8xf32> to vector<64x8xbf16>
    %162 = arith.truncf %157 : vector<64x8xf32> to vector<64x8xbf16>
    %cst_71 = arith.constant dense<0.000000e+00> : vector<64x64xf32>
    %163 = tpu.matmul %161, %162, %cst_71 {dimension_numbers = #tpu.dot_dimension_numbers<[1], [1], [0], [0], [0, 0, 1, 0], [], []>} : vector<64x8xbf16>, vector<64x8xbf16>, vector<64x64xf32> -> vector<64x64xf32>
    %c1_72 = arith.constant 1 : index
    %c0_73 = arith.constant 0 : index
    %c0_74 = arith.constant 0 : index
    %164 = vector.load %arg2[%c1_72, %c0_73, %c0_74] : memref<4x64x64xbf16, #tpu.memory_space<vmem>>, vector<1x64x64xbf16>
    %165 = vector.shape_cast %164 : vector<1x64x64xbf16> to vector<64x64xbf16>
    %166 = arith.extf %165 : vector<64x64xbf16> to vector<64x64xf32>
    %167 = arith.addf %163, %166 : vector<64x64xf32>
    %cst_75 = arith.constant dense<0xFF800000> : vector<64xf32>
    %168 = vector.multi_reduction <maximumf>, %167, %cst_75 [1] : vector<64x64xf32> to vector<64xf32>
    %169 = vector.shape_cast %168 : vector<64xf32> to vector<64x1xf32>
    %170 = vector.broadcast %169 : vector<64x1xf32> to vector<64x64xf32>
    %171 = arith.subf %167, %170 : vector<64x64xf32>
    %172 = math.exp %171 : vector<64x64xf32>
    %cst_76 = arith.constant dense<0.000000e+00> : vector<64xf32>
    %173 = vector.multi_reduction <add>, %172, %cst_76 [1] : vector<64x64xf32> to vector<64xf32>
    %174 = vector.shape_cast %173 : vector<64xf32> to vector<64x1xf32>
    %175 = tpu.reciprocal %174 {approx = true} : vector<64x1xf32> -> vector<64x1xf32>
    %176 = vector.broadcast %175 : vector<64x1xf32> to vector<64x64xf32>
    %177 = arith.mulf %172, %176 : vector<64x64xf32>
    %178 = arith.truncf %177 : vector<64x64xf32> to vector<64x64xbf16>
    %179 = arith.truncf %160 : vector<64x8xf32> to vector<64x8xbf16>
    %cst_77 = arith.constant dense<0.000000e+00> : vector<64x8xf32>
    %180 = tpu.matmul %178, %179, %cst_77 {dimension_numbers = #tpu.dot_dimension_numbers<[1], [0], [0], [1], [0, 0, 1, 1], [], []>} : vector<64x64xbf16>, vector<64x8xbf16>, vector<64x8xf32> -> vector<64x8xf32>
    %c0_78 = arith.constant 0 : index
    %c8_79 = arith.constant 8 : index
    %181 = vector.load %arg27[%c0_78, %c8_79] : memref<64x32xf32, #tpu.memory_space<vmem>>, vector<64x8xf32>
    tpu.vector_store %arg27[%c0_78, %c8_79], %180 {strides = array<i32>} : memref<64x32xf32, #tpu.memory_space<vmem>>, vector<64x8xf32>,
    %c2_80 = arith.constant 2 : index
    %c0_81 = arith.constant 0 : index
    %c0_82 = arith.constant 0 : index
    %182 = vector.load %arg7[%c2_80, %c0_81, %c0_82] : memref<4x32x8xbf16, #tpu.memory_space<vmem>>, vector<1x32x8xbf16>
    %183 = vector.shape_cast %182 : vector<1x32x8xbf16> to vector<32x8xbf16>
    %cst_83 = arith.constant dense<0.000000e+00> : vector<64x8xf32>
    %184 = tpu.matmul %121, %183, %cst_83 {dimension_numbers = #tpu.dot_dimension_numbers<[1], [0], [0], [1], [0, 0, 1, 1], [], []>} : vector<64x32xbf16>, vector<32x8xbf16>, vector<64x8xf32> -> vector<64x8xf32>
    %c2_84 = arith.constant 2 : index
    %c0_85 = arith.constant 0 : index
    %c0_86 = arith.constant 0 : index
    %185 = vector.load %arg8[%c2_84, %c0_85, %c0_86] : memref<4x32x8xbf16, #tpu.memory_space<vmem>>, vector<1x32x8xbf16>
    %186 = vector.shape_cast %185 : vector<1x32x8xbf16> to vector<32x8xbf16>
    %cst_87 = arith.constant dense<0.000000e+00> : vector<64x8xf32>
    %187 = tpu.matmul %121, %186, %cst_87 {dimension_numbers = #tpu.dot_dimension_numbers<[1], [0], [0], [1], [0, 0, 1, 1], [], []>} : vector<64x32xbf16>, vector<32x8xbf16>, vector<64x8xf32> -> vector<64x8xf32>
    %c2_88 = arith.constant 2 : index
    %c0_89 = arith.constant 0 : index
    %c0_90 = arith.constant 0 : index
    %188 = vector.load %arg9[%c2_88, %c0_89, %c0_90] : memref<4x32x8xbf16, #tpu.memory_space<vmem>>, vector<1x32x8xbf16>
    %189 = vector.shape_cast %188 : vector<1x32x8xbf16> to vector<32x8xbf16>
    %cst_91 = arith.constant dense<0.000000e+00> : vector<64x8xf32>
    %190 = tpu.matmul %121, %189, %cst_91 {dimension_numbers = #tpu.dot_dimension_numbers<[1], [0], [0], [1], [0, 0, 1, 1], [], []>} : vector<64x32xbf16>, vector<32x8xbf16>, vector<64x8xf32> -> vector<64x8xf32>
    %191 = arith.truncf %184 : vector<64x8xf32> to vector<64x8xbf16>
    %192 = arith.truncf %187 : vector<64x8xf32> to vector<64x8xbf16>
    %cst_92 = arith.constant dense<0.000000e+00> : vector<64x64xf32>
    %193 = tpu.matmul %191, %192, %cst_92 {dimension_numbers = #tpu.dot_dimension_numbers<[1], [1], [0], [0], [0, 0, 1, 0], [], []>} : vector<64x8xbf16>, vector<64x8xbf16>, vector<64x64xf32> -> vector<64x64xf32>
    %c2_93 = arith.constant 2 : index
    %c0_94 = arith.constant 0 : index
    %c0_95 = arith.constant 0 : index
    %194 = vector.load %arg2[%c2_93, %c0_94, %c0_95] : memref<4x64x64xbf16, #tpu.memory_space<vmem>>, vector<1x64x64xbf16>
    %195 = vector.shape_cast %194 : vector<1x64x64xbf16> to vector<64x64xbf16>
    %196 = arith.extf %195 : vector<64x64xbf16> to vector<64x64xf32>
    %197 = arith.addf %193, %196 : vector<64x64xf32>
    %cst_96 = arith.constant dense<0xFF800000> : vector<64xf32>
    %198 = vector.multi_reduction <maximumf>, %197, %cst_96 [1] : vector<64x64xf32> to vector<64xf32>
    %199 = vector.shape_cast %198 : vector<64xf32> to vector<64x1xf32>
    %200 = vector.broadcast %199 : vector<64x1xf32> to vector<64x64xf32>
    %201 = arith.subf %197, %200 : vector<64x64xf32>
    %202 = math.exp %201 : vector<64x64xf32>
    %cst_97 = arith.constant dense<0.000000e+00> : vector<64xf32>
    %203 = vector.multi_reduction <add>, %202, %cst_97 [1] : vector<64x64xf32> to vector<64xf32>
    %204 = vector.shape_cast %203 : vector<64xf32> to vector<64x1xf32>
    %205 = tpu.reciprocal %204 {approx = true} : vector<64x1xf32> -> vector<64x1xf32>
    %206 = vector.broadcast %205 : vector<64x1xf32> to vector<64x64xf32>
    %207 = arith.mulf %202, %206 : vector<64x64xf32>
    %208 = arith.truncf %207 : vector<64x64xf32> to vector<64x64xbf16>
    %209 = arith.truncf %190 : vector<64x8xf32> to vector<64x8xbf16>
    %cst_98 = arith.constant dense<0.000000e+00> : vector<64x8xf32>
    %210 = tpu.matmul %208, %209, %cst_98 {dimension_numbers = #tpu.dot_dimension_numbers<[1], [0], [0], [1], [0, 0, 1, 1], [], []>} : vector<64x64xbf16>, vector<64x8xbf16>, vector<64x8xf32> -> vector<64x8xf32>
    %c0_99 = arith.constant 0 : index
    %c16_100 = arith.constant 16 : index
    %211 = vector.load %arg27[%c0_99, %c16_100] : memref<64x32xf32, #tpu.memory_space<vmem>>, vector<64x8xf32>
    tpu.vector_store %arg27[%c0_99, %c16_100], %210 {strides = array<i32>} : memref<64x32xf32, #tpu.memory_space<vmem>>, vector<64x8xf32>,
    %c3 = arith.constant 3 : index
    %c0_101 = arith.constant 0 : index
    %c0_102 = arith.constant 0 : index
    %212 = vector.load %arg7[%c3, %c0_101, %c0_102] : memref<4x32x8xbf16, #tpu.memory_space<vmem>>, vector<1x32x8xbf16>
    %213 = vector.shape_cast %212 : vector<1x32x8xbf16> to vector<32x8xbf16>
    %cst_103 = arith.constant dense<0.000000e+00> : vector<64x8xf32>
    %214 = tpu.matmul %121, %213, %cst_103 {dimension_numbers = #tpu.dot_dimension_numbers<[1], [0], [0], [1], [0, 0, 1, 1], [], []>} : vector<64x32xbf16>, vector<32x8xbf16>, vector<64x8xf32> -> vector<64x8xf32>
    %c3_104 = arith.constant 3 : index
    %c0_105 = arith.constant 0 : index
    %c0_106 = arith.constant 0 : index
    %215 = vector.load %arg8[%c3_104, %c0_105, %c0_106] : memref<4x32x8xbf16, #tpu.memory_space<vmem>>, vector<1x32x8xbf16>
    %216 = vector.shape_cast %215 : vector<1x32x8xbf16> to vector<32x8xbf16>
    %cst_107 = arith.constant dense<0.000000e+00> : vector<64x8xf32>
    %217 = tpu.matmul %121, %216, %cst_107 {dimension_numbers = #tpu.dot_dimension_numbers<[1], [0], [0], [1], [0, 0, 1, 1], [], []>} : vector<64x32xbf16>, vector<32x8xbf16>, vector<64x8xf32> -> vector<64x8xf32>
    %c3_108 = arith.constant 3 : index
    %c0_109 = arith.constant 0 : index
    %c0_110 = arith.constant 0 : index
    %218 = vector.load %arg9[%c3_108, %c0_109, %c0_110] : memref<4x32x8xbf16, #tpu.memory_space<vmem>>, vector<1x32x8xbf16>
    %219 = vector.shape_cast %218 : vector<1x32x8xbf16> to vector<32x8xbf16>
    %cst_111 = arith.constant dense<0.000000e+00> : vector<64x8xf32>
    %220 = tpu.matmul %121, %219, %cst_111 {dimension_numbers = #tpu.dot_dimension_numbers<[1], [0], [0], [1], [0, 0, 1, 1], [], []>} : vector<64x32xbf16>, vector<32x8xbf16>, vector<64x8xf32> -> vector<64x8xf32>
    %221 = arith.truncf %214 : vector<64x8xf32> to vector<64x8xbf16>
    %222 = arith.truncf %217 : vector<64x8xf32> to vector<64x8xbf16>
    %cst_112 = arith.constant dense<0.000000e+00> : vector<64x64xf32>
    %223 = tpu.matmul %221, %222, %cst_112 {dimension_numbers = #tpu.dot_dimension_numbers<[1], [1], [0], [0], [0, 0, 1, 0], [], []>} : vector<64x8xbf16>, vector<64x8xbf16>, vector<64x64xf32> -> vector<64x64xf32>
    %c3_113 = arith.constant 3 : index
    %c0_114 = arith.constant 0 : index
    %c0_115 = arith.constant 0 : index
    %224 = vector.load %arg2[%c3_113, %c0_114, %c0_115] : memref<4x64x64xbf16, #tpu.memory_space<vmem>>, vector<1x64x64xbf16>
    %225 = vector.shape_cast %224 : vector<1x64x64xbf16> to vector<64x64xbf16>
    %226 = arith.extf %225 : vector<64x64xbf16> to vector<64x64xf32>
    %227 = arith.addf %223, %226 : vector<64x64xf32>
    %cst_116 = arith.constant dense<0xFF800000> : vector<64xf32>
    %228 = vector.multi_reduction <maximumf>, %227, %cst_116 [1] : vector<64x64xf32> to vector<64xf32>
    %229 = vector.shape_cast %228 : vector<64xf32> to vector<64x1xf32>
    %230 = vector.broadcast %229 : vector<64x1xf32> to vector<64x64xf32>
    %231 = arith.subf %227, %230 : vector<64x64xf32>
    %232 = math.exp %231 : vector<64x64xf32>
    %cst_117 = arith.constant dense<0.000000e+00> : vector<64xf32>
    %233 = vector.multi_reduction <add>, %232, %cst_117 [1] : vector<64x64xf32> to vector<64xf32>
    %234 = vector.shape_cast %233 : vector<64xf32> to vector<64x1xf32>
    %235 = tpu.reciprocal %234 {approx = true} : vector<64x1xf32> -> vector<64x1xf32>
    %236 = vector.broadcast %235 : vector<64x1xf32> to vector<64x64xf32>
    %237 = arith.mulf %232, %236 : vector<64x64xf32>
    %238 = arith.truncf %237 : vector<64x64xf32> to vector<64x64xbf16>
    %239 = arith.truncf %220 : vector<64x8xf32> to vector<64x8xbf16>
    %cst_118 = arith.constant dense<0.000000e+00> : vector<64x8xf32>
    %240 = tpu.matmul %238, %239, %cst_118 {dimension_numbers = #tpu.dot_dimension_numbers<[1], [0], [0], [1], [0, 0, 1, 1], [], []>} : vector<64x64xbf16>, vector<64x8xbf16>, vector<64x8xf32> -> vector<64x8xf32>
    %c0_119 = arith.constant 0 : index
    %c24 = arith.constant 24 : index
    %241 = vector.load %arg27[%c0_119, %c24] : memref<64x32xf32, #tpu.memory_space<vmem>>, vector<64x8xf32>
    tpu.vector_store %arg27[%c0_119, %c24], %240 {strides = array<i32>} : memref<64x32xf32, #tpu.memory_space<vmem>>, vector<64x8xf32>,
    %c0_120 = arith.constant 0 : index
    %c0_121 = arith.constant 0 : index
    %242 = vector.load %arg27[%c0_120, %c0_121] : memref<64x32xf32, #tpu.memory_space<vmem>>, vector<64x32xf32>
    %243 = arith.truncf %242 : vector<64x32xf32> to vector<64x32xbf16>
    %c0_122 = arith.constant 0 : index
    %c0_123 = arith.constant 0 : index
    %244 = vector.load %arg10[%c0_122, %c0_123] : memref<32x32xbf16, #tpu.memory_space<vmem>>, vector<32x32xbf16>
    %cst_124 = arith.constant dense<0.000000e+00> : vector<64x32xf32>
    %245 = tpu.matmul %243, %244, %cst_124 {dimension_numbers = #tpu.dot_dimension_numbers<[1], [0], [0], [1], [0, 0, 1, 1], [], []>} : vector<64x32xbf16>, vector<32x32xbf16>, vector<64x32xf32> -> vector<64x32xf32>
    %c0_125 = arith.constant 0 : index
    %c0_126 = arith.constant 0 : index
    %246 = vector.load %arg11[%c0_125, %c0_126] : memref<1x32xf32, #tpu.memory_space<vmem>>, vector<1x32xf32>
    %247 = vector.broadcast %246 : vector<1x32xf32> to vector<64x32xf32>
    %248 = arith.addf %245, %247 : vector<64x32xf32>
    %249 = arith.addf %98, %248 : vector<64x32xf32>
    %cst_127 = arith.constant dense<0.000000e+00> : vector<64xf32>
    %250 = vector.multi_reduction <add>, %249, %cst_127 [1] : vector<64x32xf32> to vector<64xf32>
    %251 = vector.shape_cast %250 : vector<64xf32> to vector<64x1xf32>
    %cst_128 = arith.constant 3.200000e+01 : f32
    %252 = vector.broadcast %cst_128 : f32 to vector<64x1xf32>
    %253 = arith.divf %251, %252 : vector<64x1xf32>
    %254 = vector.broadcast %253 : vector<64x1xf32> to vector<64x32xf32>
    %255 = arith.subf %249, %254 : vector<64x32xf32>
    %256 = arith.mulf %255, %255 : vector<64x32xf32>
    %cst_129 = arith.constant dense<0.000000e+00> : vector<64xf32>
    %257 = vector.multi_reduction <add>, %256, %cst_129 [1] : vector<64x32xf32> to vector<64xf32>
    %258 = vector.shape_cast %257 : vector<64xf32> to vector<64x1xf32>
    %cst_130 = arith.constant 3.200000e+01 : f32
    %259 = vector.broadcast %cst_130 : f32 to vector<64x1xf32>
    %260 = arith.divf %258, %259 : vector<64x1xf32>
    %cst_131 = arith.constant 9.99999974E-6 : f32
    %261 = vector.broadcast %cst_131 : f32 to vector<64x1xf32>
    %262 = arith.addf %260, %261 : vector<64x1xf32>
    %263 = math.rsqrt %262 : vector<64x1xf32>
    %264 = vector.broadcast %263 : vector<64x1xf32> to vector<64x32xf32>
    %265 = arith.mulf %255, %264 : vector<64x32xf32>
    %c0_132 = arith.constant 0 : index
    %c0_133 = arith.constant 0 : index
    %266 = vector.load %arg12[%c0_132, %c0_133] : memref<1x32xf32, #tpu.memory_space<vmem>>, vector<1x32xf32>
    %267 = vector.broadcast %266 : vector<1x32xf32> to vector<64x32xf32>
    %268 = arith.mulf %265, %267 : vector<64x32xf32>
    %c0_134 = arith.constant 0 : index
    %c0_135 = arith.constant 0 : index
    %269 = vector.load %arg13[%c0_134, %c0_135] : memref<1x32xf32, #tpu.memory_space<vmem>>, vector<1x32xf32>
    %270 = vector.broadcast %269 : vector<1x32xf32> to vector<64x32xf32>
    %271 = arith.addf %268, %270 : vector<64x32xf32>
    %272 = arith.truncf %271 : vector<64x32xf32> to vector<64x32xbf16>
    %c0_136 = arith.constant 0 : index
    %c0_137 = arith.constant 0 : index
    %273 = vector.load %arg14[%c0_136, %c0_137] : memref<32x128xbf16, #tpu.memory_space<vmem>>, vector<32x128xbf16>
    %cst_138 = arith.constant dense<0.000000e+00> : vector<64x128xf32>
    %274 = tpu.matmul %272, %273, %cst_138 {dimension_numbers = #tpu.dot_dimension_numbers<[1], [0], [0], [1], [0, 0, 1, 1], [], []>} : vector<64x32xbf16>, vector<32x128xbf16>, vector<64x128xf32> -> vector<64x128xf32>
    %c0_139 = arith.constant 0 : index
    %c0_140 = arith.constant 0 : index
    %275 = vector.load %arg15[%c0_139, %c0_140] : memref<1x128xf32, #tpu.memory_space<vmem>>, vector<1x128xf32>
    %276 = vector.broadcast %275 : vector<1x128xf32> to vector<64x128xf32>
    %277 = arith.addf %274, %276 : vector<64x128xf32>
    %cst_141 = arith.constant 5.000000e-01 : f32
    %278 = vector.broadcast %cst_141 : f32 to vector<64x128xf32>
    %279 = arith.mulf %278, %277 : vector<64x128xf32>
    %cst_142 = arith.constant 4.471500e-02 : f32
    %280 = vector.broadcast %cst_142 : f32 to vector<64x128xf32>
    %281 = arith.mulf %280, %277 : vector<64x128xf32>
    %282 = arith.mulf %281, %277 : vector<64x128xf32>
    %283 = arith.mulf %282, %277 : vector<64x128xf32>
    %284 = arith.addf %277, %283 : vector<64x128xf32>
    %cst_143 = arith.constant 0.797884583 : f32
    %285 = vector.broadcast %cst_143 : f32 to vector<64x128xf32>
    %286 = arith.mulf %285, %284 : vector<64x128xf32>
    %287 = math.tanh %286 : vector<64x128xf32>
    %cst_144 = arith.constant 1.000000e+00 : f32
    %288 = vector.broadcast %cst_144 : f32 to vector<64x128xf32>
    %289 = arith.addf %288, %287 : vector<64x128xf32>
    %290 = arith.mulf %279, %289 : vector<64x128xf32>
    %c0_145 = arith.constant 0 : index
    %c0_146 = arith.constant 0 : index
    %291 = vector.load %arg16[%c0_145, %c0_146] : memref<1x128xf32, #tpu.memory_space<vmem>>, vector<1x128xf32>
    %292 = vector.broadcast %291 : vector<1x128xf32> to vector<64x128xf32>
    %293 = arith.mulf %290, %292 : vector<64x128xf32>
    %c0_147 = arith.constant 0 : index
    %c0_148 = arith.constant 0 : index
    %294 = vector.load %arg17[%c0_147, %c0_148] : memref<1x128xf32, #tpu.memory_space<vmem>>, vector<1x128xf32>
    %295 = vector.broadcast %294 : vector<1x128xf32> to vector<64x128xf32>
    %296 = arith.addf %293, %295 : vector<64x128xf32>
    %cst_149 = arith.constant 0.000000e+00 : f32
    %297 = vector.broadcast %cst_149 : f32 to vector<9x128xf32>
    %c0_150 = arith.constant 0 : index
    %c0_151 = arith.constant 0 : index
    %298 = vector.load %arg26[%c0_150, %c0_151] : memref<82x128xf32, #tpu.memory_space<vmem>>, vector<9x128xf32>
    tpu.vector_store %arg26[%c0_150, %c0_151], %297 {strides = array<i32>} : memref<82x128xf32, #tpu.memory_space<vmem>>, vector<9x128xf32>,
    %c73_152 = arith.constant 73 : index
    %c0_153 = arith.constant 0 : index
    %299 = vector.load %arg26[%c73_152, %c0_153] : memref<82x128xf32, #tpu.memory_space<vmem>>, vector<9x128xf32>
    tpu.vector_store %arg26[%c73_152, %c0_153], %297 {strides = array<i32>} : memref<82x128xf32, #tpu.memory_space<vmem>>, vector<9x128xf32>,
    %c9_154 = arith.constant 9 : index
    %c0_155 = arith.constant 0 : index
    %300 = vector.load %arg26[%c9_154, %c0_155] : memref<82x128xf32, #tpu.memory_space<vmem>>, vector<64x128xf32>
    tpu.vector_store %arg26[%c9_154, %c0_155], %296 {strides = array<i32>} : memref<82x128xf32, #tpu.memory_space<vmem>>, vector<64x128xf32>,
    %c0_156 = arith.constant 0 : index
    %c0_157 = arith.constant 0 : index
    %301 = vector.load %arg18[%c0_156, %c0_157] : memref<9x128xf32, #tpu.memory_space<vmem>>, vector<9x128xf32>
    %302 = vector.extract_strided_slice %301 {offsets = [4, 0], sizes = [1, 128], strides = [1, 1]} : vector<9x128xf32> to vector<1x128xf32>
    %303 = vector.broadcast %302 : vector<1x128xf32> to vector<64x128xf32>
    %304 = arith.mulf %296, %303 : vector<64x128xf32>
    %c0_158 = arith.constant 0 : index
    %c0_159 = arith.constant 0 : index
    %305 = vector.load %arg19[%c0_158, %c0_159] : memref<1x128xf32, #tpu.memory_space<vmem>>, vector<1x128xf32>
    %306 = vector.broadcast %305 : vector<1x128xf32> to vector<64x128xf32>
    %307 = arith.addf %304, %306 : vector<64x128xf32>
    %c0_160 = arith.constant 0 : index
    %c0_161 = arith.constant 0 : index
    %308 = vector.load %arg26[%c0_160, %c0_161] : memref<82x128xf32, #tpu.memory_space<vmem>>, vector<64x128xf32>
    %309 = vector.extract_strided_slice %301 {offsets = [0, 0], sizes = [1, 128], strides = [1, 1]} : vector<9x128xf32> to vector<1x128xf32>
    %310 = vector.broadcast %309 : vector<1x128xf32> to vector<64x128xf32>
    %311 = arith.mulf %308, %310 : vector<64x128xf32>
    %cst_162 = arith.constant 0.000000e+00 : f32
    %312 = vector.shape_cast %18 : vector<64x1xi1> to vector<64x1xi1>
    %313 = vector.broadcast %312 : vector<64x1xi1> to vector<64x128xi1>
    %314 = vector.broadcast %cst_162 : f32 to vector<64x128xf32>
    %315 = arith.select %313, %311, %314 : vector<64x128xi1>, vector<64x128xf32>
    %316 = arith.addf %307, %315 : vector<64x128xf32>
    %c1_163 = arith.constant 1 : index
    %c0_164 = arith.constant 0 : index
    %317 = vector.load %arg26[%c1_163, %c0_164] : memref<82x128xf32, #tpu.memory_space<vmem>>, vector<64x128xf32>
    %318 = vector.extract_strided_slice %301 {offsets = [1, 0], sizes = [1, 128], strides = [1, 1]} : vector<9x128xf32> to vector<1x128xf32>
    %319 = vector.broadcast %318 : vector<1x128xf32> to vector<64x128xf32>
    %320 = arith.mulf %317, %319 : vector<64x128xf32>
    %321 = arith.addf %316, %320 : vector<64x128xf32>
    %c2_165 = arith.constant 2 : index
    %c0_166 = arith.constant 0 : index
    %322 = vector.load %arg26[%c2_165, %c0_166] : memref<82x128xf32, #tpu.memory_space<vmem>>, vector<64x128xf32>
    %323 = vector.extract_strided_slice %301 {offsets = [2, 0], sizes = [1, 128], strides = [1, 1]} : vector<9x128xf32> to vector<1x128xf32>
    %324 = vector.broadcast %323 : vector<1x128xf32> to vector<64x128xf32>
    %325 = arith.mulf %322, %324 : vector<64x128xf32>
    %cst_167 = arith.constant 0.000000e+00 : f32
    %326 = vector.shape_cast %20 : vector<64x1xi1> to vector<64x1xi1>
    %327 = vector.broadcast %326 : vector<64x1xi1> to vector<64x128xi1>
    %328 = vector.broadcast %cst_167 : f32 to vector<64x128xf32>
    %329 = arith.select %327, %325, %328 : vector<64x128xi1>, vector<64x128xf32>
    %330 = arith.addf %321, %329 : vector<64x128xf32>
    %c8_168 = arith.constant 8 : index
    %c0_169 = arith.constant 0 : index
    %331 = vector.load %arg26[%c8_168, %c0_169] : memref<82x128xf32, #tpu.memory_space<vmem>>, vector<64x128xf32>
    %332 = vector.extract_strided_slice %301 {offsets = [3, 0], sizes = [1, 128], strides = [1, 1]} : vector<9x128xf32> to vector<1x128xf32>
    %333 = vector.broadcast %332 : vector<1x128xf32> to vector<64x128xf32>
    %334 = arith.mulf %331, %333 : vector<64x128xf32>
    %cst_170 = arith.constant 0.000000e+00 : f32
    %335 = vector.shape_cast %18 : vector<64x1xi1> to vector<64x1xi1>
    %336 = vector.broadcast %335 : vector<64x1xi1> to vector<64x128xi1>
    %337 = vector.broadcast %cst_170 : f32 to vector<64x128xf32>
    %338 = arith.select %336, %334, %337 : vector<64x128xi1>, vector<64x128xf32>
    %339 = arith.addf %330, %338 : vector<64x128xf32>
    %c10_171 = arith.constant 10 : index
    %c0_172 = arith.constant 0 : index
    %340 = vector.load %arg26[%c10_171, %c0_172] : memref<82x128xf32, #tpu.memory_space<vmem>>, vector<64x128xf32>
    %341 = vector.extract_strided_slice %301 {offsets = [5, 0], sizes = [1, 128], strides = [1, 1]} : vector<9x128xf32> to vector<1x128xf32>
    %342 = vector.broadcast %341 : vector<1x128xf32> to vector<64x128xf32>
    %343 = arith.mulf %340, %342 : vector<64x128xf32>
    %cst_173 = arith.constant 0.000000e+00 : f32
    %344 = vector.shape_cast %20 : vector<64x1xi1> to vector<64x1xi1>
    %345 = vector.broadcast %344 : vector<64x1xi1> to vector<64x128xi1>
    %346 = vector.broadcast %cst_173 : f32 to vector<64x128xf32>
    %347 = arith.select %345, %343, %346 : vector<64x128xi1>, vector<64x128xf32>
    %348 = arith.addf %339, %347 : vector<64x128xf32>
    %c16_174 = arith.constant 16 : index
    %c0_175 = arith.constant 0 : index
    %349 = vector.load %arg26[%c16_174, %c0_175] : memref<82x128xf32, #tpu.memory_space<vmem>>, vector<64x128xf32>
    %350 = vector.extract_strided_slice %301 {offsets = [6, 0], sizes = [1, 128], strides = [1, 1]} : vector<9x128xf32> to vector<1x128xf32>
    %351 = vector.broadcast %350 : vector<1x128xf32> to vector<64x128xf32>
    %352 = arith.mulf %349, %351 : vector<64x128xf32>
    %cst_176 = arith.constant 0.000000e+00 : f32
    %353 = vector.shape_cast %18 : vector<64x1xi1> to vector<64x1xi1>
    %354 = vector.broadcast %353 : vector<64x1xi1> to vector<64x128xi1>
    %355 = vector.broadcast %cst_176 : f32 to vector<64x128xf32>
    %356 = arith.select %354, %352, %355 : vector<64x128xi1>, vector<64x128xf32>
    %357 = arith.addf %348, %356 : vector<64x128xf32>
    %c17_177 = arith.constant 17 : index
    %c0_178 = arith.constant 0 : index
    %358 = vector.load %arg26[%c17_177, %c0_178] : memref<82x128xf32, #tpu.memory_space<vmem>>, vector<64x128xf32>
    %359 = vector.extract_strided_slice %301 {offsets = [7, 0], sizes = [1, 128], strides = [1, 1]} : vector<9x128xf32> to vector<1x128xf32>
    %360 = vector.broadcast %359 : vector<1x128xf32> to vector<64x128xf32>
    %361 = arith.mulf %358, %360 : vector<64x128xf32>
    %362 = arith.addf %357, %361 : vector<64x128xf32>
    %c18_179 = arith.constant 18 : index
    %c0_180 = arith.constant 0 : index
    %363 = vector.load %arg26[%c18_179, %c0_180] : memref<82x128xf32, #tpu.memory_space<vmem>>, vector<64x128xf32>
    %364 = vector.extract_strided_slice %301 {offsets = [8, 0], sizes = [1, 128], strides = [1, 1]} : vector<9x128xf32> to vector<1x128xf32>
    %365 = vector.broadcast %364 : vector<1x128xf32> to vector<64x128xf32>
    %366 = arith.mulf %363, %365 : vector<64x128xf32>
    %cst_181 = arith.constant 0.000000e+00 : f32
    %367 = vector.shape_cast %20 : vector<64x1xi1> to vector<64x1xi1>
    %368 = vector.broadcast %367 : vector<64x1xi1> to vector<64x128xi1>
    %369 = vector.broadcast %cst_181 : f32 to vector<64x128xf32>
    %370 = arith.select %368, %366, %369 : vector<64x128xi1>, vector<64x128xf32>
    %371 = arith.addf %362, %370 : vector<64x128xf32>
    %372 = arith.addf %296, %371 : vector<64x128xf32>
    %cst_182 = arith.constant 5.000000e-01 : f32
    %373 = vector.broadcast %cst_182 : f32 to vector<64x128xf32>
    %374 = arith.mulf %373, %372 : vector<64x128xf32>
    %cst_183 = arith.constant 4.471500e-02 : f32
    %375 = vector.broadcast %cst_183 : f32 to vector<64x128xf32>
    %376 = arith.mulf %375, %372 : vector<64x128xf32>
    %377 = arith.mulf %376, %372 : vector<64x128xf32>
    %378 = arith.mulf %377, %372 : vector<64x128xf32>
    %379 = arith.addf %372, %378 : vector<64x128xf32>
    %cst_184 = arith.constant 0.797884583 : f32
    %380 = vector.broadcast %cst_184 : f32 to vector<64x128xf32>
    %381 = arith.mulf %380, %379 : vector<64x128xf32>
    %382 = math.tanh %381 : vector<64x128xf32>
    %cst_185 = arith.constant 1.000000e+00 : f32
    %383 = vector.broadcast %cst_185 : f32 to vector<64x128xf32>
    %384 = arith.addf %383, %382 : vector<64x128xf32>
    %385 = arith.mulf %374, %384 : vector<64x128xf32>
    %c0_186 = arith.constant 0 : index
    %c0_187 = arith.constant 0 : index
    %386 = vector.load %arg20[%c0_186, %c0_187] : memref<1x128xf32, #tpu.memory_space<vmem>>, vector<1x128xf32>
    %387 = vector.broadcast %386 : vector<1x128xf32> to vector<64x128xf32>
    %388 = arith.mulf %385, %387 : vector<64x128xf32>
    %c0_188 = arith.constant 0 : index
    %c0_189 = arith.constant 0 : index
    %389 = vector.load %arg21[%c0_188, %c0_189] : memref<1x128xf32, #tpu.memory_space<vmem>>, vector<1x128xf32>
    %390 = vector.broadcast %389 : vector<1x128xf32> to vector<64x128xf32>
    %391 = arith.addf %388, %390 : vector<64x128xf32>
    %392 = arith.truncf %391 : vector<64x128xf32> to vector<64x128xbf16>
    %c0_190 = arith.constant 0 : index
    %c0_191 = arith.constant 0 : index
    %393 = vector.load %arg22[%c0_190, %c0_191] : memref<128x32xbf16, #tpu.memory_space<vmem>>, vector<128x32xbf16>
    %cst_192 = arith.constant dense<0.000000e+00> : vector<64x32xf32>
    %394 = tpu.matmul %392, %393, %cst_192 {dimension_numbers = #tpu.dot_dimension_numbers<[1], [0], [0], [1], [0, 0, 1, 1], [], []>} : vector<64x128xbf16>, vector<128x32xbf16>, vector<64x32xf32> -> vector<64x32xf32>
    %c0_193 = arith.constant 0 : index
    %c0_194 = arith.constant 0 : index
    %395 = vector.load %arg23[%c0_193, %c0_194] : memref<1x32xf32, #tpu.memory_space<vmem>>, vector<1x32xf32>
    %396 = vector.broadcast %395 : vector<1x32xf32> to vector<64x32xf32>
    %397 = arith.addf %394, %396 : vector<64x32xf32>
    %398 = arith.addf %249, %397 : vector<64x32xf32>
    %c0_195 = arith.constant 0 : index
    %c0_196 = arith.constant 0 : index
    %c0_197 = arith.constant 0 : index
    %399 = vector.load %arg24[%c0_195, %c0_196, %c0_197] : memref<1x64x32xf32, #tpu.memory_space<vmem>>, vector<1x64x32xf32>
    %400 = vector.shape_cast %399 : vector<1x64x32xf32> to vector<64x32xf32>
    %401 = vector.shape_cast %398 : vector<64x32xf32> to vector<1x64x32xf32>
    tpu.vector_store %arg24[%c0_195, %c0_196, %c0_197], %401 {strides = array<i32>} : memref<1x64x32xf32, #tpu.memory_space<vmem>>, vector<1x64x32xf32>,
    return
  }
  func.func @transform_0(%arg0: i32) -> (i32, i32, i32) {
    %c0_i32 = arith.constant 0 : i32
    %c0_i32_0 = arith.constant 0 : i32
    %c0_i32_1 = arith.constant 0 : i32
    return %arg0, %c0_i32, %c0_i32_0 : i32, i32, i32
  }
  func.func @transform_1(%arg0: i32) -> (i32, i32, i32) {
    %c0_i32 = arith.constant 0 : i32
    %c0_i32_0 = arith.constant 0 : i32
    %c0_i32_1 = arith.constant 0 : i32
    %c0_i32_2 = arith.constant 0 : i32
    return %c0_i32, %c0_i32_0, %c0_i32_1 : i32, i32, i32
  }
  func.func @transform_2(%arg0: i32) -> (i32, i32) {
    %c0_i32 = arith.constant 0 : i32
    %c0_i32_0 = arith.constant 0 : i32
    %c0_i32_1 = arith.constant 0 : i32
    return %c0_i32, %c0_i32_0 : i32, i32
  }
  func.func @transform_3(%arg0: i32) -> (i32, i32) {
    %c0_i32 = arith.constant 0 : i32
    %c0_i32_0 = arith.constant 0 : i32
    %c0_i32_1 = arith.constant 0 : i32
    return %c0_i32, %c0_i32_0 : i32, i32
  }
  func.func @transform_4(%arg0: i32) -> (i32, i32) {
    %c0_i32 = arith.constant 0 : i32
    %c0_i32_0 = arith.constant 0 : i32
    %c0_i32_1 = arith.constant 0 : i32
    return %c0_i32, %c0_i32_0 : i32, i32
  }
  func.func @transform_5(%arg0: i32) -> (i32, i32) {
    %c0_i32 = arith.constant 0 : i32
    %c0_i32_0 = arith.constant 0 : i32
    %c0_i32_1 = arith.constant 0 : i32
    return %c0_i32, %c0_i32_0 : i32, i32
  }
  func.func @transform_6(%arg0: i32) -> (i32, i32, i32) {
    %c0_i32 = arith.constant 0 : i32
    %c0_i32_0 = arith.constant 0 : i32
    %c0_i32_1 = arith.constant 0 : i32
    %c0_i32_2 = arith.constant 0 : i32
    return %c0_i32, %c0_i32_0, %c0_i32_1 : i32, i32, i32
  }
  func.func @transform_7(%arg0: i32) -> (i32, i32, i32) {
    %c0_i32 = arith.constant 0 : i32
    %c0_i32_0 = arith.constant 0 : i32
    %c0_i32_1 = arith.constant 0 : i32
    %c0_i32_2 = arith.constant 0 : i32
    return %c0_i32, %c0_i32_0, %c0_i32_1 : i32, i32, i32
  }
  func.func @transform_8(%arg0: i32) -> (i32, i32, i32) {
    %c0_i32 = arith.constant 0 : i32
    %c0_i32_0 = arith.constant 0 : i32
    %c0_i32_1 = arith.constant 0 : i32
    %c0_i32_2 = arith.constant 0 : i32
    return %c0_i32, %c0_i32_0, %c0_i32_1 : i32, i32, i32
  }
  func.func @transform_9(%arg0: i32) -> (i32, i32) {
    %c0_i32 = arith.constant 0 : i32
    %c0_i32_0 = arith.constant 0 : i32
    %c0_i32_1 = arith.constant 0 : i32
    return %c0_i32, %c0_i32_0 : i32, i32
  }
  func.func @transform_10(%arg0: i32) -> (i32, i32) {
    %c0_i32 = arith.constant 0 : i32
    %c0_i32_0 = arith.constant 0 : i32
    %c0_i32_1 = arith.constant 0 : i32
    return %c0_i32, %c0_i32_0 : i32, i32
  }
  func.func @transform_11(%arg0: i32) -> (i32, i32) {
    %c0_i32 = arith.constant 0 : i32
    %c0_i32_0 = arith.constant 0 : i32
    %c0_i32_1 = arith.constant 0 : i32
    return %c0_i32, %c0_i32_0 : i32, i32
  }
  func.func @transform_12(%arg0: i32) -> (i32, i32) {
    %c0_i32 = arith.constant 0 : i32
    %c0_i32_0 = arith.constant 0 : i32
    %c0_i32_1 = arith.constant 0 : i32
    return %c0_i32, %c0_i32_0 : i32, i32
  }
  func.func @transform_13(%arg0: i32) -> (i32, i32) {
    %c0_i32 = arith.constant 0 : i32
    %c0_i32_0 = arith.constant 0 : i32
    %c0_i32_1 = arith.constant 0 : i32
    return %c0_i32, %c0_i32_0 : i32, i32
  }
  func.func @transform_14(%arg0: i32) -> (i32, i32) {
    %c0_i32 = arith.constant 0 : i32
    %c0_i32_0 = arith.constant 0 : i32
    %c0_i32_1 = arith.constant 0 : i32
    return %c0_i32, %c0_i32_0 : i32, i32
  }
  func.func @transform_15(%arg0: i32) -> (i32, i32) {
    %c0_i32 = arith.constant 0 : i32
    %c0_i32_0 = arith.constant 0 : i32
    %c0_i32_1 = arith.constant 0 : i32
    return %c0_i32, %c0_i32_0 : i32, i32
  }
  func.func @transform_16(%arg0: i32) -> (i32, i32) {
    %c0_i32 = arith.constant 0 : i32
    %c0_i32_0 = arith.constant 0 : i32
    %c0_i32_1 = arith.constant 0 : i32
    return %c0_i32, %c0_i32_0 : i32, i32
  }
  func.func @transform_17(%arg0: i32) -> (i32, i32) {
    %c0_i32 = arith.constant 0 : i32
    %c0_i32_0 = arith.constant 0 : i32
    %c0_i32_1 = arith.constant 0 : i32
    return %c0_i32, %c0_i32_0 : i32, i32
  }
  func.func @transform_18(%arg0: i32) -> (i32, i32) {
    %c0_i32 = arith.constant 0 : i32
    %c0_i32_0 = arith.constant 0 : i32
    %c0_i32_1 = arith.constant 0 : i32
    return %c0_i32, %c0_i32_0 : i32, i32
  }
  func.func @transform_19(%arg0: i32) -> (i32, i32) {
    %c0_i32 = arith.constant 0 : i32
    %c0_i32_0 = arith.constant 0 : i32
    %c0_i32_1 = arith.constant 0 : i32
    return %c0_i32, %c0_i32_0 : i32, i32
  }
  func.func @transform_20(%arg0: i32) -> (i32, i32) {
    %c0_i32 = arith.constant 0 : i32
    %c0_i32_0 = arith.constant 0 : i32
    %c0_i32_1 = arith.constant 0 : i32
    return %c0_i32, %c0_i32_0 : i32, i32
  }
  func.func @transform_21(%arg0: i32) -> (i32, i32) {
    %c0_i32 = arith.constant 0 : i32
    %c0_i32_0 = arith.constant 0 : i32
    %c0_i32_1 = arith.constant 0 : i32
    return %c0_i32, %c0_i32_0 : i32, i32
  }
  func.func @transform_22(%arg0: i32) -> (i32, i32) {
    %c0_i32 = arith.constant 0 : i32
    %c0_i32_0 = arith.constant 0 : i32
    %c0_i32_1 = arith.constant 0 : i32
    return %c0_i32, %c0_i32_0 : i32, i32
  }
  func.func @transform_23(%arg0: i32) -> (i32, i32, i32) {
    %c0_i32 = arith.constant 0 : i32
    %c0_i32_0 = arith.constant 0 : i32
    %c0_i32_1 = arith.constant 0 : i32
    return %arg0, %c0_i32, %c0_i32_0 : i32, i32, i32
  }
}

</mosaic_0001>

<llo_original>
// kernel: tpu_custom_call.1
$region0: #{tpu_custom_call.1}
  #allocation0 [shape = 'u32[]', space=smem, size = 0x4, offset = 0x4, fixed_abs, tag = 'smem constant byte address 0x4 - core index']
  #allocation1 [shape = 'u32[72,128]{1,0:T(1,128)}', space=vmem, size = 0x9000, scoped, tag = 'internal scratch']
  #allocation2 [shape = 'f32[82,32]{1,0:T(8,128)}', space=vmem, size = 0xb000, scoped, tag = 'scratch operand']
  #allocation3 [shape = 'f32[82,128]{1,0:T(8,128)}', space=vmem, size = 0xb000, scoped, tag = 'scratch operand']
  #allocation4 [shape = 'f32[64,32]{1,0:T(8,128)}', space=vmem, size = 0x8000, scoped, tag = 'scratch operand']
  %s0 = inlined_call_operand.vmem [shape: f32[2,64,32], index: 0, kind: input, shape index: {}]
  %s1 = inlined_call_operand.vmem [shape: bf16[4,64,64], index: 1, kind: input, shape index: {}]
  %s2 = inlined_call_operand.vmem [shape: f32[9,32], index: 2, kind: input, shape index: {}]
  %s3 = inlined_call_operand.vmem [shape: f32[1,32], index: 3, kind: input, shape index: {}]
  %s4 = inlined_call_operand.vmem [shape: f32[1,32], index: 4, kind: input, shape index: {}]
  %s5 = inlined_call_operand.vmem [shape: f32[1,32], index: 5, kind: input, shape index: {}]
  %s6 = inlined_call_operand.vmem [shape: bf16[4,32,8], index: 6, kind: input, shape index: {}]
  %s7 = inlined_call_operand.vmem [shape: bf16[4,32,8], index: 7, kind: input, shape index: {}]
  %s8 = inlined_call_operand.vmem [shape: bf16[4,32,8], index: 8, kind: input, shape index: {}]
  %s9 = inlined_call_operand.vmem [shape: bf16[32,32], index: 9, kind: input, shape index: {}]
  %s10 = inlined_call_operand.vmem [shape: f32[1,32], index: 10, kind: input, shape index: {}]
  %s11 = inlined_call_operand.vmem [shape: f32[1,32], index: 11, kind: input, shape index: {}]
  %s12 = inlined_call_operand.vmem [shape: f32[1,32], index: 12, kind: input, shape index: {}]
  %s13 = inlined_call_operand.vmem [shape: bf16[32,128], index: 13, kind: input, shape index: {}]
  %s14 = inlined_call_operand.vmem [shape: f32[1,128], index: 14, kind: input, shape index: {}]
  %s15 = inlined_call_operand.vmem [shape: f32[1,128], index: 15, kind: input, shape index: {}]
  %s16 = inlined_call_operand.vmem [shape: f32[1,128], index: 16, kind: input, shape index: {}]
  %s17 = inlined_call_operand.vmem [shape: f32[9,128], index: 17, kind: input, shape index: {}]
  %s18 = inlined_call_operand.vmem [shape: f32[1,128], index: 18, kind: input, shape index: {}]
  %s19 = inlined_call_operand.vmem [shape: f32[1,128], index: 19, kind: input, shape index: {}]
  %s20 = inlined_call_operand.vmem [shape: f32[1,128], index: 20, kind: input, shape index: {}]
  %s21 = inlined_call_operand.vmem [shape: bf16[128,32], index: 21, kind: input, shape index: {}]
  %s22 = inlined_call_operand.vmem [shape: f32[1,32], index: 22, kind: input, shape index: {}]
  %s23 = inlined_call_operand.vmem [shape: f32[2,64,32], index: 23, kind: output, shape index: {}]
  %s24 = sld [smem:[#allocation0]]
  $region125: #{tpu_custom_call.1} parent=0
    _
  %s26 = ssub.s32 1, %s24
  %s27 = scalar_select 0, %s26, %s24
  loop: start=0, step=1, limit=4
  $region2: #{tpu_custom_call.1} parent=0 // loop_pre_header
    _
  $region3: #{tpu_custom_call.1} parent=0 // loop_header
    %s29 = sphi 0, %s33
    %p30 = scmp.ge.s32.totalorder %s29, 4
    %s39 = sphi 0, %s41
    %s42 = sphi 0, %s39
    %s43 = sphi 0, %s42
    %s59 = sphi 0, %s43
    %s63 = sphi 0, %s63
    %s65 = sphi 0, %s63
    %s66 = sphi 0, %s65
    %s80 = sphi 0, %s66
    %s84 = sphi 0, %s84
    %s86 = sphi 0, %s84
    %s87 = sphi 0, %s86
    %s101 = sphi 0, %s87
    %s105 = sphi 0, %s105
    %s107 = sphi 0, %s105
    %s108 = sphi 0, %s107
    %s122 = sphi 0, %s108
    %s126 = sphi 0, %s126
    %s128 = sphi 0, %s126
    %s129 = sphi 0, %s128
    %s143 = sphi 0, %s129
    %s147 = sphi 0, %s147
    %s149 = sphi 0, %s147
    %s150 = sphi 0, %s149
    %s164 = sphi 0, %s150
    %s168 = sphi 0, %s168
    %s170 = sphi 0, %s168
    %s171 = sphi 0, %s170
    %s185 = sphi 0, %s171
    %s189 = sphi 0, %s189
    %s191 = sphi 0, %s189
    %s192 = sphi 0, %s191
    %s206 = sphi 0, %s192
    %s210 = sphi 0, %s210
    %s212 = sphi 0, %s210
    %s213 = sphi 0, %s212
    %s227 = sphi 0, %s213
    %s231 = sphi 0, %s231
    %s233 = sphi 0, %s231
    %s234 = sphi 0, %s233
    %s248 = sphi 0, %s234
    %s252 = sphi 0, %s252
    %s254 = sphi 0, %s252
    %s255 = sphi 0, %s254
    %s269 = sphi 0, %s255
    %s273 = sphi 0, %s273
    %s275 = sphi 0, %s273
    %s276 = sphi 0, %s275
    %s290 = sphi 0, %s276
    %s294 = sphi 0, %s294
    %s296 = sphi 0, %s294
    %s297 = sphi 0, %s296
    %s311 = sphi 0, %s297
    %s315 = sphi 0, %s315
    %s317 = sphi 0, %s315
    %s318 = sphi 0, %s317
    %s332 = sphi 0, %s318
    %s336 = sphi 0, %s336
    %s338 = sphi 0, %s336
    %s339 = sphi 0, %s338
    %s353 = sphi 0, %s339
    %s357 = sphi 0, %s357
    %s359 = sphi 0, %s357
    %s360 = sphi 0, %s359
    %s374 = sphi 0, %s360
    %s378 = sphi 0, %s378
    %s380 = sphi 0, %s378
    %s381 = sphi 0, %s380
    %s395 = sphi 0, %s381
    %s399 = sphi 0, %s399
    %s401 = sphi 0, %s399
    %s402 = sphi 0, %s401
    %s416 = sphi 0, %s402
    %s420 = sphi 0, %s420
    %s422 = sphi 0, %s420
    %s423 = sphi 0, %s422
    %s437 = sphi 0, %s423
    %s441 = sphi 0, %s441
    %s443 = sphi 0, %s441
    %s444 = sphi 0, %s443
    %s458 = sphi 0, %s444
    %s462 = sphi 0, %s462
    %s464 = sphi 0, %s462
    %s465 = sphi 0, %s464
    %s479 = sphi 0, %s465
    %s483 = sphi 0, %s483
    %s485 = sphi 0, %s483
    %s486 = sphi 0, %s485
    %s500 = sphi 0, %s486
    %s504 = sphi 0, %s504
    %s506 = sphi 0, %s504
    %s507 = sphi 0, %s506
    %s521 = sphi 0, %s507
    %s527 = sphi 0, %s529
    %s530 = sphi 0, %s527
    %s531 = sphi 0, %s530
    %s547 = sphi 0, %s531
  $region4: #{tpu_custom_call.1} parent=0 // loop_header_branch
    %32 = sbr.rel (%p30) target = $region8
  $region5: #{tpu_custom_call.1} parent=0 // loop_body
    %s34 = ssub.s32 %s29, 1
    %s35 = ssub.s32 %s29, 2
    %s36 = sadd.s32 %s29, 1
    %s37 = ssub.s32 %s29, %s36
    %p38 = scmp.eq.s32.totalorder %s37, 0
    %s40 = sadd.s32 %s39, 1
    %s41 = scalar_select %p38, %s39, %s40
    %p44 = pneg %p38
    %p45 = scmp.eq.s32.totalorder %s29, 1
    %p46 = por %p44, %p45
    %p47 = scmp.ne.s32.totalorder %s39, %s42
    %p48 = scmp.eq.s32.totalorder %s29, 0
    %p49 = por %p47, %p48
    %p50 = scmp.ne.s32.totalorder %s39, %s42
    %p51 = scmp.eq.s32.totalorder %s34, 1
    %p52 = por %p50, %p51
    %p53 = scmp.ne.s32.totalorder %s42, %s43
    %p54 = scmp.eq.s32.totalorder %s34, 0
    %p55 = por %p53, %p54
    %p56 = scmp.ne.s32.totalorder %s42, %s43
    %p57 = scmp.eq.s32.totalorder %s35, 1
    %p58 = por %p56, %p57
    %p60 = scmp.ne.s32.totalorder %s43, %s59
    %p61 = scmp.eq.s32.totalorder %s35, 0
    %p62 = por %p60, %p61
    %s64 = sadd.s32 %s63, 1
    %p67 = scmp.eq.s32.totalorder %s29, 1
    %p68 = scmp.ne.s32.totalorder %s63, %s65
    %p69 = scmp.eq.s32.totalorder %s29, 0
    %p70 = por %p68, %p69
    %p71 = scmp.ne.s32.totalorder %s63, %s65
    %p72 = scmp.eq.s32.totalorder %s34, 1
    %p73 = por %p71, %p72
    %p74 = scmp.ne.s32.totalorder %s65, %s66
    %p75 = scmp.eq.s32.totalorder %s34, 0
    %p76 = por %p74, %p75
    %p77 = scmp.ne.s32.totalorder %s65, %s66
    %p78 = scmp.eq.s32.totalorder %s35, 1
    %p79 = por %p77, %p78
    %p81 = scmp.ne.s32.totalorder %s66, %s80
    %p82 = scmp.eq.s32.totalorder %s35, 0
    %p83 = por %p81, %p82
    %s85 = sadd.s32 %s84, 1
    %p88 = scmp.eq.s32.totalorder %s29, 1
    %p89 = scmp.ne.s32.totalorder %s84, %s86
    %p90 = scmp.eq.s32.totalorder %s29, 0
    %p91 = por %p89, %p90
    %p92 = scmp.ne.s32.totalorder %s84, %s86
    %p93 = scmp.eq.s32.totalorder %s34, 1
    %p94 = por %p92, %p93
    %p95 = scmp.ne.s32.totalorder %s86, %s87
    %p96 = scmp.eq.s32.totalorder %s34, 0
    %p97 = por %p95, %p96
    %p98 = scmp.ne.s32.totalorder %s86, %s87
    %p99 = scmp.eq.s32.totalorder %s35, 1
    %p100 = por %p98, %p99
    %p102 = scmp.ne.s32.totalorder %s87, %s101
    %p103 = scmp.eq.s32.totalorder %s35, 0
    %p104 = por %p102, %p103
    %s106 = sadd.s32 %s105, 1
    %p109 = scmp.eq.s32.totalorder %s29, 1
    %p110 = scmp.ne.s32.totalorder %s105, %s107
    %p111 = scmp.eq.s32.totalorder %s29, 0
    %p112 = por %p110, %p111
    %p113 = scmp.ne.s32.totalorder %s105, %s107
    %p114 = scmp.eq.s32.totalorder %s34, 1
    %p115 = por %p113, %p114
    %p116 = scmp.ne.s32.totalorder %s107, %s108
    %p117 = scmp.eq.s32.totalorder %s34, 0
    %p118 = por %p116, %p117
    %p119 = scmp.ne.s32.totalorder %s107, %s108
    %p120 = scmp.eq.s32.totalorder %s35, 1
    %p121 = por %p119, %p120
    %p123 = scmp.ne.s32.totalorder %s108, %s122
    %p124 = scmp.eq.s32.totalorder %s35, 0
    %p125 = por %p123, %p124
    %s127 = sadd.s32 %s126, 1
    %p130 = scmp.eq.s32.totalorder %s29, 1
    %p131 = scmp.ne.s32.totalorder %s126, %s128
    %p132 = scmp.eq.s32.totalorder %s29, 0
    %p133 = por %p131, %p132
    %p134 = scmp.ne.s32.totalorder %s126, %s128
    %p135 = scmp.eq.s32.totalorder %s34, 1
    %p136 = por %p134, %p135
    %p137 = scmp.ne.s32.totalorder %s128, %s129
    %p138 = scmp.eq.s32.totalorder %s34, 0
    %p139 = por %p137, %p138
    %p140 = scmp.ne.s32.totalorder %s128, %s129
    %p141 = scmp.eq.s32.totalorder %s35, 1
    %p142 = por %p140, %p141
    %p144 = scmp.ne.s32.totalorder %s129, %s143
    %p145 = scmp.eq.s32.totalorder %s35, 0
    %p146 = por %p144, %p145
    %s148 = sadd.s32 %s147, 1
    %p151 = scmp.eq.s32.totalorder %s29, 1
    %p152 = scmp.ne.s32.totalorder %s147, %s149
    %p153 = scmp.eq.s32.totalorder %s29, 0
    %p154 = por %p152, %p153
    %p155 = scmp.ne.s32.totalorder %s147, %s149
    %p156 = scmp.eq.s32.totalorder %s34, 1
    %p157 = por %p155, %p156
    %p158 = scmp.ne.s32.totalorder %s149, %s150
    %p159 = scmp.eq.s32.totalorder %s34, 0
    %p160 = por %p158, %p159
    %p161 = scmp.ne.s32.totalorder %s149, %s150
    %p162 = scmp.eq.s32.totalorder %s35, 1
    %p163 = por %p161, %p162
    %p165 = scmp.ne.s32.totalorder %s150, %s164
    %p166 = scmp.eq.s32.totalorder %s35, 0
    %p167 = por %p165, %p166
    %s169 = sadd.s32 %s168, 1
    %p172 = scmp.eq.s32.totalorder %s29, 1
    %p173 = scmp.ne.s32.totalorder %s168, %s170
    %p174 = scmp.eq.s32.totalorder %s29, 0
    %p175 = por %p173, %p174
    %p176 = scmp.ne.s32.totalorder %s168, %s170
    %p177 = scmp.eq.s32.totalorder %s34, 1
    %p178 = por %p176, %p177
    %p179 = scmp.ne.s32.totalorder %s170, %s171
    %p180 = scmp.eq.s32.totalorder %s34, 0
    %p181 = por %p179, %p180
    %p182 = scmp.ne.s32.totalorder %s170, %s171
    %p183 = scmp.eq.s32.totalorder %s35, 1
    %p184 = por %p182, %p183
    %p186 = scmp.ne.s32.totalorder %s171, %s185
    %p187 = scmp.eq.s32.totalorder %s35, 0
    %p188 = por %p186, %p187
    %s190 = sadd.s32 %s189, 1
    %p193 = scmp.eq.s32.totalorder %s29, 1
    %p194 = scmp.ne.s32.totalorder %s189, %s191
    %p195 = scmp.eq.s32.totalorder %s29, 0
    %p196 = por %p194, %p195
    %p197 = scmp.ne.s32.totalorder %s189, %s191
    %p198 = scmp.eq.s32.totalorder %s34, 1
    %p199 = por %p197, %p198
    %p200 = scmp.ne.s32.totalorder %s191, %s192
    %p201 = scmp.eq.s32.totalorder %s34, 0
    %p202 = por %p200, %p201
    %p203 = scmp.ne.s32.totalorder %s191, %s192
    %p204 = scmp.eq.s32.totalorder %s35, 1
    %p205 = por %p203, %p204
    %p207 = scmp.ne.s32.totalorder %s192, %s206
    %p208 = scmp.eq.s32.totalorder %s35, 0
    %p209 = por %p207, %p208
    %s211 = sadd.s32 %s210, 1
    %p214 = scmp.eq.s32.totalorder %s29, 1
    %p215 = scmp.ne.s32.totalorder %s210, %s212
    %p216 = scmp.eq.s32.totalorder %s29, 0
    %p217 = por %p215, %p216
    %p218 = scmp.ne.s32.totalorder %s210, %s212
    %p219 = scmp.eq.s32.totalorder %s34, 1
    %p220 = por %p218, %p219
    %p221 = scmp.ne.s32.totalorder %s212, %s213
    %p222 = scmp.eq.s32.totalorder %s34, 0
    %p223 = por %p221, %p222
    %p224 = scmp.ne.s32.totalorder %s212, %s213
    %p225 = scmp.eq.s32.totalorder %s35, 1
    %p226 = por %p224, %p225
    %p228 = scmp.ne.s32.totalorder %s213, %s227
    %p229 = scmp.eq.s32.totalorder %s35, 0
    %p230 = por %p228, %p229
    %s232 = sadd.s32 %s231, 1
    %p235 = scmp.eq.s32.totalorder %s29, 1
    %p236 = scmp.ne.s32.totalorder %s231, %s233
    %p237 = scmp.eq.s32.totalorder %s29, 0
    %p238 = por %p236, %p237
    %p239 = scmp.ne.s32.totalorder %s231, %s233
    %p240 = scmp.eq.s32.totalorder %s34, 1
    %p241 = por %p239, %p240
    %p242 = scmp.ne.s32.totalorder %s233, %s234
    %p243 = scmp.eq.s32.totalorder %s34, 0
    %p244 = por %p242, %p243
    %p245 = scmp.ne.s32.totalorder %s233, %s234
    %p246 = scmp.eq.s32.totalorder %s35, 1
    %p247 = por %p245, %p246
    %p249 = scmp.ne.s32.totalorder %s234, %s248
    %p250 = scmp.eq.s32.totalorder %s35, 0
    %p251 = por %p249, %p250
    %s253 = sadd.s32 %s252, 1
    %p256 = scmp.eq.s32.totalorder %s29, 1
    %p257 = scmp.ne.s32.totalorder %s252, %s254
    %p258 = scmp.eq.s32.totalorder %s29, 0
    %p259 = por %p257, %p258
    %p260 = scmp.ne.s32.totalorder %s252, %s254
    %p261 = scmp.eq.s32.totalorder %s34, 1
    %p262 = por %p260, %p261
    %p263 = scmp.ne.s32.totalorder %s254, %s255
    %p264 = scmp.eq.s32.totalorder %s34, 0
    %p265 = por %p263, %p264
    %p266 = scmp.ne.s32.totalorder %s254, %s255
    %p267 = scmp.eq.s32.totalorder %s35, 1
    %p268 = por %p266, %p267
    %p270 = scmp.ne.s32.totalorder %s255, %s269
    %p271 = scmp.eq.s32.totalorder %s35, 0
    %p272 = por %p270, %p271
    %s274 = sadd.s32 %s273, 1
    %p277 = scmp.eq.s32.totalorder %s29, 1
    %p278 = scmp.ne.s32.totalorder %s273, %s275
    %p279 = scmp.eq.s32.totalorder %s29, 0
    %p280 = por %p278, %p279
    %p281 = scmp.ne.s32.totalorder %s273, %s275
    %p282 = scmp.eq.s32.totalorder %s34, 1
    %p283 = por %p281, %p282
    %p284 = scmp.ne.s32.totalorder %s275, %s276
    %p285 = scmp.eq.s32.totalorder %s34, 0
    %p286 = por %p284, %p285
    %p287 = scmp.ne.s32.totalorder %s275, %s276
    %p288 = scmp.eq.s32.totalorder %s35, 1
    %p289 = por %p287, %p288
    %p291 = scmp.ne.s32.totalorder %s276, %s290
    %p292 = scmp.eq.s32.totalorder %s35, 0
    %p293 = por %p291, %p292
    %s295 = sadd.s32 %s294, 1
    %p298 = scmp.eq.s32.totalorder %s29, 1
    %p299 = scmp.ne.s32.totalorder %s294, %s296
    %p300 = scmp.eq.s32.totalorder %s29, 0
    %p301 = por %p299, %p300
    %p302 = scmp.ne.s32.totalorder %s294, %s296
    %p303 = scmp.eq.s32.totalorder %s34, 1
    %p304 = por %p302, %p303
    %p305 = scmp.ne.s32.totalorder %s296, %s297
    %p306 = scmp.eq.s32.totalorder %s34, 0
    %p307 = por %p305, %p306
    %p308 = scmp.ne.s32.totalorder %s296, %s297
    %p309 = scmp.eq.s32.totalorder %s35, 1
    %p310 = por %p308, %p309
    %p312 = scmp.ne.s32.totalorder %s297, %s311
    %p313 = scmp.eq.s32.totalorder %s35, 0
    %p314 = por %p312, %p313
    %s316 = sadd.s32 %s315, 1
    %p319 = scmp.eq.s32.totalorder %s29, 1
    %p320 = scmp.ne.s32.totalorder %s315, %s317
    %p321 = scmp.eq.s32.totalorder %s29, 0
    %p322 = por %p320, %p321
    %p323 = scmp.ne.s32.totalorder %s315, %s317
    %p324 = scmp.eq.s32.totalorder %s34, 1
    %p325 = por %p323, %p324
    %p326 = scmp.ne.s32.totalorder %s317, %s318
    %p327 = scmp.eq.s32.totalorder %s34, 0
    %p328 = por %p326, %p327
    %p329 = scmp.ne.s32.totalorder %s317, %s318
    %p330 = scmp.eq.s32.totalorder %s35, 1
    %p331 = por %p329, %p330
    %p333 = scmp.ne.s32.totalorder %s318, %s332
    %p334 = scmp.eq.s32.totalorder %s35, 0
    %p335 = por %p333, %p334
    %s337 = sadd.s32 %s336, 1
    %p340 = scmp.eq.s32.totalorder %s29, 1
    %p341 = scmp.ne.s32.totalorder %s336, %s338
    %p342 = scmp.eq.s32.totalorder %s29, 0
    %p343 = por %p341, %p342
    %p344 = scmp.ne.s32.totalorder %s336, %s338
    %p345 = scmp.eq.s32.totalorder %s34, 1
    %p346 = por %p344, %p345
    %p347 = scmp.ne.s32.totalorder %s338, %s339
    %p348 = scmp.eq.s32.totalorder %s34, 0
    %p349 = por %p347, %p348
    %p350 = scmp.ne.s32.totalorder %s338, %s339
    %p351 = scmp.eq.s32.totalorder %s35, 1
    %p352 = por %p350, %p351
    %p354 = scmp.ne.s32.totalorder %s339, %s353
    %p355 = scmp.eq.s32.totalorder %s35, 0
    %p356 = por %p354, %p355
    %s358 = sadd.s32 %s357, 1
    %p361 = scmp.eq.s32.totalorder %s29, 1
    %p362 = scmp.ne.s32.totalorder %s357, %s359
    %p363 = scmp.eq.s32.totalorder %s29, 0
    %p364 = por %p362, %p363
    %p365 = scmp.ne.s32.totalorder %s357, %s359
    %p366 = scmp.eq.s32.totalorder %s34, 1
    %p367 = por %p365, %p366
    %p368 = scmp.ne.s32.totalorder %s359, %s360
    %p369 = scmp.eq.s32.totalorder %s34, 0
    %p370 = por %p368, %p369
    %p371 = scmp.ne.s32.totalorder %s359, %s360
    %p372 = scmp.eq.s32.totalorder %s35, 1
    %p373 = por %p371, %p372
    %p375 = scmp.ne.s32.totalorder %s360, %s374
    %p376 = scmp.eq.s32.totalorder %s35, 0
    %p377 = por %p375, %p376
    %s379 = sadd.s32 %s378, 1
    %p382 = scmp.eq.s32.totalorder %s29, 1
    %p383 = scmp.ne.s32.totalorder %s378, %s380
    %p384 = scmp.eq.s32.totalorder %s29, 0
    %p385 = por %p383, %p384
    %p386 = scmp.ne.s32.totalorder %s378, %s380
    %p387 = scmp.eq.s32.totalorder %s34, 1
    %p388 = por %p386, %p387
    %p389 = scmp.ne.s32.totalorder %s380, %s381
    %p390 = scmp.eq.s32.totalorder %s34, 0
    %p391 = por %p389, %p390
    %p392 = scmp.ne.s32.totalorder %s380, %s381
    %p393 = scmp.eq.s32.totalorder %s35, 1
    %p394 = por %p392, %p393
    %p396 = scmp.ne.s32.totalorder %s381, %s395
    %p397 = scmp.eq.s32.totalorder %s35, 0
    %p398 = por %p396, %p397
    %s400 = sadd.s32 %s399, 1
    %p403 = scmp.eq.s32.totalorder %s29, 1
    %p404 = scmp.ne.s32.totalorder %s399, %s401
    %p405 = scmp.eq.s32.totalorder %s29, 0
    %p406 = por %p404, %p405
    %p407 = scmp.ne.s32.totalorder %s399, %s401
    %p408 = scmp.eq.s32.totalorder %s34, 1
    %p409 = por %p407, %p408
    %p410 = scmp.ne.s32.totalorder %s401, %s402
    %p411 = scmp.eq.s32.totalorder %s34, 0
    %p412 = por %p410, %p411
    %p413 = scmp.ne.s32.totalorder %s401, %s402
    %p414 = scmp.eq.s32.totalorder %s35, 1
    %p415 = por %p413, %p414
    %p417 = scmp.ne.s32.totalorder %s402, %s416
    %p418 = scmp.eq.s32.totalorder %s35, 0
    %p419 = por %p417, %p418
    %s421 = sadd.s32 %s420, 1
    %p424 = scmp.eq.s32.totalorder %s29, 1
    %p425 = scmp.ne.s32.totalorder %s420, %s422
    %p426 = scmp.eq.s32.totalorder %s29, 0
    %p427 = por %p425, %p426
    %p428 = scmp.ne.s32.totalorder %s420, %s422
    %p429 = scmp.eq.s32.totalorder %s34, 1
    %p430 = por %p428, %p429
    %p431 = scmp.ne.s32.totalorder %s422, %s423
    %p432 = scmp.eq.s32.totalorder %s34, 0
    %p433 = por %p431, %p432
    %p434 = scmp.ne.s32.totalorder %s422, %s423
    %p435 = scmp.eq.s32.totalorder %s35, 1
    %p436 = por %p434, %p435
    %p438 = scmp.ne.s32.totalorder %s423, %s437
    %p439 = scmp.eq.s32.totalorder %s35, 0
    %p440 = por %p438, %p439
    %s442 = sadd.s32 %s441, 1
    %p445 = scmp.eq.s32.totalorder %s29, 1
    %p446 = scmp.ne.s32.totalorder %s441, %s443
    %p447 = scmp.eq.s32.totalorder %s29, 0
    %p448 = por %p446, %p447
    %p449 = scmp.ne.s32.totalorder %s441, %s443
    %p450 = scmp.eq.s32.totalorder %s34, 1
    %p451 = por %p449, %p450
    %p452 = scmp.ne.s32.totalorder %s443, %s444
    %p453 = scmp.eq.s32.totalorder %s34, 0
    %p454 = por %p452, %p453
    %p455 = scmp.ne.s32.totalorder %s443, %s444
    %p456 = scmp.eq.s32.totalorder %s35, 1
    %p457 = por %p455, %p456
    %p459 = scmp.ne.s32.totalorder %s444, %s458
    %p460 = scmp.eq.s32.totalorder %s35, 0
    %p461 = por %p459, %p460
    %s463 = sadd.s32 %s462, 1
    %p466 = scmp.eq.s32.totalorder %s29, 1
    %p467 = scmp.ne.s32.totalorder %s462, %s464
    %p468 = scmp.eq.s32.totalorder %s29, 0
    %p469 = por %p467, %p468
    %p470 = scmp.ne.s32.totalorder %s462, %s464
    %p471 = scmp.eq.s32.totalorder %s34, 1
    %p472 = por %p470, %p471
    %p473 = scmp.ne.s32.totalorder %s464, %s465
    %p474 = scmp.eq.s32.totalorder %s34, 0
    %p475 = por %p473, %p474
    %p476 = scmp.ne.s32.totalorder %s464, %s465
    %p477 = scmp.eq.s32.totalorder %s35, 1
    %p478 = por %p476, %p477
    %p480 = scmp.ne.s32.totalorder %s465, %s479
    %p481 = scmp.eq.s32.totalorder %s35, 0
    %p482 = por %p480, %p481
    %s484 = sadd.s32 %s483, 1
    %p487 = scmp.eq.s32.totalorder %s29, 1
    %p488 = scmp.ne.s32.totalorder %s483, %s485
    %p489 = scmp.eq.s32.totalorder %s29, 0
    %p490 = por %p488, %p489
    %p491 = scmp.ne.s32.totalorder %s483, %s485
    %p492 = scmp.eq.s32.totalorder %s34, 1
    %p493 = por %p491, %p492
    %p494 = scmp.ne.s32.totalorder %s485, %s486
    %p495 = scmp.eq.s32.totalorder %s34, 0
    %p496 = por %p494, %p495
    %p497 = scmp.ne.s32.totalorder %s485, %s486
    %p498 = scmp.eq.s32.totalorder %s35, 1
    %p499 = por %p497, %p498
    %p501 = scmp.ne.s32.totalorder %s486, %s500
    %p502 = scmp.eq.s32.totalorder %s35, 0
    %p503 = por %p501, %p502
    %s505 = sadd.s32 %s504, 1
    %p508 = scmp.eq.s32.totalorder %s29, 1
    %p509 = scmp.ne.s32.totalorder %s504, %s506
    %p510 = scmp.eq.s32.totalorder %s29, 0
    %p511 = por %p509, %p510
    %p512 = scmp.ne.s32.totalorder %s504, %s506
    %p513 = scmp.eq.s32.totalorder %s34, 1
    %p514 = por %p512, %p513
    %p515 = scmp.ne.s32.totalorder %s506, %s507
    %p516 = scmp.eq.s32.totalorder %s34, 0
    %p517 = por %p515, %p516
    %p518 = scmp.ne.s32.totalorder %s506, %s507
    %p519 = scmp.eq.s32.totalorder %s35, 1
    %p520 = por %p518, %p519
    %p522 = scmp.ne.s32.totalorder %s507, %s521
    %p523 = scmp.eq.s32.totalorder %s35, 0
    %p524 = por %p522, %p523
    %s525 = ssub.s32 %s29, %s36
    %p526 = scmp.eq.s32.totalorder %s525, 0
    %s528 = sadd.s32 %s527, 1
    %s529 = scalar_select %p526, %s527, %s528
    %p532 = pneg %p526
    %p533 = scmp.eq.s32.totalorder %s29, 1
    %p534 = por %p532, %p533
    %p535 = scmp.ne.s32.totalorder %s527, %s530
    %p536 = scmp.eq.s32.totalorder %s29, 0
    %p537 = por %p535, %p536
    %p538 = scmp.ne.s32.totalorder %s527, %s530
    %p539 = scmp.eq.s32.totalorder %s34, 1
    %p540 = por %p538, %p539
    %p541 = scmp.ne.s32.totalorder %s530, %s531
    %p542 = scmp.eq.s32.totalorder %s34, 0
    %p543 = por %p541, %p542
    %p544 = scmp.ne.s32.totalorder %s530, %s531
    %p545 = scmp.eq.s32.totalorder %s35, 1
    %p546 = por %p544, %p545
    %p548 = scmp.ne.s32.totalorder %s531, %s547
    %p549 = scmp.eq.s32.totalorder %s35, 0
    %p550 = por %p548, %p549
    %p551 = scmp.le.s32.totalorder 1, %s29
    %p552 = scmp.lt.s32.totalorder %s29, 3
    %p553 = pnand %p551, %p552
    %p554 = pneg %p553
    // Predicated region
    $region9: #{tpu_custom_call.1} parent=5 // pred_check
      _
    $region10: #{tpu_custom_call.1} parent=5 // pred_check_branch
      %556 = sbr.rel (%p553) target = $region12
    $region11: #{tpu_custom_call.1} parent=5 // pred_region
      %s557 = ssub.s32 %s29, 1
      // Predicated region
      $region13: #{tpu_custom_call.1} parent=11 // pred_check
        %p558 = pneg %p76
      $region14: #{tpu_custom_call.1} parent=11 // pred_check_branch
        %560 = sbr.rel (%p558) target = $region16
      $region15: #{tpu_custom_call.1} parent=11 // pred_region
        _
      $region16: #{tpu_custom_call.1} parent=11 // pred_fallthru
        _
      // Predicated region
      $region17: #{tpu_custom_call.1} parent=11 // pred_check
        %p561 = pneg %p97
      $region18: #{tpu_custom_call.1} parent=11 // pred_check_branch
        %563 = sbr.rel (%p561) target = $region20
      $region19: #{tpu_custom_call.1} parent=11 // pred_region
        _
      $region20: #{tpu_custom_call.1} parent=11 // pred_fallthru
        _
      // Predicated region
      $region21: #{tpu_custom_call.1} parent=11 // pred_check
        %p564 = pneg %p118
      $region22: #{tpu_custom_call.1} parent=11 // pred_check_branch
        %566 = sbr.rel (%p564) target = $region24
      $region23: #{tpu_custom_call.1} parent=11 // pred_region
        _
      $region24: #{tpu_custom_call.1} parent=11 // pred_fallthru
        _
      // Predicated region
      $region25: #{tpu_custom_call.1} parent=11 // pred_check
        %p567 = pneg %p139
      $region26: #{tpu_custom_call.1} parent=11 // pred_check_branch
        %569 = sbr.rel (%p567) target = $region28
      $region27: #{tpu_custom_call.1} parent=11 // pred_region
        _
      $region28: #{tpu_custom_call.1} parent=11 // pred_fallthru
        _
      // Predicated region
      $region29: #{tpu_custom_call.1} parent=11 // pred_check
        %p570 = pneg %p160
      $region30: #{tpu_custom_call.1} parent=11 // pred_check_branch
        %572 = sbr.rel (%p570) target = $region32
      $region31: #{tpu_custom_call.1} parent=11 // pred_region
        _
      $region32: #{tpu_custom_call.1} parent=11 // pred_fallthru
        _
      // Predicated region
      $region33: #{tpu_custom_call.1} parent=11 // pred_check
        %p573 = pneg %p181
      $region34: #{tpu_custom_call.1} parent=11 // pred_check_branch
        %575 = sbr.rel (%p573) target = $region36
      $region35: #{tpu_custom_call.1} parent=11 // pred_region
        _
      $region36: #{tpu_custom_call.1} parent=11 // pred_fallthru
        _
      // Predicated region
      $region37: #{tpu_custom_call.1} parent=11 // pred_check
        %p576 = pneg %p202
      $region38: #{tpu_custom_call.1} parent=11 // pred_check_branch
        %578 = sbr.rel (%p576) target = $region40
      $region39: #{tpu_custom_call.1} parent=11 // pred_region
        _
      $region40: #{tpu_custom_call.1} parent=11 // pred_fallthru
        _
      // Predicated region
      $region41: #{tpu_custom_call.1} parent=11 // pred_check
        %p579 = pneg %p223
      $region42: #{tpu_custom_call.1} parent=11 // pred_check_branch
        %581 = sbr.rel (%p579) target = $region44
      $region43: #{tpu_custom_call.1} parent=11 // pred_region
        _
      $region44: #{tpu_custom_call.1} parent=11 // pred_fallthru
        _
      // Predicated region
      $region45: #{tpu_custom_call.1} parent=11 // pred_check
        %p582 = pneg %p244
      $region46: #{tpu_custom_call.1} parent=11 // pred_check_branch
        %584 = sbr.rel (%p582) target = $region48
      $region47: #{tpu_custom_call.1} parent=11 // pred_region
        _
      $region48: #{tpu_custom_call.1} parent=11 // pred_fallthru
        _
      // Predicated region
      $region49: #{tpu_custom_call.1} parent=11 // pred_check
        %p585 = pneg %p265
      $region50: #{tpu_custom_call.1} parent=11 // pred_check_branch
        %587 = sbr.rel (%p585) target = $region52
      $region51: #{tpu_custom_call.1} parent=11 // pred_region
        _
      $region52: #{tpu_custom_call.1} parent=11 // pred_fallthru
        _
      // Predicated region
      $region53: #{tpu_custom_call.1} parent=11 // pred_check
        %p588 = pneg %p286
      $region54: #{tpu_custom_call.1} parent=11 // pred_check_branch
        %590 = sbr.rel (%p588) target = $region56
      $region55: #{tpu_custom_call.1} parent=11 // pred_region
        _
      $region56: #{tpu_custom_call.1} parent=11 // pred_fallthru
        _
      // Predicated region
      $region57: #{tpu_custom_call.1} parent=11 // pred_check
        %p591 = pneg %p307
      $region58: #{tpu_custom_call.1} parent=11 // pred_check_branch
        %593 = sbr.rel (%p591) target = $region60
      $region59: #{tpu_custom_call.1} parent=11 // pred_region
        _
      $region60: #{tpu_custom_call.1} parent=11 // pred_fallthru
        _
      // Predicated region
      $region61: #{tpu_custom_call.1} parent=11 // pred_check
        %p594 = pneg %p328
      $region62: #{tpu_custom_call.1} parent=11 // pred_check_branch
        %596 = sbr.rel (%p594) target = $region64
      $region63: #{tpu_custom_call.1} parent=11 // pred_region
        _
      $region64: #{tpu_custom_call.1} parent=11 // pred_fallthru
        _
      // Predicated region
      $region65: #{tpu_custom_call.1} parent=11 // pred_check
        %p597 = pneg %p349
      $region66: #{tpu_custom_call.1} parent=11 // pred_check_branch
        %599 = sbr.rel (%p597) target = $region68
      $region67: #{tpu_custom_call.1} parent=11 // pred_region
        _
      $region68: #{tpu_custom_call.1} parent=11 // pred_fallthru
        _
      // Predicated region
      $region69: #{tpu_custom_call.1} parent=11 // pred_check
        %p600 = pneg %p370
      $region70: #{tpu_custom_call.1} parent=11 // pred_check_branch
        %602 = sbr.rel (%p600) target = $region72
      $region71: #{tpu_custom_call.1} parent=11 // pred_region
        _
      $region72: #{tpu_custom_call.1} parent=11 // pred_fallthru
        _
      // Predicated region
      $region73: #{tpu_custom_call.1} parent=11 // pred_check
        %p603 = pneg %p391
      $region74: #{tpu_custom_call.1} parent=11 // pred_check_branch
        %605 = sbr.rel (%p603) target = $region76
      $region75: #{tpu_custom_call.1} parent=11 // pred_region
        _
      $region76: #{tpu_custom_call.1} parent=11 // pred_fallthru
        _
      // Predicated region
      $region77: #{tpu_custom_call.1} parent=11 // pred_check
        %p606 = pneg %p412
      $region78: #{tpu_custom_call.1} parent=11 // pred_check_branch
        %608 = sbr.rel (%p606) target = $region80
      $region79: #{tpu_custom_call.1} parent=11 // pred_region
        _
      $region80: #{tpu_custom_call.1} parent=11 // pred_fallthru
        _
      // Predicated region
      $region81: #{tpu_custom_call.1} parent=11 // pred_check
        %p609 = pneg %p433
      $region82: #{tpu_custom_call.1} parent=11 // pred_check_branch
        %611 = sbr.rel (%p609) target = $region84
      $region83: #{tpu_custom_call.1} parent=11 // pred_region
        _
      $region84: #{tpu_custom_call.1} parent=11 // pred_fallthru
        _
      // Predicated region
      $region85: #{tpu_custom_call.1} parent=11 // pred_check
        %p612 = pneg %p454
      $region86: #{tpu_custom_call.1} parent=11 // pred_check_branch
        %614 = sbr.rel (%p612) target = $region88
      $region87: #{tpu_custom_call.1} parent=11 // pred_region
        _
      $region88: #{tpu_custom_call.1} parent=11 // pred_fallthru
        _
      // Predicated region
      $region89: #{tpu_custom_call.1} parent=11 // pred_check
        %p615 = pneg %p475
      $region90: #{tpu_custom_call.1} parent=11 // pred_check_branch
        %617 = sbr.rel (%p615) target = $region92
      $region91: #{tpu_custom_call.1} parent=11 // pred_region
        _
      $region92: #{tpu_custom_call.1} parent=11 // pred_fallthru
        _
      // Predicated region
      $region93: #{tpu_custom_call.1} parent=11 // pred_check
        %p618 = pneg %p496
      $region94: #{tpu_custom_call.1} parent=11 // pred_check_branch
        %620 = sbr.rel (%p618) target = $region96
      $region95: #{tpu_custom_call.1} parent=11 // pred_region
        _
      $region96: #{tpu_custom_call.1} parent=11 // pred_fallthru
        _
      // Predicated region
      $region97: #{tpu_custom_call.1} parent=11 // pred_check
        %p621 = pneg %p517
      $region98: #{tpu_custom_call.1} parent=11 // pred_check_branch
        %623 = sbr.rel (%p621) target = $region100
      $region99: #{tpu_custom_call.1} parent=11 // pred_region
        _
      $region100: #{tpu_custom_call.1} parent=11 // pred_fallthru
        _
    $region12: #{tpu_custom_call.1} parent=5 // pred_fallthru
      _
    %p624 = scmp.lt.s32.totalorder %s29, 2
    // Predicated region
    $region101: #{tpu_custom_call.1} parent=5 // pred_check
      %p625 = pneg %p624
    $region102: #{tpu_custom_call.1} parent=5 // pred_check_branch
      %627 = sbr.rel (%p625) target = $region104
    $region103: #{tpu_custom_call.1} parent=5 // pred_region
      // Predicated region
      $region105: #{tpu_custom_call.1} parent=103 // pred_check
        %p628 = pneg %p49
      $region106: #{tpu_custom_call.1} parent=103 // pred_check_branch
        %630 = sbr.rel (%p628) target = $region108
      $region107: #{tpu_custom_call.1} parent=103 // pred_region
        %p631 = scmp.lt.s32.totalorder %s29, 1
        %s632 = scalar_select %p631, %s29, 1
        %s633 = smul.addr %s632, 8
        %s634 = smul.addr %s633, 8
        %s635 = scalar_lea.vmem %s0, %s634
      $region108: #{tpu_custom_call.1} parent=103 // pred_fallthru
        _
    $region104: #{tpu_custom_call.1} parent=5 // pred_fallthru
      _
    %p636 = scmp.le.s32.totalorder 1, %s29
    %p637 = scmp.lt.s32.totalorder %s29, 3
    %p638 = pnand %p636, %p637
    %p639 = pneg %p638
    // Predicated region
    $region109: #{tpu_custom_call.1} parent=5 // pred_check
      _
    $region110: #{tpu_custom_call.1} parent=5 // pred_check_branch
      %641 = sbr.rel (%p638) target = $region112
    $region111: #{tpu_custom_call.1} parent=5 // pred_region
      %s642 = ssub.s32 %s29, 1
      %p643 = scmp.lt.s32.totalorder %s34, 1
      %s644 = scalar_select %p643, %s34, 1
      %s645 = smul.addr %s644, 8
      %s646 = smul.addr %s645, 8
      %s647 = scalar_lea.vmem %s0, %s646
      %p648 = pneg %p55
      %p649 = pneg %p52
      %p650 = pneg %p76
      %p651 = pneg %p73
      %p652 = pneg %p97
      %p653 = pneg %p94
      %p654 = pneg %p118
      %p655 = pneg %p115
      %p656 = pneg %p139
      %p657 = pneg %p136
      %p658 = pneg %p160
      %p659 = pneg %p157
      %p660 = pneg %p181
      %p661 = pneg %p178
      %p662 = pneg %p202
      %p663 = pneg %p199
      %p664 = pneg %p223
      %p665 = pneg %p220
      %p666 = pneg %p244
      %p667 = pneg %p241
      %p668 = pneg %p265
      %p669 = pneg %p262
      %p670 = pneg %p286
      %p671 = pneg %p283
      %p672 = pneg %p307
      %p673 = pneg %p304
      %p674 = pneg %p328
      %p675 = pneg %p325
      %p676 = pneg %p349
      %p677 = pneg %p346
      %p678 = pneg %p370
      %p679 = pneg %p367
      %p680 = pneg %p391
      %p681 = pneg %p388
      %p682 = pneg %p412
      %p683 = pneg %p409
      %p684 = pneg %p433
      %p685 = pneg %p430
      %p686 = pneg %p454
      %p687 = pneg %p451
      %p688 = pneg %p475
      %p689 = pneg %p472
      %p690 = pneg %p496
      %p691 = pneg %p493
      %p692 = pneg %p517
      %p693 = pneg %p514
      %p694 = pneg %p543
      %p695 = pneg %p540
      %p696 = scmp.lt.s32.totalorder %s34, 1
      %s697 = scalar_select %p696, %s34, 1
      %s698 = smul.addr %s697, 8
      %s699 = smul.addr %s698, 8
      %s700 = scalar_lea.vmem %s23, %s699
      %p701 = scmp.lt.s32.totalorder %s34, 1
      %s702 = scalar_select %p701, %s34, 1
      %s703 = smul.addr %s702, 8
      %s704 = smul.addr %s703, 8
      %s705 = scalar_lea.vmem %s0, %s704
      %p706 = scmp.lt.s32.totalorder %s34, 1
      %s707 = scalar_select %p706, %s34, 1
      %s708 = smul.addr %s707, 8
      %s709 = smul.addr %s708, 8
      %s710 = scalar_lea.vmem %s23, %s709
      %v712 = vlaneseq
      %v713 = vshrl.u32 %v712, 7
      %v714 = vadd.s32 %v713, 8
      %v715 = vadd.s32 %v713, 16
      %v716 = vadd.s32 %v713, 24
      %v717 = vadd.s32 %v713, 32
      %v718 = vadd.s32 %v713, 40
      %v719 = vadd.s32 %v713, 48
      %v720 = vadd.s32 %v713, 56
      %vm721 = vcmp.lt.s32.totalorder %v713, 0
      %v722 = vsub.s32 0, %v713
      %v723 = vsel %vm721, %v722, %v713
      %v724 = vshrl.u32 %v723, 3
      %v725 = vand.u32 %v723, 7
      %v726 = vsub.s32 0, %v725
      %v727 = vsel %vm721, %v726, %v725
      %vm728 = vcmp.lt.s32.totalorder %v714, 0
      %v729 = vsub.s32 0, %v714
      %v730 = vsel %vm728, %v729, %v714
      %v731 = vshrl.u32 %v730, 3
      %v732 = vand.u32 %v730, 7
      %v733 = vsub.s32 0, %v732
      %v734 = vsel %vm728, %v733, %v732
      %vm735 = vcmp.lt.s32.totalorder %v715, 0
      %v736 = vsub.s32 0, %v715
      %v737 = vsel %vm735, %v736, %v715
      %v738 = vshrl.u32 %v737, 3
      %v739 = vand.u32 %v737, 7
      %v740 = vsub.s32 0, %v739
      %v741 = vsel %vm735, %v740, %v739
      %vm742 = vcmp.lt.s32.totalorder %v716, 0
      %v743 = vsub.s32 0, %v716
      %v744 = vsel %vm742, %v743, %v716
      %v745 = vshrl.u32 %v744, 3
      %v746 = vand.u32 %v744, 7
      %v747 = vsub.s32 0, %v746
      %v748 = vsel %vm742, %v747, %v746
      %vm749 = vcmp.lt.s32.totalorder %v717, 0
      %v750 = vsub.s32 0, %v717
      %v751 = vsel %vm749, %v750, %v717
      %v752 = vshrl.u32 %v751, 3
      %v753 = vand.u32 %v751, 7
      %v754 = vsub.s32 0, %v753
      %v755 = vsel %vm749, %v754, %v753
      %vm756 = vcmp.lt.s32.totalorder %v718, 0
      %v757 = vsub.s32 0, %v718
      %v758 = vsel %vm756, %v757, %v718
      %v759 = vshrl.u32 %v758, 3
      %v760 = vand.u32 %v758, 7
      %v761 = vsub.s32 0, %v760
      %v762 = vsel %vm756, %v761, %v760
      %vm763 = vcmp.lt.s32.totalorder %v719, 0
      %v764 = vsub.s32 0, %v719
      %v765 = vsel %vm763, %v764, %v719
      %v766 = vshrl.u32 %v765, 3
      %v767 = vand.u32 %v765, 7
      %v768 = vsub.s32 0, %v767
      %v769 = vsel %vm763, %v768, %v767
      %vm770 = vcmp.lt.s32.totalorder %v720, 0
      %v771 = vsub.s32 0, %v720
      %v772 = vsel %vm770, %v771, %v720
      %v773 = vshrl.u32 %v772, 3
      %v774 = vand.u32 %v772, 7
      %v775 = vsub.s32 0, %v774
      %v776 = vsel %vm770, %v775, %v774
      %vm777 = vcmp.ne.s32.totalorder %v727, 0
      %vm778 = vcmp.ne.s32.totalorder %v734, 0
      %vm779 = vcmp.ne.s32.totalorder %v741, 0
      %vm780 = vcmp.ne.s32.totalorder %v748, 0
      %vm781 = vcmp.ne.s32.totalorder %v755, 0
      %vm782 = vcmp.ne.s32.totalorder %v762, 0
      %vm783 = vcmp.ne.s32.totalorder %v769, 0
      %vm784 = vcmp.ne.s32.totalorder %v776, 0
      %vm785 = vcmp.lt.s32.totalorder %v727, 0
      %vm786 = vcmp.lt.s32.totalorder %v734, 0
      %vm787 = vcmp.lt.s32.totalorder %v741, 0
      %vm788 = vcmp.lt.s32.totalorder %v748, 0
      %vm789 = vcmp.lt.s32.totalorder %v755, 0
      %vm790 = vcmp.lt.s32.totalorder %v762, 0
      %vm791 = vcmp.lt.s32.totalorder %v769, 0
      %vm792 = vcmp.lt.s32.totalorder %v776, 0
      %vm793 = vmand %vm785, %vm777
      %vm794 = vmand %vm786, %vm778
      %vm795 = vmand %vm787, %vm779
      %vm796 = vmand %vm788, %vm780
      %vm797 = vmand %vm789, %vm781
      %vm798 = vmand %vm790, %vm782
      %vm799 = vmand %vm791, %vm783
      %vm800 = vmand %vm792, %vm784
      %v801 = vadd.s32 %v727, 8
      %v802 = vadd.s32 %v734, 8
      %v803 = vadd.s32 %v741, 8
      %v804 = vadd.s32 %v748, 8
      %v805 = vadd.s32 %v755, 8
      %v806 = vadd.s32 %v762, 8
      %v807 = vadd.s32 %v769, 8
      %v808 = vadd.s32 %v776, 8
      %v809 = vsel %vm793, %v801, %v727
      %v810 = vsel %vm794, %v802, %v734
      %v811 = vsel %vm795, %v803, %v741
      %v812 = vsel %vm796, %v804, %v748
      %v813 = vsel %vm797, %v805, %v755
      %v814 = vsel %vm798, %v806, %v762
      %v815 = vsel %vm799, %v807, %v769
      %v816 = vsel %vm800, %v808, %v776
      %vm817 = vcmp.gt.s32.totalorder %v809, 0
      %vm818 = vcmp.gt.s32.totalorder %v810, 0
      %vm819 = vcmp.gt.s32.totalorder %v811, 0
      %vm820 = vcmp.gt.s32.totalorder %v812, 0
      %vm821 = vcmp.gt.s32.totalorder %v813, 0
      %vm822 = vcmp.gt.s32.totalorder %v814, 0
      %vm823 = vcmp.gt.s32.totalorder %v815, 0
      %vm824 = vcmp.gt.s32.totalorder %v816, 0
      %vm825 = vcmp.lt.s32.totalorder %v809, 7
      %vm826 = vcmp.lt.s32.totalorder %v810, 7
      %vm827 = vcmp.lt.s32.totalorder %v811, 7
      %vm828 = vcmp.lt.s32.totalorder %v812, 7
      %vm829 = vcmp.lt.s32.totalorder %v813, 7
      %vm830 = vcmp.lt.s32.totalorder %v814, 7
      %vm831 = vcmp.lt.s32.totalorder %v815, 7
      %vm832 = vcmp.lt.s32.totalorder %v816, 7
      %v833 = vld [vmem:[%s705] sm:$0xff]
      %v834 = vld [vmem:[%s705 + $0x8] sm:$0xff]
      %v835 = vld [vmem:[%s705 + $0x10] sm:$0xff]
      %v836 = vld [vmem:[%s705 + $0x18] sm:$0xff]
      %v837 = vld [vmem:[%s705 + $0x20] sm:$0xff]
      %v838 = vld [vmem:[%s705 + $0x28] sm:$0xff]
      %v839 = vld [vmem:[%s705 + $0x30] sm:$0xff]
      %v840 = vld [vmem:[%s705 + $0x38] sm:$0xff]
      %vm841 = vcmask 261120
      %842 = vst.msk [vmem:[#allocation2] sm:$0xff] %vm841, 0.0
      %vm843 = vcmask 253952
      %844 = vst.msk [vmem:[#allocation2 + $0x8] sm:$0x1] %vm843, 0.0
      %845 = vst.msk [vmem:[#allocation2 + $0x49] sm:$0xff] %vm841, 0.0
      %846 = vst.msk [vmem:[#allocation2 + $0x51] sm:$0x1] %vm843, 0.0
      %847 = vst.msk [vmem:[#allocation2 + $0x9] sm:$0xff] %vm841, %v833
      %848 = vst.msk [vmem:[#allocation2 + $0x11] sm:$0xff] %vm841, %v834
      %849 = vst.msk [vmem:[#allocation2 + $0x19] sm:$0xff] %vm841, %v835
      %850 = vst.msk [vmem:[#allocation2 + $0x21] sm:$0xff] %vm841, %v836
      %851 = vst.msk [vmem:[#allocation2 + $0x29] sm:$0xff] %vm841, %v837
      %852 = vst.msk [vmem:[#allocation2 + $0x31] sm:$0xff] %vm841, %v838
      %853 = vst.msk [vmem:[#allocation2 + $0x39] sm:$0xff] %vm841, %v839
      %854 = vst.msk [vmem:[#allocation2 + $0x41] sm:$0xff] %vm841, %v840
      %v855 = vld [vmem:[%s2] sm:$0xff]
      %v856 = vld [vmem:[%s2 + $0x8] sm:$0x1]
      %v857 = vperm.slane %v855, 4
      %v858 = vmul.f32 %v833, %v857
      %v859 = vmul.f32 %v834, %v857
      %v860 = vmul.f32 %v835, %v857
      %v861 = vmul.f32 %v836, %v857
      %v862 = vmul.f32 %v837, %v857
      %v863 = vmul.f32 %v838, %v857
      %v864 = vmul.f32 %v839, %v857
      %v865 = vmul.f32 %v840, %v857
      %v866 = vld [vmem:[%s3] sm:$0x1]
      %v868 = vperm.slane %v866, 0
      %v870 = vadd.f32 %v858, %v868
      %v871 = vadd.f32 %v859, %v868
      %v872 = vadd.f32 %v860, %v868
      %v873 = vadd.f32 %v861, %v868
      %v874 = vadd.f32 %v862, %v868
      %v875 = vadd.f32 %v863, %v868
      %v876 = vadd.f32 %v864, %v868
      %v877 = vadd.f32 %v865, %v868
      %v878 = vld [vmem:[#allocation2] sm:$0xff]
      %v879 = vld [vmem:[#allocation2 + $0x8] sm:$0xff]
      %v880 = vld [vmem:[#allocation2 + $0x10] sm:$0xff]
      %v881 = vld [vmem:[#allocation2 + $0x18] sm:$0xff]
      %v882 = vld [vmem:[#allocation2 + $0x20] sm:$0xff]
      %v883 = vld [vmem:[#allocation2 + $0x28] sm:$0xff]
      %v884 = vld [vmem:[#allocation2 + $0x30] sm:$0xff]
      %v885 = vld [vmem:[#allocation2 + $0x38] sm:$0xff]
      %v886 = vperm.slane %v855, 0
      %v887 = vmul.f32 %v878, %v886
      %v888 = vmul.f32 %v879, %v886
      %v889 = vmul.f32 %v880, %v886
      %v890 = vmul.f32 %v881, %v886
      %v891 = vmul.f32 %v882, %v886
      %v892 = vmul.f32 %v883, %v886
      %v893 = vmul.f32 %v884, %v886
      %v894 = vmul.f32 %v885, %v886
      %v895 = vsel %vm817, 1, 0
      %v896 = vsel %vm818, 1, 0
      %v897 = vsel %vm819, 1, 0
      %v898 = vsel %vm820, 1, 0
      %v899 = vsel %vm821, 1, 0
      %v900 = vsel %vm822, 1, 0
      %v901 = vsel %vm823, 1, 0
      %v902 = vsel %vm824, 1, 0
      %vm903 = vcmp.eq.s32.totalorder %v895, 1
      %vm904 = vcmp.eq.s32.totalorder %v896, 1
      %vm905 = vcmp.eq.s32.totalorder %v897, 1
      %vm906 = vcmp.eq.s32.totalorder %v898, 1
      %vm907 = vcmp.eq.s32.totalorder %v899, 1
      %vm908 = vcmp.eq.s32.totalorder %v900, 1
      %vm909 = vcmp.eq.s32.totalorder %v901, 1
      %vm910 = vcmp.eq.s32.totalorder %v902, 1
      %v911 = vsel %vm903, %v887, 0.0
      %v912 = vsel %vm904, %v888, 0.0
      %v913 = vsel %vm905, %v889, 0.0
      %v914 = vsel %vm906, %v890, 0.0
      %v915 = vsel %vm907, %v891, 0.0
      %v916 = vsel %vm908, %v892, 0.0
      %v917 = vsel %vm909, %v893, 0.0
      %v918 = vsel %vm910, %v894, 0.0
      %v919 = vadd.f32 %v870, %v911
      %v920 = vadd.f32 %v871, %v912
      %v921 = vadd.f32 %v872, %v913
      %v922 = vadd.f32 %v873, %v914
      %v923 = vadd.f32 %v874, %v915
      %v924 = vadd.f32 %v875, %v916
      %v925 = vadd.f32 %v876, %v917
      %v926 = vadd.f32 %v877, %v918
      %v927 = vld [vmem:[#allocation2 + $0x1] sm:$0xff]
      %v928 = vld [vmem:[#allocation2 + $0x9] sm:$0xff]
      %v929 = vld [vmem:[#allocation2 + $0x11] sm:$0xff]
      %v930 = vld [vmem:[#allocation2 + $0x19] sm:$0xff]
      %v931 = vld [vmem:[#allocation2 + $0x21] sm:$0xff]
      %v932 = vld [vmem:[#allocation2 + $0x29] sm:$0xff]
      %v933 = vld [vmem:[#allocation2 + $0x31] sm:$0xff]
      %v934 = vld [vmem:[#allocation2 + $0x39] sm:$0xff]
      %v935 = vperm.slane %v855, 1
      %v936 = vmul.f32 %v927, %v935
      %v937 = vmul.f32 %v928, %v935
      %v938 = vmul.f32 %v929, %v935
      %v939 = vmul.f32 %v930, %v935
      %v940 = vmul.f32 %v931, %v935
      %v941 = vmul.f32 %v932, %v935
      %v942 = vmul.f32 %v933, %v935
      %v943 = vmul.f32 %v934, %v935
      %v944 = vadd.f32 %v919, %v936
      %v945 = vadd.f32 %v920, %v937
      %v946 = vadd.f32 %v921, %v938
      %v947 = vadd.f32 %v922, %v939
      %v948 = vadd.f32 %v923, %v940
      %v949 = vadd.f32 %v924, %v941
      %v950 = vadd.f32 %v925, %v942
      %v951 = vadd.f32 %v926, %v943
      %v952 = vld [vmem:[#allocation2 + $0x2] sm:$0xff]
      %v953 = vld [vmem:[#allocation2 + $0xa] sm:$0xff]
      %v954 = vld [vmem:[#allocation2 + $0x12] sm:$0xff]
      %v955 = vld [vmem:[#allocation2 + $0x1a] sm:$0xff]
      %v956 = vld [vmem:[#allocation2 + $0x22] sm:$0xff]
      %v957 = vld [vmem:[#allocation2 + $0x2a] sm:$0xff]
      %v958 = vld [vmem:[#allocation2 + $0x32] sm:$0xff]
      %v959 = vld [vmem:[#allocation2 + $0x3a] sm:$0xff]
      %v960 = vperm.slane %v855, 2
      %v961 = vmul.f32 %v952, %v960
      %v962 = vmul.f32 %v953, %v960
      %v963 = vmul.f32 %v954, %v960
      %v964 = vmul.f32 %v955, %v960
      %v965 = vmul.f32 %v956, %v960
      %v966 = vmul.f32 %v957, %v960
      %v967 = vmul.f32 %v958, %v960
      %v968 = vmul.f32 %v959, %v960
      %v969 = vsel %vm825, 1, 0
      %v970 = vsel %vm826, 1, 0
      %v971 = vsel %vm827, 1, 0
      %v972 = vsel %vm828, 1, 0
      %v973 = vsel %vm829, 1, 0
      %v974 = vsel %vm830, 1, 0
      %v975 = vsel %vm831, 1, 0
      %v976 = vsel %vm832, 1, 0
      %vm977 = vcmp.eq.s32.totalorder %v969, 1
      %vm978 = vcmp.eq.s32.totalorder %v970, 1
      %vm979 = vcmp.eq.s32.totalorder %v971, 1
      %vm980 = vcmp.eq.s32.totalorder %v972, 1
      %vm981 = vcmp.eq.s32.totalorder %v973, 1
      %vm982 = vcmp.eq.s32.totalorder %v974, 1
      %vm983 = vcmp.eq.s32.totalorder %v975, 1
      %vm984 = vcmp.eq.s32.totalorder %v976, 1
      %v985 = vsel %vm977, %v961, 0.0
      %v986 = vsel %vm978, %v962, 0.0
      %v987 = vsel %vm979, %v963, 0.0
      %v988 = vsel %vm980, %v964, 0.0
      %v989 = vsel %vm981, %v965, 0.0
      %v990 = vsel %vm982, %v966, 0.0
      %v991 = vsel %vm983, %v967, 0.0
      %v992 = vsel %vm984, %v968, 0.0
      %v993 = vadd.f32 %v944, %v985
      %v994 = vadd.f32 %v945, %v986
      %v995 = vadd.f32 %v946, %v987
      %v996 = vadd.f32 %v947, %v988
      %v997 = vadd.f32 %v948, %v989
      %v998 = vadd.f32 %v949, %v990
      %v999 = vadd.f32 %v950, %v991
      %v1000 = vadd.f32 %v951, %v992
      %v1001 = vld [vmem:[#allocation2 + $0x40] sm:$0xff]
      %v1002 = vperm.slane %v855, 3
      %v1003 = vmul.f32 %v879, %v1002
      %v1004 = vmul.f32 %v880, %v1002
      %v1005 = vmul.f32 %v881, %v1002
      %v1006 = vmul.f32 %v882, %v1002
      %v1007 = vmul.f32 %v883, %v1002
      %v1008 = vmul.f32 %v884, %v1002
      %v1009 = vmul.f32 %v885, %v1002
      %v1010 = vmul.f32 %v1001, %v1002
      %v1011 = vsel %vm903, %v1003, 0.0
      %v1012 = vsel %vm904, %v1004, 0.0
      %v1013 = vsel %vm905, %v1005, 0.0
      %v1014 = vsel %vm906, %v1006, 0.0
      %v1015 = vsel %vm907, %v1007, 0.0
      %v1016 = vsel %vm908, %v1008, 0.0
      %v1017 = vsel %vm909, %v1009, 0.0
      %v1018 = vsel %vm910, %v1010, 0.0
      %v1019 = vadd.f32 %v993, %v1011
      %v1020 = vadd.f32 %v994, %v1012
      %v1021 = vadd.f32 %v995, %v1013
      %v1022 = vadd.f32 %v996, %v1014
      %v1023 = vadd.f32 %v997, %v1015
      %v1024 = vadd.f32 %v998, %v1016
      %v1025 = vadd.f32 %v999, %v1017
      %v1026 = vadd.f32 %v1000, %v1018
      %v1027 = vld [vmem:[#allocation2 + $0x42] sm:$0xff]
      %v1028 = vperm.slane %v855, 5
      %v1029 = vmul.f32 %v953, %v1028
      %v1030 = vmul.f32 %v954, %v1028
      %v1031 = vmul.f32 %v955, %v1028
      %v1032 = vmul.f32 %v956, %v1028
      %v1033 = vmul.f32 %v957, %v1028
      %v1034 = vmul.f32 %v958, %v1028
      %v1035 = vmul.f32 %v959, %v1028
      %v1036 = vmul.f32 %v1027, %v1028
      %v1037 = vsel %vm977, %v1029, 0.0
      %v1038 = vsel %vm978, %v1030, 0.0
      %v1039 = vsel %vm979, %v1031, 0.0
      %v1040 = vsel %vm980, %v1032, 0.0
      %v1041 = vsel %vm981, %v1033, 0.0
      %v1042 = vsel %vm982, %v1034, 0.0
      %v1043 = vsel %vm983, %v1035, 0.0
      %v1044 = vsel %vm984, %v1036, 0.0
      %v1045 = vadd.f32 %v1019, %v1037
      %v1046 = vadd.f32 %v1020, %v1038
      %v1047 = vadd.f32 %v1021, %v1039
      %v1048 = vadd.f32 %v1022, %v1040
      %v1049 = vadd.f32 %v1023, %v1041
      %v1050 = vadd.f32 %v1024, %v1042
      %v1051 = vadd.f32 %v1025, %v1043
      %v1052 = vadd.f32 %v1026, %v1044
      %v1053 = vld [vmem:[#allocation2 + $0x48] sm:$0xff]
      %v1054 = vperm.slane %v855, 6
      %v1055 = vmul.f32 %v880, %v1054
      %v1056 = vmul.f32 %v881, %v1054
      %v1057 = vmul.f32 %v882, %v1054
      %v1058 = vmul.f32 %v883, %v1054
      %v1059 = vmul.f32 %v884, %v1054
      %v1060 = vmul.f32 %v885, %v1054
      %v1061 = vmul.f32 %v1001, %v1054
      %v1062 = vmul.f32 %v1053, %v1054
      %v1063 = vsel %vm903, %v1055, 0.0
      %v1064 = vsel %vm904, %v1056, 0.0
      %v1065 = vsel %vm905, %v1057, 0.0
      %v1066 = vsel %vm906, %v1058, 0.0
      %v1067 = vsel %vm907, %v1059, 0.0
      %v1068 = vsel %vm908, %v1060, 0.0
      %v1069 = vsel %vm909, %v1061, 0.0
      %v1070 = vsel %vm910, %v1062, 0.0
      %v1071 = vadd.f32 %v1045, %v1063
      %v1072 = vadd.f32 %v1046, %v1064
      %v1073 = vadd.f32 %v1047, %v1065
      %v1074 = vadd.f32 %v1048, %v1066
      %v1075 = vadd.f32 %v1049, %v1067
      %v1076 = vadd.f32 %v1050, %v1068
      %v1077 = vadd.f32 %v1051, %v1069
      %v1078 = vadd.f32 %v1052, %v1070
      %v1079 = vld [vmem:[#allocation2 + $0x41] sm:$0xff]
      %v1080 = vld [vmem:[#allocation2 + $0x49] sm:$0xff]
      %v1081 = vperm.slane %v855, 7
      %v1082 = vmul.f32 %v929, %v1081
      %v1083 = vmul.f32 %v930, %v1081
      %v1084 = vmul.f32 %v931, %v1081
      %v1085 = vmul.f32 %v932, %v1081
      %v1086 = vmul.f32 %v933, %v1081
      %v1087 = vmul.f32 %v934, %v1081
      %v1088 = vmul.f32 %v1079, %v1081
      %v1089 = vmul.f32 %v1080, %v1081
      %v1090 = vadd.f32 %v1071, %v1082
      %v1091 = vadd.f32 %v1072, %v1083
      %v1092 = vadd.f32 %v1073, %v1084
      %v1093 = vadd.f32 %v1074, %v1085
      %v1094 = vadd.f32 %v1075, %v1086
      %v1095 = vadd.f32 %v1076, %v1087
      %v1096 = vadd.f32 %v1077, %v1088
      %v1097 = vadd.f32 %v1078, %v1089
      %v1098 = vld [vmem:[#allocation2 + $0x4a] sm:$0xff]
      %v1099 = vperm.slane %v856, 0
      %v1100 = vmul.f32 %v954, %v1099
      %v1101 = vmul.f32 %v955, %v1099
      %v1102 = vmul.f32 %v956, %v1099
      %v1103 = vmul.f32 %v957, %v1099
      %v1104 = vmul.f32 %v958, %v1099
      %v1105 = vmul.f32 %v959, %v1099
      %v1106 = vmul.f32 %v1027, %v1099
      %v1107 = vmul.f32 %v1098, %v1099
      %v1108 = vsel %vm977, %v1100, 0.0
      %v1109 = vsel %vm978, %v1101, 0.0
      %v1110 = vsel %vm979, %v1102, 0.0
      %v1111 = vsel %vm980, %v1103, 0.0
      %v1112 = vsel %vm981, %v1104, 0.0
      %v1113 = vsel %vm982, %v1105, 0.0
      %v1114 = vsel %vm983, %v1106, 0.0
      %v1115 = vsel %vm984, %v1107, 0.0
      %v1116 = vadd.f32 %v1090, %v1108
      %v1117 = vadd.f32 %v1091, %v1109
      %v1118 = vadd.f32 %v1092, %v1110
      %v1119 = vadd.f32 %v1093, %v1111
      %v1120 = vadd.f32 %v1094, %v1112
      %v1121 = vadd.f32 %v1095, %v1113
      %v1122 = vadd.f32 %v1096, %v1114
      %v1123 = vadd.f32 %v1097, %v1115
      %v1124 = vadd.f32 %v833, %v1116
      %v1125 = vadd.f32 %v834, %v1117
      %v1126 = vadd.f32 %v835, %v1118
      %v1127 = vadd.f32 %v836, %v1119
      %v1128 = vadd.f32 %v837, %v1120
      %v1129 = vadd.f32 %v838, %v1121
      %v1130 = vadd.f32 %v839, %v1122
      %v1131 = vadd.f32 %v840, %v1123
      %v1132 = vsel %vm841, %v1124, 0.0
      %1133 = vadd.xlane.f32.xlu0 %v1132
      %v1134 = vpop.xlane.xlu0 %1133
      %v1135 = vsel %vm841, %v1125, 0.0
      %1136 = vadd.xlane.f32.xlu0 %v1135
      %v1137 = vpop.xlane.xlu0 %1136
      %v1138 = vsel %vm841, %v1126, 0.0
      %1139 = vadd.xlane.f32.xlu0 %v1138
      %v1140 = vpop.xlane.xlu0 %1139
      %v1141 = vsel %vm841, %v1127, 0.0
      %1142 = vadd.xlane.f32.xlu0 %v1141
      %v1143 = vpop.xlane.xlu0 %1142
      %v1144 = vsel %vm841, %v1128, 0.0
      %1145 = vadd.xlane.f32.xlu0 %v1144
      %v1146 = vpop.xlane.xlu0 %1145
      %v1147 = vsel %vm841, %v1129, 0.0
      %1148 = vadd.xlane.f32.xlu0 %v1147
      %v1149 = vpop.xlane.xlu0 %1148
      %v1150 = vsel %vm841, %v1130, 0.0
      %1151 = vadd.xlane.f32.xlu0 %v1150
      %v1152 = vpop.xlane.xlu0 %1151
      %v1153 = vsel %vm841, %v1131, 0.0
      %1154 = vadd.xlane.f32.xlu0 %v1153
      %v1155 = vpop.xlane.xlu0 %1154
      %v1156 = vrcp.pop 32.0
      %v1157 = vmul.f32 32.0, %v1156
      %v1158 = vsub.f32 1.0, %v1157
      %v1159 = vmul.f32 %v1156, %v1158
      %v1160 = vadd.f32 %v1156, %v1159
      %vm1161 = vweird.f32 %v1156
      %v1162 = vsel %vm1161, %v1156, %v1160
      %v1163 = vmul.f32 %v1134, %v1162
      %v1164 = vmul.f32 %v1137, %v1162
      %v1165 = vmul.f32 %v1140, %v1162
      %v1166 = vmul.f32 %v1143, %v1162
      %v1167 = vmul.f32 %v1146, %v1162
      %v1168 = vmul.f32 %v1149, %v1162
      %v1169 = vmul.f32 %v1152, %v1162
      %v1170 = vmul.f32 %v1155, %v1162
      %v1171 = vsub.f32 %v1124, %v1163
      %v1172 = vsub.f32 %v1125, %v1164
      %v1173 = vsub.f32 %v1126, %v1165
      %v1174 = vsub.f32 %v1127, %v1166
      %v1175 = vsub.f32 %v1128, %v1167
      %v1176 = vsub.f32 %v1129, %v1168
      %v1177 = vsub.f32 %v1130, %v1169
      %v1178 = vsub.f32 %v1131, %v1170
      %v1179 = vmul.f32 %v1171, %v1171
      %v1180 = vmul.f32 %v1172, %v1172
      %v1181 = vmul.f32 %v1173, %v1173
      %v1182 = vmul.f32 %v1174, %v1174
      %v1183 = vmul.f32 %v1175, %v1175
      %v1184 = vmul.f32 %v1176, %v1176
      %v1185 = vmul.f32 %v1177, %v1177
      %v1186 = vmul.f32 %v1178, %v1178
      %v1187 = vsel %vm841, %v1179, 0.0
      %1188 = vadd.xlane.f32.xlu0 %v1187
      %v1189 = vpop.xlane.xlu0 %1188
      %v1190 = vsel %vm841, %v1180, 0.0
      %1191 = vadd.xlane.f32.xlu0 %v1190
      %v1192 = vpop.xlane.xlu0 %1191
      %v1193 = vsel %vm841, %v1181, 0.0
      %1194 = vadd.xlane.f32.xlu0 %v1193
      %v1195 = vpop.xlane.xlu0 %1194
      %v1196 = vsel %vm841, %v1182, 0.0
      %1197 = vadd.xlane.f32.xlu0 %v1196
      %v1198 = vpop.xlane.xlu0 %1197
      %v1199 = vsel %vm841, %v1183, 0.0
      %1200 = vadd.xlane.f32.xlu0 %v1199
      %v1201 = vpop.xlane.xlu0 %1200
      %v1202 = vsel %vm841, %v1184, 0.0
      %1203 = vadd.xlane.f32.xlu0 %v1202
      %v1204 = vpop.xlane.xlu0 %1203
      %v1205 = vsel %vm841, %v1185, 0.0
      %1206 = vadd.xlane.f32.xlu0 %v1205
      %v1207 = vpop.xlane.xlu0 %1206
      %v1208 = vsel %vm841, %v1186, 0.0
      %1209 = vadd.xlane.f32.xlu0 %v1208
      %v1210 = vpop.xlane.xlu0 %1209
      %v1211 = vmul.f32 %v1189, %v1162
      %v1212 = vmul.f32 %v1192, %v1162
      %v1213 = vmul.f32 %v1195, %v1162
      %v1214 = vmul.f32 %v1198, %v1162
      %v1215 = vmul.f32 %v1201, %v1162
      %v1216 = vmul.f32 %v1204, %v1162
      %v1217 = vmul.f32 %v1207, %v1162
      %v1218 = vmul.f32 %v1210, %v1162
      %v1219 = vadd.f32 %v1211, 1e-05
      %v1220 = vadd.f32 %v1212, 1e-05
      %v1221 = vadd.f32 %v1213, 1e-05
      %v1222 = vadd.f32 %v1214, 1e-05
      %v1223 = vadd.f32 %v1215, 1e-05
      %v1224 = vadd.f32 %v1216, 1e-05
      %v1225 = vadd.f32 %v1217, 1e-05
      %v1226 = vadd.f32 %v1218, 1e-05
      %v1227 = vrsqrt.pop %v1219
      %v1228 = vmul.f32 %v1227, %v1219
      %v1229 = vmul.f32 %v1228, %v1227
      %v1230 = vmul.f32 0.5, %v1229
      %v1231 = vsub.f32 1.5, %v1230
      %v1232 = vmul.f32 %v1227, %v1231
      %vm1233 = vweird.f32 %v1219
      %vm1234 = vweird.f32 %v1227
      %vm1235 = vmor %vm1233, %vm1234
      %v1236 = vsel %vm1235, %v1227, %v1232
      %v1237 = vrsqrt.pop %v1220
      %v1238 = vmul.f32 %v1237, %v1220
      %v1239 = vmul.f32 %v1238, %v1237
      %v1240 = vmul.f32 0.5, %v1239
      %v1241 = vsub.f32 1.5, %v1240
      %v1242 = vmul.f32 %v1237, %v1241
      %vm1243 = vweird.f32 %v1220
      %vm1244 = vweird.f32 %v1237
      %vm1245 = vmor %vm1243, %vm1244
      %v1246 = vsel %vm1245, %v1237, %v1242
      %v1247 = vrsqrt.pop %v1221
      %v1248 = vmul.f32 %v1247, %v1221
      %v1249 = vmul.f32 %v1248, %v1247
      %v1250 = vmul.f32 0.5, %v1249
      %v1251 = vsub.f32 1.5, %v1250
      %v1252 = vmul.f32 %v1247, %v1251
      %vm1253 = vweird.f32 %v1221
      %vm1254 = vweird.f32 %v1247
      %vm1255 = vmor %vm1253, %vm1254
      %v1256 = vsel %vm1255, %v1247, %v1252
      %v1257 = vrsqrt.pop %v1222
      %v1258 = vmul.f32 %v1257, %v1222
      %v1259 = vmul.f32 %v1258, %v1257
      %v1260 = vmul.f32 0.5, %v1259
      %v1261 = vsub.f32 1.5, %v1260
      %v1262 = vmul.f32 %v1257, %v1261
      %vm1263 = vweird.f32 %v1222
      %vm1264 = vweird.f32 %v1257
      %vm1265 = vmor %vm1263, %vm1264
      %v1266 = vsel %vm1265, %v1257, %v1262
      %v1267 = vrsqrt.pop %v1223
      %v1268 = vmul.f32 %v1267, %v1223
      %v1269 = vmul.f32 %v1268, %v1267
      %v1270 = vmul.f32 0.5, %v1269
      %v1271 = vsub.f32 1.5, %v1270
      %v1272 = vmul.f32 %v1267, %v1271
      %vm1273 = vweird.f32 %v1223
      %vm1274 = vweird.f32 %v1267
      %vm1275 = vmor %vm1273, %vm1274
      %v1276 = vsel %vm1275, %v1267, %v1272
      %v1277 = vrsqrt.pop %v1224
      %v1278 = vmul.f32 %v1277, %v1224
      %v1279 = vmul.f32 %v1278, %v1277
      %v1280 = vmul.f32 0.5, %v1279
      %v1281 = vsub.f32 1.5, %v1280
      %v1282 = vmul.f32 %v1277, %v1281
      %vm1283 = vweird.f32 %v1224
      %vm1284 = vweird.f32 %v1277
      %vm1285 = vmor %vm1283, %vm1284
      %v1286 = vsel %vm1285, %v1277, %v1282
      %v1287 = vrsqrt.pop %v1225
      %v1288 = vmul.f32 %v1287, %v1225
      %v1289 = vmul.f32 %v1288, %v1287
      %v1290 = vmul.f32 0.5, %v1289
      %v1291 = vsub.f32 1.5, %v1290
      %v1292 = vmul.f32 %v1287, %v1291
      %vm1293 = vweird.f32 %v1225
      %vm1294 = vweird.f32 %v1287
      %vm1295 = vmor %vm1293, %vm1294
      %v1296 = vsel %vm1295, %v1287, %v1292
      %v1297 = vrsqrt.pop %v1226
      %v1298 = vmul.f32 %v1297, %v1226
      %v1299 = vmul.f32 %v1298, %v1297
      %v1300 = vmul.f32 0.5, %v1299
      %v1301 = vsub.f32 1.5, %v1300
      %v1302 = vmul.f32 %v1297, %v1301
      %vm1303 = vweird.f32 %v1226
      %vm1304 = vweird.f32 %v1297
      %vm1305 = vmor %vm1303, %vm1304
      %v1306 = vsel %vm1305, %v1297, %v1302
      %v1307 = vmul.f32 %v1171, %v1236
      %v1308 = vmul.f32 %v1172, %v1246
      %v1309 = vmul.f32 %v1173, %v1256
      %v1310 = vmul.f32 %v1174, %v1266
      %v1311 = vmul.f32 %v1175, %v1276
      %v1312 = vmul.f32 %v1176, %v1286
      %v1313 = vmul.f32 %v1177, %v1296
      %v1314 = vmul.f32 %v1178, %v1306
      %v1315 = vld [vmem:[%s4] sm:$0x1]
      %v1317 = vperm.slane %v1315, 0
      %v1319 = vmul.f32 %v1307, %v1317
      %v1320 = vmul.f32 %v1308, %v1317
      %v1321 = vmul.f32 %v1309, %v1317
      %v1322 = vmul.f32 %v1310, %v1317
      %v1323 = vmul.f32 %v1311, %v1317
      %v1324 = vmul.f32 %v1312, %v1317
      %v1325 = vmul.f32 %v1313, %v1317
      %v1326 = vmul.f32 %v1314, %v1317
      %v1327 = vld [vmem:[%s5] sm:$0x1]
      %v1329 = vperm.slane %v1327, 0
      %v1331 = vadd.f32 %v1319, %v1329
      %v1332 = vadd.f32 %v1320, %v1329
      %v1333 = vadd.f32 %v1321, %v1329
      %v1334 = vadd.f32 %v1322, %v1329
      %v1335 = vadd.f32 %v1323, %v1329
      %v1336 = vadd.f32 %v1324, %v1329
      %v1337 = vadd.f32 %v1325, %v1329
      %v1338 = vadd.f32 %v1326, %v1329
      %v1339 = vpack.c.bf16 %v1332, %v1331
      %v1340 = vpack.c.bf16 %v1334, %v1333
      %v1341 = vpack.c.bf16 %v1336, %v1335
      %v1342 = vpack.c.bf16 %v1338, %v1337
      %v1343 = vld [vmem:[%s6] sm:$0xf]
      %v1344 = vld [vmem:[%s6 + $0x4] sm:$0xf]
      %v1345 = vld [vmem:[%s6 + $0x8] sm:$0xf]
      %v1346 = vld [vmem:[%s6 + $0xc] sm:$0xf]
      %v1351 = vunpack.c.l.b16 %v1343
      %v1352 = vunpack.c.l.b16 %v1344
      %v1353 = vunpack.c.l.b16 %v1345
      %v1354 = vunpack.c.l.b16 %v1346
      %v1355 = vpack.c.b16 %v1352, %v1351
      %v1356 = vpack.c.b16 %v1354, %v1353
      %v1360 = vsel %vm841, %v1339, 0
      %v1363 = vsel %vm841, %v1340, 0
      %v1366 = vsel %vm841, %v1341, 0
      %v1369 = vsel %vm841, %v1342, 0
      %1371 = vmatpush.bf16.msra.mxu0 0
      %1372 = vmatpush.bf16.msra.mxu0 0
      %1373 = vmatpush.bf16.msra.mxu0 0
      %1374 = vmatpush.bf16.msra.mxu0 0
      %1375 = vmatpush.bf16.msra.mxu0 0
      %1376 = vmatpush.bf16.msra.mxu0 0
      %1377 = vmatpush.bf16.msra.mxu0 %v1356
      %1378 = vmatpush.bf16.msra.mxu0 %v1355
      %1379 = vmatmul.bf16.gmra.mxu0 %v1360
      %v1380 = vpop.f32.mrf.mxu0
      %v1381 = vadd.f32 0.0, %v1380
      %v1382 = vpop.f32.mrf.mxu0
      %v1383 = vadd.f32 0.0, %v1382
      %1384 = vmatmul.bf16.gmra.mxu0 %v1363
      %v1385 = vpop.f32.mrf.mxu0
      %v1386 = vadd.f32 0.0, %v1385
      %v1387 = vpop.f32.mrf.mxu0
      %v1388 = vadd.f32 0.0, %v1387
      %1389 = vmatmul.bf16.gmra.mxu0 %v1366
      %v1390 = vpop.f32.mrf.mxu0
      %v1391 = vadd.f32 0.0, %v1390
      %v1392 = vpop.f32.mrf.mxu0
      %v1393 = vadd.f32 0.0, %v1392
      %1394 = vmatmul.bf16.gmra.mxu0 %v1369
      %v1395 = vpop.f32.mrf.mxu0
      %v1396 = vadd.f32 0.0, %v1395
      %v1397 = vpop.f32.mrf.mxu0
      %v1398 = vadd.f32 0.0, %v1397
      %1399 = vdwg.mxu0
      %v1400 = vld [vmem:[%s7] sm:$0xf]
      %v1401 = vld [vmem:[%s7 + $0x4] sm:$0xf]
      %v1402 = vld [vmem:[%s7 + $0x8] sm:$0xf]
      %v1403 = vld [vmem:[%s7 + $0xc] sm:$0xf]
      %v1408 = vunpack.c.l.b16 %v1400
      %v1409 = vunpack.c.l.b16 %v1401
      %v1410 = vunpack.c.l.b16 %v1402
      %v1411 = vunpack.c.l.b16 %v1403
      %v1412 = vpack.c.b16 %v1409, %v1408
      %v1413 = vpack.c.b16 %v1411, %v1410
      %1416 = vmatpush.bf16.msra.mxu0 0
      %1417 = vmatpush.bf16.msra.mxu0 0
      %1418 = vmatpush.bf16.msra.mxu0 0
      %1419 = vmatpush.bf16.msra.mxu0 0
      %1420 = vmatpush.bf16.msra.mxu0 0
      %1421 = vmatpush.bf16.msra.mxu0 0
      %1422 = vmatpush.bf16.msra.mxu0 %v1413
      %1423 = vmatpush.bf16.msra.mxu0 %v1412
      %1424 = vmatmul.bf16.gmra.mxu0 %v1360
      %v1425 = vpop.f32.mrf.mxu0
      %v1426 = vadd.f32 0.0, %v1425
      %v1427 = vpop.f32.mrf.mxu0
      %v1428 = vadd.f32 0.0, %v1427
      %1429 = vmatmul.bf16.gmra.mxu0 %v1363
      %v1430 = vpop.f32.mrf.mxu0
      %v1431 = vadd.f32 0.0, %v1430
      %v1432 = vpop.f32.mrf.mxu0
      %v1433 = vadd.f32 0.0, %v1432
      %1434 = vmatmul.bf16.gmra.mxu0 %v1366
      %v1435 = vpop.f32.mrf.mxu0
      %v1436 = vadd.f32 0.0, %v1435
      %v1437 = vpop.f32.mrf.mxu0
      %v1438 = vadd.f32 0.0, %v1437
      %1439 = vmatmul.bf16.gmra.mxu0 %v1369
      %v1440 = vpop.f32.mrf.mxu0
      %v1441 = vadd.f32 0.0, %v1440
      %v1442 = vpop.f32.mrf.mxu0
      %v1443 = vadd.f32 0.0, %v1442
      %1444 = vdwg.mxu0
      %v1445 = vld [vmem:[%s8] sm:$0xf]
      %v1446 = vld [vmem:[%s8 + $0x4] sm:$0xf]
      %v1447 = vld [vmem:[%s8 + $0x8] sm:$0xf]
      %v1448 = vld [vmem:[%s8 + $0xc] sm:$0xf]
      %v1453 = vunpack.c.l.b16 %v1445
      %v1454 = vunpack.c.l.b16 %v1446
      %v1455 = vunpack.c.l.b16 %v1447
      %v1456 = vunpack.c.l.b16 %v1448
      %v1457 = vpack.c.b16 %v1454, %v1453
      %v1458 = vpack.c.b16 %v1456, %v1455
      %1461 = vmatpush.bf16.msra.mxu0 0
      %1462 = vmatpush.bf16.msra.mxu0 0
      %1463 = vmatpush.bf16.msra.mxu0 0
      %1464 = vmatpush.bf16.msra.mxu0 0
      %1465 = vmatpush.bf16.msra.mxu0 0
      %1466 = vmatpush.bf16.msra.mxu0 0
      %1467 = vmatpush.bf16.msra.mxu0 %v1458
      %1468 = vmatpush.bf16.msra.mxu0 %v1457
      %1469 = vmatmul.bf16.gmra.mxu0 %v1360
      %v1470 = vpop.f32.mrf.mxu0
      %v1471 = vadd.f32 0.0, %v1470
      %v1472 = vpop.f32.mrf.mxu0
      %v1473 = vadd.f32 0.0, %v1472
      %1474 = vmatmul.bf16.gmra.mxu0 %v1363
      %v1475 = vpop.f32.mrf.mxu0
      %v1476 = vadd.f32 0.0, %v1475
      %v1477 = vpop.f32.mrf.mxu0
      %v1478 = vadd.f32 0.0, %v1477
      %1479 = vmatmul.bf16.gmra.mxu0 %v1366
      %v1480 = vpop.f32.mrf.mxu0
      %v1481 = vadd.f32 0.0, %v1480
      %v1482 = vpop.f32.mrf.mxu0
      %v1483 = vadd.f32 0.0, %v1482
      %1484 = vmatmul.bf16.gmra.mxu0 %v1369
      %v1485 = vpop.f32.mrf.mxu0
      %v1486 = vadd.f32 0.0, %v1485
      %v1487 = vpop.f32.mrf.mxu0
      %v1488 = vadd.f32 0.0, %v1487
      %1489 = vdwg.mxu0
      %v1490 = vpack.c.bf16 %v1383, %v1381
      %v1491 = vpack.c.bf16 %v1388, %v1386
      %v1492 = vpack.c.bf16 %v1393, %v1391
      %v1493 = vpack.c.bf16 %v1398, %v1396
      %v1494 = vpack.c.bf16 %v1428, %v1426
      %v1495 = vpack.c.bf16 %v1433, %v1431
      %v1496 = vpack.c.bf16 %v1438, %v1436
      %v1497 = vpack.c.bf16 %v1443, %v1441
      %v1498 = vld [vmem:[%s1] sm:$0xf]
      %v1499 = vld [vmem:[%s1 + $0x4] sm:$0xf]
      %v1500 = vld [vmem:[%s1 + $0x8] sm:$0xf]
      %v1501 = vld [vmem:[%s1 + $0xc] sm:$0xf]
      %v1502 = vld [vmem:[%s1 + $0x10] sm:$0xf]
      %v1503 = vld [vmem:[%s1 + $0x14] sm:$0xf]
      %v1504 = vld [vmem:[%s1 + $0x18] sm:$0xf]
      %v1505 = vld [vmem:[%s1 + $0x1c] sm:$0xf]
      %v1506 = vunpack.c.l.bf16 %v1498
      %v1507 = vunpack.c.l.bf16 %v1499
      %v1508 = vunpack.c.l.bf16 %v1500
      %v1509 = vunpack.c.l.bf16 %v1501
      %v1510 = vunpack.c.l.bf16 %v1502
      %v1511 = vunpack.c.l.bf16 %v1503
      %v1512 = vunpack.c.l.bf16 %v1504
      %v1513 = vunpack.c.l.bf16 %v1505
      %vm1514 = vcmask 64512
      %v1516 = vsel %vm1514, %v1490, 0
      %v1519 = vsel %vm1514, %v1491, 0
      %v1522 = vsel %vm1514, %v1492, 0
      %v1525 = vsel %vm1514, %v1493, 0
      %v1528 = vsel %vm1514, %v1494, 0
      %v1531 = vsel %vm1514, %v1495, 0
      %v1534 = vsel %vm1514, %v1496, 0
      %v1537 = vsel %vm1514, %v1497, 0
      %1539 = vmatpush.bf16.xpose.msra.mxu0 0
      %1540 = vmatpush.bf16.xpose.msra.mxu0 0
      %1541 = vmatpush.bf16.xpose.msra.mxu0 0
      %1542 = vmatpush.bf16.xpose.msra.mxu0 0
      %1543 = vmatpush.bf16.xpose.msra.mxu0 %v1537
      %1544 = vmatpush.bf16.xpose.msra.mxu0 %v1534
      %1545 = vmatpush.bf16.xpose.msra.mxu0 %v1531
      %1546 = vmatpush.bf16.xpose.msra.mxu0 %v1528
      %1547 = vmatmul.bf16.gmra.mxu0 %v1516
      %v1548 = vpop.f32.mrf.mxu0
      %v1549 = vadd.f32 %v1506, %v1548
      %v1550 = vpop.f32.mrf.mxu0
      %v1551 = vadd.f32 %v1507, %v1550
      %1552 = vmatmul.bf16.gmra.mxu0 %v1519
      %v1553 = vpop.f32.mrf.mxu0
      %v1554 = vadd.f32 %v1508, %v1553
      %v1555 = vpop.f32.mrf.mxu0
      %v1556 = vadd.f32 %v1509, %v1555
      %1557 = vmatmul.bf16.gmra.mxu0 %v1522
      %v1558 = vpop.f32.mrf.mxu0
      %v1559 = vadd.f32 %v1510, %v1558
      %v1560 = vpop.f32.mrf.mxu0
      %v1561 = vadd.f32 %v1511, %v1560
      %1562 = vmatmul.bf16.gmra.mxu0 %v1525
      %v1563 = vpop.f32.mrf.mxu0
      %v1564 = vadd.f32 %v1512, %v1563
      %v1565 = vpop.f32.mrf.mxu0
      %v1566 = vadd.f32 %v1513, %v1565
      %1567 = vdwg.mxu0
      %vm1568 = vcmask 523264
      %v1569 = vsel %vm1568, %v1549, -inf
      %1570 = vmax.xlane.f32.xlu0 %v1569
      %v1571 = vpop.xlane.xlu0 %1570
      %v1572 = vsel %vm1568, %v1551, -inf
      %1573 = vmax.xlane.f32.xlu0 %v1572
      %v1574 = vpop.xlane.xlu0 %1573
      %v1575 = vsel %vm1568, %v1554, -inf
      %1576 = vmax.xlane.f32.xlu0 %v1575
      %v1577 = vpop.xlane.xlu0 %1576
      %v1578 = vsel %vm1568, %v1556, -inf
      %1579 = vmax.xlane.f32.xlu0 %v1578
      %v1580 = vpop.xlane.xlu0 %1579
      %v1581 = vsel %vm1568, %v1559, -inf
      %1582 = vmax.xlane.f32.xlu0 %v1581
      %v1583 = vpop.xlane.xlu0 %1582
      %v1584 = vsel %vm1568, %v1561, -inf
      %1585 = vmax.xlane.f32.xlu0 %v1584
      %v1586 = vpop.xlane.xlu0 %1585
      %v1587 = vsel %vm1568, %v1564, -inf
      %1588 = vmax.xlane.f32.xlu0 %v1587
      %v1589 = vpop.xlane.xlu0 %1588
      %v1590 = vsel %vm1568, %v1566, -inf
      %1591 = vmax.xlane.f32.xlu0 %v1590
      %v1592 = vpop.xlane.xlu0 %1591
      %v1593 = vsub.f32 %v1549, %v1571
      %v1594 = vsub.f32 %v1551, %v1574
      %v1595 = vsub.f32 %v1554, %v1577
      %v1596 = vsub.f32 %v1556, %v1580
      %v1597 = vsub.f32 %v1559, %v1583
      %v1598 = vsub.f32 %v1561, %v1586
      %v1599 = vsub.f32 %v1564, %v1589
      %v1600 = vsub.f32 %v1566, %v1592
      %v1601 = vmul.f32 %v1593, 1.442695
      %v1602 = vpow.pop %v1601
      %v1603 = vmul.f32 %v1594, 1.442695
      %v1604 = vpow.pop %v1603
      %v1605 = vmul.f32 %v1595, 1.442695
      %v1606 = vpow.pop %v1605
      %v1607 = vmul.f32 %v1596, 1.442695
      %v1608 = vpow.pop %v1607
      %v1609 = vmul.f32 %v1597, 1.442695
      %v1610 = vpow.pop %v1609
      %v1611 = vmul.f32 %v1598, 1.442695
      %v1612 = vpow.pop %v1611
      %v1613 = vmul.f32 %v1599, 1.442695
      %v1614 = vpow.pop %v1613
      %v1615 = vmul.f32 %v1600, 1.442695
      %v1616 = vpow.pop %v1615
      %v1617 = vsel %vm1568, %v1602, 0.0
      %1618 = vadd.xlane.f32.xlu0 %v1617
      %v1619 = vpop.xlane.xlu0 %1618
      %v1620 = vsel %vm1568, %v1604, 0.0
      %1621 = vadd.xlane.f32.xlu0 %v1620
      %v1622 = vpop.xlane.xlu0 %1621
      %v1623 = vsel %vm1568, %v1606, 0.0
      %1624 = vadd.xlane.f32.xlu0 %v1623
      %v1625 = vpop.xlane.xlu0 %1624
      %v1626 = vsel %vm1568, %v1608, 0.0
      %1627 = vadd.xlane.f32.xlu0 %v1626
      %v1628 = vpop.xlane.xlu0 %1627
      %v1629 = vsel %vm1568, %v1610, 0.0
      %1630 = vadd.xlane.f32.xlu0 %v1629
      %v1631 = vpop.xlane.xlu0 %1630
      %v1632 = vsel %vm1568, %v1612, 0.0
      %1633 = vadd.xlane.f32.xlu0 %v1632
      %v1634 = vpop.xlane.xlu0 %1633
      %v1635 = vsel %vm1568, %v1614, 0.0
      %1636 = vadd.xlane.f32.xlu0 %v1635
      %v1637 = vpop.xlane.xlu0 %1636
      %v1638 = vsel %vm1568, %v1616, 0.0
      %1639 = vadd.xlane.f32.xlu0 %v1638
      %v1640 = vpop.xlane.xlu0 %1639
      %v1641 = vrcp.pop %v1619
      %v1642 = vrcp.pop %v1622
      %v1643 = vrcp.pop %v1625
      %v1644 = vrcp.pop %v1628
      %v1645 = vrcp.pop %v1631
      %v1646 = vrcp.pop %v1634
      %v1647 = vrcp.pop %v1637
      %v1648 = vrcp.pop %v1640
      %v1649 = vmul.f32 %v1602, %v1641
      %v1650 = vmul.f32 %v1604, %v1642
      %v1651 = vmul.f32 %v1606, %v1643
      %v1652 = vmul.f32 %v1608, %v1644
      %v1653 = vmul.f32 %v1610, %v1645
      %v1654 = vmul.f32 %v1612, %v1646
      %v1655 = vmul.f32 %v1614, %v1647
      %v1656 = vmul.f32 %v1616, %v1648
      %v1657 = vpack.c.bf16 %v1650, %v1649
      %v1658 = vpack.c.bf16 %v1652, %v1651
      %v1659 = vpack.c.bf16 %v1654, %v1653
      %v1660 = vpack.c.bf16 %v1656, %v1655
      %v1661 = vpack.c.bf16 %v1473, %v1471
      %v1662 = vpack.c.bf16 %v1478, %v1476
      %v1663 = vpack.c.bf16 %v1483, %v1481
      %v1664 = vpack.c.bf16 %v1488, %v1486
      %v1666 = vsel %vm1568, %v1657, 0
      %v1669 = vsel %vm1568, %v1658, 0
      %v1672 = vsel %vm1568, %v1659, 0
      %v1675 = vsel %vm1568, %v1660, 0
      %1677 = vmatpush.bf16.msra.mxu0 0
      %1678 = vmatpush.bf16.msra.mxu0 0
      %1679 = vmatpush.bf16.msra.mxu0 0
      %1680 = vmatpush.bf16.msra.mxu0 0
      %1681 = vmatpush.bf16.msra.mxu0 %v1664
      %1682 = vmatpush.bf16.msra.mxu0 %v1663
      %1683 = vmatpush.bf16.msra.mxu0 %v1662
      %1684 = vmatpush.bf16.msra.mxu0 %v1661
      %1685 = vmatmul.bf16.gmra.mxu0 %v1666
      %v1686 = vpop.f32.mrf.mxu0
      %v1687 = vadd.f32 0.0, %v1686
      %v1688 = vpop.f32.mrf.mxu0
      %v1689 = vadd.f32 0.0, %v1688
      %1690 = vmatmul.bf16.gmra.mxu0 %v1669
      %v1691 = vpop.f32.mrf.mxu0
      %v1692 = vadd.f32 0.0, %v1691
      %v1693 = vpop.f32.mrf.mxu0
      %v1694 = vadd.f32 0.0, %v1693
      %1695 = vmatmul.bf16.gmra.mxu0 %v1672
      %v1696 = vpop.f32.mrf.mxu0
      %v1697 = vadd.f32 0.0, %v1696
      %v1698 = vpop.f32.mrf.mxu0
      %v1699 = vadd.f32 0.0, %v1698
      %1700 = vmatmul.bf16.gmra.mxu0 %v1675
      %v1701 = vpop.f32.mrf.mxu0
      %v1702 = vadd.f32 0.0, %v1701
      %v1703 = vpop.f32.mrf.mxu0
      %v1704 = vadd.f32 0.0, %v1703
      %1705 = vdwg.mxu0
      %1706 = vst.msk [vmem:[#allocation4] sm:$0xff] %vm1514, %v1687
      %1707 = vst.msk [vmem:[#allocation4 + $0x8] sm:$0xff] %vm1514, %v1689
      %1708 = vst.msk [vmem:[#allocation4 + $0x10] sm:$0xff] %vm1514, %v1692
      %1709 = vst.msk [vmem:[#allocation4 + $0x18] sm:$0xff] %vm1514, %v1694
      %1710 = vst.msk [vmem:[#allocation4 + $0x20] sm:$0xff] %vm1514, %v1697
      %1711 = vst.msk [vmem:[#allocation4 + $0x28] sm:$0xff] %vm1514, %v1699
      %1712 = vst.msk [vmem:[#allocation4 + $0x30] sm:$0xff] %vm1514, %v1702
      %1713 = vst.msk [vmem:[#allocation4 + $0x38] sm:$0xff] %vm1514, %v1704
      %s1714 = scalar_lea.vmem %s6, 16
      %v1715 = vld [vmem:[%s1714] sm:$0xf]
      %v1716 = vld [vmem:[%s1714 + $0x4] sm:$0xf]
      %v1717 = vld [vmem:[%s1714 + $0x8] sm:$0xf]
      %v1718 = vld [vmem:[%s1714 + $0xc] sm:$0xf]
      %v1723 = vunpack.c.l.b16 %v1715
      %v1724 = vunpack.c.l.b16 %v1716
      %v1725 = vunpack.c.l.b16 %v1717
      %v1726 = vunpack.c.l.b16 %v1718
      %v1727 = vpack.c.b16 %v1724, %v1723
      %v1728 = vpack.c.b16 %v1726, %v1725
      %1731 = vmatpush.bf16.msra.mxu0 0
      %1732 = vmatpush.bf16.msra.mxu0 0
      %1733 = vmatpush.bf16.msra.mxu0 0
      %1734 = vmatpush.bf16.msra.mxu0 0
      %1735 = vmatpush.bf16.msra.mxu0 0
      %1736 = vmatpush.bf16.msra.mxu0 0
      %1737 = vmatpush.bf16.msra.mxu0 %v1728
      %1738 = vmatpush.bf16.msra.mxu0 %v1727
      %1739 = vmatmul.bf16.gmra.mxu0 %v1360
      %v1740 = vpop.f32.mrf.mxu0
      %v1741 = vadd.f32 0.0, %v1740
      %v1742 = vpop.f32.mrf.mxu0
      %v1743 = vadd.f32 0.0, %v1742
      %1744 = vmatmul.bf16.gmra.mxu0 %v1363
      %v1745 = vpop.f32.mrf.mxu0
      %v1746 = vadd.f32 0.0, %v1745
      %v1747 = vpop.f32.mrf.mxu0
      %v1748 = vadd.f32 0.0, %v1747
      %1749 = vmatmul.bf16.gmra.mxu0 %v1366
      %v1750 = vpop.f32.mrf.mxu0
      %v1751 = vadd.f32 0.0, %v1750
      %v1752 = vpop.f32.mrf.mxu0
      %v1753 = vadd.f32 0.0, %v1752
      %1754 = vmatmul.bf16.gmra.mxu0 %v1369
      %v1755 = vpop.f32.mrf.mxu0
      %v1756 = vadd.f32 0.0, %v1755
      %v1757 = vpop.f32.mrf.mxu0
      %v1758 = vadd.f32 0.0, %v1757
      %1759 = vdwg.mxu0
      %s1760 = scalar_lea.vmem %s7, 16
      %v1761 = vld [vmem:[%s1760] sm:$0xf]
      %v1762 = vld [vmem:[%s1760 + $0x4] sm:$0xf]
      %v1763 = vld [vmem:[%s1760 + $0x8] sm:$0xf]
      %v1764 = vld [vmem:[%s1760 + $0xc] sm:$0xf]
      %v1769 = vunpack.c.l.b16 %v1761
      %v1770 = vunpack.c.l.b16 %v1762
      %v1771 = vunpack.c.l.b16 %v1763
      %v1772 = vunpack.c.l.b16 %v1764
      %v1773 = vpack.c.b16 %v1770, %v1769
      %v1774 = vpack.c.b16 %v1772, %v1771
      %1777 = vmatpush.bf16.msra.mxu0 0
      %1778 = vmatpush.bf16.msra.mxu0 0
      %1779 = vmatpush.bf16.msra.mxu0 0
      %1780 = vmatpush.bf16.msra.mxu0 0
      %1781 = vmatpush.bf16.msra.mxu0 0
      %1782 = vmatpush.bf16.msra.mxu0 0
      %1783 = vmatpush.bf16.msra.mxu0 %v1774
      %1784 = vmatpush.bf16.msra.mxu0 %v1773
      %1785 = vmatmul.bf16.gmra.mxu0 %v1360
      %v1786 = vpop.f32.mrf.mxu0
      %v1787 = vadd.f32 0.0, %v1786
      %v1788 = vpop.f32.mrf.mxu0
      %v1789 = vadd.f32 0.0, %v1788
      %1790 = vmatmul.bf16.gmra.mxu0 %v1363
      %v1791 = vpop.f32.mrf.mxu0
      %v1792 = vadd.f32 0.0, %v1791
      %v1793 = vpop.f32.mrf.mxu0
      %v1794 = vadd.f32 0.0, %v1793
      %1795 = vmatmul.bf16.gmra.mxu0 %v1366
      %v1796 = vpop.f32.mrf.mxu0
      %v1797 = vadd.f32 0.0, %v1796
      %v1798 = vpop.f32.mrf.mxu0
      %v1799 = vadd.f32 0.0, %v1798
      %1800 = vmatmul.bf16.gmra.mxu0 %v1369
      %v1801 = vpop.f32.mrf.mxu0
      %v1802 = vadd.f32 0.0, %v1801
      %v1803 = vpop.f32.mrf.mxu0
      %v1804 = vadd.f32 0.0, %v1803
      %1805 = vdwg.mxu0
      %s1806 = scalar_lea.vmem %s8, 16
      %v1807 = vld [vmem:[%s1806] sm:$0xf]
      %v1808 = vld [vmem:[%s1806 + $0x4] sm:$0xf]
      %v1809 = vld [vmem:[%s1806 + $0x8] sm:$0xf]
      %v1810 = vld [vmem:[%s1806 + $0xc] sm:$0xf]
      %v1815 = vunpack.c.l.b16 %v1807
      %v1816 = vunpack.c.l.b16 %v1808
      %v1817 = vunpack.c.l.b16 %v1809
      %v1818 = vunpack.c.l.b16 %v1810
      %v1819 = vpack.c.b16 %v1816, %v1815
      %v1820 = vpack.c.b16 %v1818, %v1817
      %1823 = vmatpush.bf16.msra.mxu0 0
      %1824 = vmatpush.bf16.msra.mxu0 0
      %1825 = vmatpush.bf16.msra.mxu0 0
      %1826 = vmatpush.bf16.msra.mxu0 0
      %1827 = vmatpush.bf16.msra.mxu0 0
      %1828 = vmatpush.bf16.msra.mxu0 0
      %1829 = vmatpush.bf16.msra.mxu0 %v1820
      %1830 = vmatpush.bf16.msra.mxu0 %v1819
      %1831 = vmatmul.bf16.gmra.mxu0 %v1360
      %v1832 = vpop.f32.mrf.mxu0
      %v1833 = vadd.f32 0.0, %v1832
      %v1834 = vpop.f32.mrf.mxu0
      %v1835 = vadd.f32 0.0, %v1834
      %1836 = vmatmul.bf16.gmra.mxu0 %v1363
      %v1837 = vpop.f32.mrf.mxu0
      %v1838 = vadd.f32 0.0, %v1837
      %v1839 = vpop.f32.mrf.mxu0
      %v1840 = vadd.f32 0.0, %v1839
      %1841 = vmatmul.bf16.gmra.mxu0 %v1366
      %v1842 = vpop.f32.mrf.mxu0
      %v1843 = vadd.f32 0.0, %v1842
      %v1844 = vpop.f32.mrf.mxu0
      %v1845 = vadd.f32 0.0, %v1844
      %1846 = vmatmul.bf16.gmra.mxu0 %v1369
      %v1847 = vpop.f32.mrf.mxu0
      %v1848 = vadd.f32 0.0, %v1847
      %v1849 = vpop.f32.mrf.mxu0
      %v1850 = vadd.f32 0.0, %v1849
      %1851 = vdwg.mxu0
      %v1852 = vpack.c.bf16 %v1743, %v1741
      %v1853 = vpack.c.bf16 %v1748, %v1746
      %v1854 = vpack.c.bf16 %v1753, %v1751
      %v1855 = vpack.c.bf16 %v1758, %v1756
      %v1856 = vpack.c.bf16 %v1789, %v1787
      %v1857 = vpack.c.bf16 %v1794, %v1792
      %v1858 = vpack.c.bf16 %v1799, %v1797
      %v1859 = vpack.c.bf16 %v1804, %v1802
      %s1860 = scalar_lea.vmem %s1, 32
      %v1861 = vld [vmem:[%s1860] sm:$0xf]
      %v1862 = vld [vmem:[%s1860 + $0x4] sm:$0xf]
      %v1863 = vld [vmem:[%s1860 + $0x8] sm:$0xf]
      %v1864 = vld [vmem:[%s1860 + $0xc] sm:$0xf]
      %v1865 = vld [vmem:[%s1860 + $0x10] sm:$0xf]
      %v1866 = vld [vmem:[%s1860 + $0x14] sm:$0xf]
      %v1867 = vld [vmem:[%s1860 + $0x18] sm:$0xf]
      %v1868 = vld [vmem:[%s1860 + $0x1c] sm:$0xf]
      %v1869 = vunpack.c.l.bf16 %v1861
      %v1870 = vunpack.c.l.bf16 %v1862
      %v1871 = vunpack.c.l.bf16 %v1863
      %v1872 = vunpack.c.l.bf16 %v1864
      %v1873 = vunpack.c.l.bf16 %v1865
      %v1874 = vunpack.c.l.bf16 %v1866
      %v1875 = vunpack.c.l.bf16 %v1867
      %v1876 = vunpack.c.l.bf16 %v1868
      %v1878 = vsel %vm1514, %v1852, 0
      %v1881 = vsel %vm1514, %v1853, 0
      %v1884 = vsel %vm1514, %v1854, 0
      %v1887 = vsel %vm1514, %v1855, 0
      %v1890 = vsel %vm1514, %v1856, 0
      %v1893 = vsel %vm1514, %v1857, 0
      %v1896 = vsel %vm1514, %v1858, 0
      %v1899 = vsel %vm1514, %v1859, 0
      %1901 = vmatpush.bf16.xpose.msra.mxu0 0
      %1902 = vmatpush.bf16.xpose.msra.mxu0 0
      %1903 = vmatpush.bf16.xpose.msra.mxu0 0
      %1904 = vmatpush.bf16.xpose.msra.mxu0 0
      %1905 = vmatpush.bf16.xpose.msra.mxu0 %v1899
      %1906 = vmatpush.bf16.xpose.msra.mxu0 %v1896
      %1907 = vmatpush.bf16.xpose.msra.mxu0 %v1893
      %1908 = vmatpush.bf16.xpose.msra.mxu0 %v1890
      %1909 = vmatmul.bf16.gmra.mxu0 %v1878
      %v1910 = vpop.f32.mrf.mxu0
      %v1911 = vadd.f32 %v1869, %v1910
      %v1912 = vpop.f32.mrf.mxu0
      %v1913 = vadd.f32 %v1870, %v1912
      %1914 = vmatmul.bf16.gmra.mxu0 %v1881
      %v1915 = vpop.f32.mrf.mxu0
      %v1916 = vadd.f32 %v1871, %v1915
      %v1917 = vpop.f32.mrf.mxu0
      %v1918 = vadd.f32 %v1872, %v1917
      %1919 = vmatmul.bf16.gmra.mxu0 %v1884
      %v1920 = vpop.f32.mrf.mxu0
      %v1921 = vadd.f32 %v1873, %v1920
      %v1922 = vpop.f32.mrf.mxu0
      %v1923 = vadd.f32 %v1874, %v1922
      %1924 = vmatmul.bf16.gmra.mxu0 %v1887
      %v1925 = vpop.f32.mrf.mxu0
      %v1926 = vadd.f32 %v1875, %v1925
      %v1927 = vpop.f32.mrf.mxu0
      %v1928 = vadd.f32 %v1876, %v1927
      %1929 = vdwg.mxu0
      %v1930 = vsel %vm1568, %v1911, -inf
      %1931 = vmax.xlane.f32.xlu0 %v1930
      %v1932 = vpop.xlane.xlu0 %1931
      %v1933 = vsel %vm1568, %v1913, -inf
      %1934 = vmax.xlane.f32.xlu0 %v1933
      %v1935 = vpop.xlane.xlu0 %1934
      %v1936 = vsel %vm1568, %v1916, -inf
      %1937 = vmax.xlane.f32.xlu0 %v1936
      %v1938 = vpop.xlane.xlu0 %1937
      %v1939 = vsel %vm1568, %v1918, -inf
      %1940 = vmax.xlane.f32.xlu0 %v1939
      %v1941 = vpop.xlane.xlu0 %1940
      %v1942 = vsel %vm1568, %v1921, -inf
      %1943 = vmax.xlane.f32.xlu0 %v1942
      %v1944 = vpop.xlane.xlu0 %1943
      %v1945 = vsel %vm1568, %v1923, -inf
      %1946 = vmax.xlane.f32.xlu0 %v1945
      %v1947 = vpop.xlane.xlu0 %1946
      %v1948 = vsel %vm1568, %v1926, -inf
      %1949 = vmax.xlane.f32.xlu0 %v1948
      %v1950 = vpop.xlane.xlu0 %1949
      %v1951 = vsel %vm1568, %v1928, -inf
      %1952 = vmax.xlane.f32.xlu0 %v1951
      %v1953 = vpop.xlane.xlu0 %1952
      %v1954 = vsub.f32 %v1911, %v1932
      %v1955 = vsub.f32 %v1913, %v1935
      %v1956 = vsub.f32 %v1916, %v1938
      %v1957 = vsub.f32 %v1918, %v1941
      %v1958 = vsub.f32 %v1921, %v1944
      %v1959 = vsub.f32 %v1923, %v1947
      %v1960 = vsub.f32 %v1926, %v1950
      %v1961 = vsub.f32 %v1928, %v1953
      %v1962 = vmul.f32 %v1954, 1.442695
      %v1963 = vpow.pop %v1962
      %v1964 = vmul.f32 %v1955, 1.442695
      %v1965 = vpow.pop %v1964
      %v1966 = vmul.f32 %v1956, 1.442695
      %v1967 = vpow.pop %v1966
      %v1968 = vmul.f32 %v1957, 1.442695
      %v1969 = vpow.pop %v1968
      %v1970 = vmul.f32 %v1958, 1.442695
      %v1971 = vpow.pop %v1970
      %v1972 = vmul.f32 %v1959, 1.442695
      %v1973 = vpow.pop %v1972
      %v1974 = vmul.f32 %v1960, 1.442695
      %v1975 = vpow.pop %v1974
      %v1976 = vmul.f32 %v1961, 1.442695
      %v1977 = vpow.pop %v1976
      %v1978 = vsel %vm1568, %v1963, 0.0
      %1979 = vadd.xlane.f32.xlu0 %v1978
      %v1980 = vpop.xlane.xlu0 %1979
      %v1981 = vsel %vm1568, %v1965, 0.0
      %1982 = vadd.xlane.f32.xlu0 %v1981
      %v1983 = vpop.xlane.xlu0 %1982
      %v1984 = vsel %vm1568, %v1967, 0.0
      %1985 = vadd.xlane.f32.xlu0 %v1984
      %v1986 = vpop.xlane.xlu0 %1985
      %v1987 = vsel %vm1568, %v1969, 0.0
      %1988 = vadd.xlane.f32.xlu0 %v1987
      %v1989 = vpop.xlane.xlu0 %1988
      %v1990 = vsel %vm1568, %v1971, 0.0
      %1991 = vadd.xlane.f32.xlu0 %v1990
      %v1992 = vpop.xlane.xlu0 %1991
      %v1993 = vsel %vm1568, %v1973, 0.0
      %1994 = vadd.xlane.f32.xlu0 %v1993
      %v1995 = vpop.xlane.xlu0 %1994
      %v1996 = vsel %vm1568, %v1975, 0.0
      %1997 = vadd.xlane.f32.xlu0 %v1996
      %v1998 = vpop.xlane.xlu0 %1997
      %v1999 = vsel %vm1568, %v1977, 0.0
      %2000 = vadd.xlane.f32.xlu0 %v1999
      %v2001 = vpop.xlane.xlu0 %2000
      %v2002 = vrcp.pop %v1980
      %v2003 = vrcp.pop %v1983
      %v2004 = vrcp.pop %v1986
      %v2005 = vrcp.pop %v1989
      %v2006 = vrcp.pop %v1992
      %v2007 = vrcp.pop %v1995
      %v2008 = vrcp.pop %v1998
      %v2009 = vrcp.pop %v2001
      %v2010 = vmul.f32 %v1963, %v2002
      %v2011 = vmul.f32 %v1965, %v2003
      %v2012 = vmul.f32 %v1967, %v2004
      %v2013 = vmul.f32 %v1969, %v2005
      %v2014 = vmul.f32 %v1971, %v2006
      %v2015 = vmul.f32 %v1973, %v2007
      %v2016 = vmul.f32 %v1975, %v2008
      %v2017 = vmul.f32 %v1977, %v2009
      %v2018 = vpack.c.bf16 %v2011, %v2010
      %v2019 = vpack.c.bf16 %v2013, %v2012
      %v2020 = vpack.c.bf16 %v2015, %v2014
      %v2021 = vpack.c.bf16 %v2017, %v2016
      %v2022 = vpack.c.bf16 %v1835, %v1833
      %v2023 = vpack.c.bf16 %v1840, %v1838
      %v2024 = vpack.c.bf16 %v1845, %v1843
      %v2025 = vpack.c.bf16 %v1850, %v1848
      %v2027 = vsel %vm1568, %v2018, 0
      %v2030 = vsel %vm1568, %v2019, 0
      %v2033 = vsel %vm1568, %v2020, 0
      %v2036 = vsel %vm1568, %v2021, 0
      %2038 = vmatpush.bf16.msra.mxu0 0
      %2039 = vmatpush.bf16.msra.mxu0 0
      %2040 = vmatpush.bf16.msra.mxu0 0
      %2041 = vmatpush.bf16.msra.mxu0 0
      %2042 = vmatpush.bf16.msra.mxu0 %v2025
      %2043 = vmatpush.bf16.msra.mxu0 %v2024
      %2044 = vmatpush.bf16.msra.mxu0 %v2023
      %2045 = vmatpush.bf16.msra.mxu0 %v2022
      %2046 = vmatmul.bf16.gmra.mxu0 %v2027
      %v2047 = vpop.f32.mrf.mxu0
      %v2048 = vadd.f32 0.0, %v2047
      %v2049 = vpop.f32.mrf.mxu0
      %v2050 = vadd.f32 0.0, %v2049
      %2051 = vmatmul.bf16.gmra.mxu0 %v2030
      %v2052 = vpop.f32.mrf.mxu0
      %v2053 = vadd.f32 0.0, %v2052
      %v2054 = vpop.f32.mrf.mxu0
      %v2055 = vadd.f32 0.0, %v2054
      %2056 = vmatmul.bf16.gmra.mxu0 %v2033
      %v2057 = vpop.f32.mrf.mxu0
      %v2058 = vadd.f32 0.0, %v2057
      %v2059 = vpop.f32.mrf.mxu0
      %v2060 = vadd.f32 0.0, %v2059
      %2061 = vmatmul.bf16.gmra.mxu0 %v2036
      %v2062 = vpop.f32.mrf.mxu0
      %v2063 = vadd.f32 0.0, %v2062
      %v2064 = vpop.f32.mrf.mxu0
      %v2065 = vadd.f32 0.0, %v2064
      %2066 = vdwg.mxu0
      %2075 = vrot.lane.b32.xlu0 %v2048, 8
      %v2076 = vpop.permute.xlu0 %2075
      %2077 = vrot.lane.b32.xlu0 %v2050, 8
      %v2078 = vpop.permute.xlu0 %2077
      %2079 = vrot.lane.b32.xlu0 %v2053, 8
      %v2080 = vpop.permute.xlu0 %2079
      %2081 = vrot.lane.b32.xlu0 %v2055, 8
      %v2082 = vpop.permute.xlu0 %2081
      %2083 = vrot.lane.b32.xlu0 %v2058, 8
      %v2084 = vpop.permute.xlu0 %2083
      %2085 = vrot.lane.b32.xlu0 %v2060, 8
      %v2086 = vpop.permute.xlu0 %2085
      %2087 = vrot.lane.b32.xlu0 %v2063, 8
      %v2088 = vpop.permute.xlu0 %2087
      %2089 = vrot.lane.b32.xlu0 %v2065, 8
      %v2090 = vpop.permute.xlu0 %2089
      %vm2099 = vcmask 130112
      %2100 = vst.msk [vmem:[#allocation4] sm:$0xff] %vm2099, %v2076
      %2101 = vst.msk [vmem:[#allocation4 + $0x8] sm:$0xff] %vm2099, %v2078
      %2102 = vst.msk [vmem:[#allocation4 + $0x10] sm:$0xff] %vm2099, %v2080
      %2103 = vst.msk [vmem:[#allocation4 + $0x18] sm:$0xff] %vm2099, %v2082
      %2104 = vst.msk [vmem:[#allocation4 + $0x20] sm:$0xff] %vm2099, %v2084
      %2105 = vst.msk [vmem:[#allocation4 + $0x28] sm:$0xff] %vm2099, %v2086
      %2106 = vst.msk [vmem:[#allocation4 + $0x30] sm:$0xff] %vm2099, %v2088
      %2107 = vst.msk [vmem:[#allocation4 + $0x38] sm:$0xff] %vm2099, %v2090
      %s2108 = scalar_lea.vmem %s6, 32
      %v2109 = vld [vmem:[%s2108] sm:$0xf]
      %v2110 = vld [vmem:[%s2108 + $0x4] sm:$0xf]
      %v2111 = vld [vmem:[%s2108 + $0x8] sm:$0xf]
      %v2112 = vld [vmem:[%s2108 + $0xc] sm:$0xf]
      %v2117 = vunpack.c.l.b16 %v2109
      %v2118 = vunpack.c.l.b16 %v2110
      %v2119 = vunpack.c.l.b16 %v2111
      %v2120 = vunpack.c.l.b16 %v2112
      %v2121 = vpack.c.b16 %v2118, %v2117
      %v2122 = vpack.c.b16 %v2120, %v2119
      %2125 = vmatpush.bf16.msra.mxu0 0
      %2126 = vmatpush.bf16.msra.mxu0 0
      %2127 = vmatpush.bf16.msra.mxu0 0
      %2128 = vmatpush.bf16.msra.mxu0 0
      %2129 = vmatpush.bf16.msra.mxu0 0
      %2130 = vmatpush.bf16.msra.mxu0 0
      %2131 = vmatpush.bf16.msra.mxu0 %v2122
      %2132 = vmatpush.bf16.msra.mxu0 %v2121
      %2133 = vmatmul.bf16.gmra.mxu0 %v1360
      %v2134 = vpop.f32.mrf.mxu0
      %v2135 = vadd.f32 0.0, %v2134
      %v2136 = vpop.f32.mrf.mxu0
      %v2137 = vadd.f32 0.0, %v2136
      %2138 = vmatmul.bf16.gmra.mxu0 %v1363
      %v2139 = vpop.f32.mrf.mxu0
      %v2140 = vadd.f32 0.0, %v2139
      %v2141 = vpop.f32.mrf.mxu0
      %v2142 = vadd.f32 0.0, %v2141
      %2143 = vmatmul.bf16.gmra.mxu0 %v1366
      %v2144 = vpop.f32.mrf.mxu0
      %v2145 = vadd.f32 0.0, %v2144
      %v2146 = vpop.f32.mrf.mxu0
      %v2147 = vadd.f32 0.0, %v2146
      %2148 = vmatmul.bf16.gmra.mxu0 %v1369
      %v2149 = vpop.f32.mrf.mxu0
      %v2150 = vadd.f32 0.0, %v2149
      %v2151 = vpop.f32.mrf.mxu0
      %v2152 = vadd.f32 0.0, %v2151
      %2153 = vdwg.mxu0
      %s2154 = scalar_lea.vmem %s7, 32
      %v2155 = vld [vmem:[%s2154] sm:$0xf]
      %v2156 = vld [vmem:[%s2154 + $0x4] sm:$0xf]
      %v2157 = vld [vmem:[%s2154 + $0x8] sm:$0xf]
      %v2158 = vld [vmem:[%s2154 + $0xc] sm:$0xf]
      %v2163 = vunpack.c.l.b16 %v2155
      %v2164 = vunpack.c.l.b16 %v2156
      %v2165 = vunpack.c.l.b16 %v2157
      %v2166 = vunpack.c.l.b16 %v2158
      %v2167 = vpack.c.b16 %v2164, %v2163
      %v2168 = vpack.c.b16 %v2166, %v2165
      %2171 = vmatpush.bf16.msra.mxu0 0
      %2172 = vmatpush.bf16.msra.mxu0 0
      %2173 = vmatpush.bf16.msra.mxu0 0
      %2174 = vmatpush.bf16.msra.mxu0 0
      %2175 = vmatpush.bf16.msra.mxu0 0
      %2176 = vmatpush.bf16.msra.mxu0 0
      %2177 = vmatpush.bf16.msra.mxu0 %v2168
      %2178 = vmatpush.bf16.msra.mxu0 %v2167
      %2179 = vmatmul.bf16.gmra.mxu0 %v1360
      %v2180 = vpop.f32.mrf.mxu0
      %v2181 = vadd.f32 0.0, %v2180
      %v2182 = vpop.f32.mrf.mxu0
      %v2183 = vadd.f32 0.0, %v2182
      %2184 = vmatmul.bf16.gmra.mxu0 %v1363
      %v2185 = vpop.f32.mrf.mxu0
      %v2186 = vadd.f32 0.0, %v2185
      %v2187 = vpop.f32.mrf.mxu0
      %v2188 = vadd.f32 0.0, %v2187
      %2189 = vmatmul.bf16.gmra.mxu0 %v1366
      %v2190 = vpop.f32.mrf.mxu0
      %v2191 = vadd.f32 0.0, %v2190
      %v2192 = vpop.f32.mrf.mxu0
      %v2193 = vadd.f32 0.0, %v2192
      %2194 = vmatmul.bf16.gmra.mxu0 %v1369
      %v2195 = vpop.f32.mrf.mxu0
      %v2196 = vadd.f32 0.0, %v2195
      %v2197 = vpop.f32.mrf.mxu0
      %v2198 = vadd.f32 0.0, %v2197
      %2199 = vdwg.mxu0
      %s2200 = scalar_lea.vmem %s8, 32
      %v2201 = vld [vmem:[%s2200] sm:$0xf]
      %v2202 = vld [vmem:[%s2200 + $0x4] sm:$0xf]
      %v2203 = vld [vmem:[%s2200 + $0x8] sm:$0xf]
      %v2204 = vld [vmem:[%s2200 + $0xc] sm:$0xf]
      %v2209 = vunpack.c.l.b16 %v2201
      %v2210 = vunpack.c.l.b16 %v2202
      %v2211 = vunpack.c.l.b16 %v2203
      %v2212 = vunpack.c.l.b16 %v2204
      %v2213 = vpack.c.b16 %v2210, %v2209
      %v2214 = vpack.c.b16 %v2212, %v2211
      %2217 = vmatpush.bf16.msra.mxu0 0
      %2218 = vmatpush.bf16.msra.mxu0 0
      %2219 = vmatpush.bf16.msra.mxu0 0
      %2220 = vmatpush.bf16.msra.mxu0 0
      %2221 = vmatpush.bf16.msra.mxu0 0
      %2222 = vmatpush.bf16.msra.mxu0 0
      %2223 = vmatpush.bf16.msra.mxu0 %v2214
      %2224 = vmatpush.bf16.msra.mxu0 %v2213
      %2225 = vmatmul.bf16.gmra.mxu0 %v1360
      %v2226 = vpop.f32.mrf.mxu0
      %v2227 = vadd.f32 0.0, %v2226
      %v2228 = vpop.f32.mrf.mxu0
      %v2229 = vadd.f32 0.0, %v2228
      %2230 = vmatmul.bf16.gmra.mxu0 %v1363
      %v2231 = vpop.f32.mrf.mxu0
      %v2232 = vadd.f32 0.0, %v2231
      %v2233 = vpop.f32.mrf.mxu0
      %v2234 = vadd.f32 0.0, %v2233
      %2235 = vmatmul.bf16.gmra.mxu0 %v1366
      %v2236 = vpop.f32.mrf.mxu0
      %v2237 = vadd.f32 0.0, %v2236
      %v2238 = vpop.f32.mrf.mxu0
      %v2239 = vadd.f32 0.0, %v2238
      %2240 = vmatmul.bf16.gmra.mxu0 %v1369
      %v2241 = vpop.f32.mrf.mxu0
      %v2242 = vadd.f32 0.0, %v2241
      %v2243 = vpop.f32.mrf.mxu0
      %v2244 = vadd.f32 0.0, %v2243
      %2245 = vdwg.mxu0
      %v2246 = vpack.c.bf16 %v2137, %v2135
      %v2247 = vpack.c.bf16 %v2142, %v2140
      %v2248 = vpack.c.bf16 %v2147, %v2145
      %v2249 = vpack.c.bf16 %v2152, %v2150
      %v2250 = vpack.c.bf16 %v2183, %v2181
      %v2251 = vpack.c.bf16 %v2188, %v2186
      %v2252 = vpack.c.bf16 %v2193, %v2191
      %v2253 = vpack.c.bf16 %v2198, %v2196
      %s2254 = scalar_lea.vmem %s1, 64
      %v2255 = vld [vmem:[%s2254] sm:$0xf]
      %v2256 = vld [vmem:[%s2254 + $0x4] sm:$0xf]
      %v2257 = vld [vmem:[%s2254 + $0x8] sm:$0xf]
      %v2258 = vld [vmem:[%s2254 + $0xc] sm:$0xf]
      %v2259 = vld [vmem:[%s2254 + $0x10] sm:$0xf]
      %v2260 = vld [vmem:[%s2254 + $0x14] sm:$0xf]
      %v2261 = vld [vmem:[%s2254 + $0x18] sm:$0xf]
      %v2262 = vld [vmem:[%s2254 + $0x1c] sm:$0xf]
      %v2263 = vunpack.c.l.bf16 %v2255
      %v2264 = vunpack.c.l.bf16 %v2256
      %v2265 = vunpack.c.l.bf16 %v2257
      %v2266 = vunpack.c.l.bf16 %v2258
      %v2267 = vunpack.c.l.bf16 %v2259
      %v2268 = vunpack.c.l.bf16 %v2260
      %v2269 = vunpack.c.l.bf16 %v2261
      %v2270 = vunpack.c.l.bf16 %v2262
      %v2272 = vsel %vm1514, %v2246, 0
      %v2275 = vsel %vm1514, %v2247, 0
      %v2278 = vsel %vm1514, %v2248, 0
      %v2281 = vsel %vm1514, %v2249, 0
      %v2284 = vsel %vm1514, %v2250, 0
      %v2287 = vsel %vm1514, %v2251, 0
      %v2290 = vsel %vm1514, %v2252, 0
      %v2293 = vsel %vm1514, %v2253, 0
      %2295 = vmatpush.bf16.xpose.msra.mxu0 0
      %2296 = vmatpush.bf16.xpose.msra.mxu0 0
      %2297 = vmatpush.bf16.xpose.msra.mxu0 0
      %2298 = vmatpush.bf16.xpose.msra.mxu0 0
      %2299 = vmatpush.bf16.xpose.msra.mxu0 %v2293
      %2300 = vmatpush.bf16.xpose.msra.mxu0 %v2290
      %2301 = vmatpush.bf16.xpose.msra.mxu0 %v2287
      %2302 = vmatpush.bf16.xpose.msra.mxu0 %v2284
      %2303 = vmatmul.bf16.gmra.mxu0 %v2272
      %v2304 = vpop.f32.mrf.mxu0
      %v2305 = vadd.f32 %v2263, %v2304
      %v2306 = vpop.f32.mrf.mxu0
      %v2307 = vadd.f32 %v2264, %v2306
      %2308 = vmatmul.bf16.gmra.mxu0 %v2275
      %v2309 = vpop.f32.mrf.mxu0
      %v2310 = vadd.f32 %v2265, %v2309
      %v2311 = vpop.f32.mrf.mxu0
      %v2312 = vadd.f32 %v2266, %v2311
      %2313 = vmatmul.bf16.gmra.mxu0 %v2278
      %v2314 = vpop.f32.mrf.mxu0
      %v2315 = vadd.f32 %v2267, %v2314
      %v2316 = vpop.f32.mrf.mxu0
      %v2317 = vadd.f32 %v2268, %v2316
      %2318 = vmatmul.bf16.gmra.mxu0 %v2281
      %v2319 = vpop.f32.mrf.mxu0
      %v2320 = vadd.f32 %v2269, %v2319
      %v2321 = vpop.f32.mrf.mxu0
      %v2322 = vadd.f32 %v2270, %v2321
      %2323 = vdwg.mxu0
      %v2324 = vsel %vm1568, %v2305, -inf
      %2325 = vmax.xlane.f32.xlu0 %v2324
      %v2326 = vpop.xlane.xlu0 %2325
      %v2327 = vsel %vm1568, %v2307, -inf
      %2328 = vmax.xlane.f32.xlu0 %v2327
      %v2329 = vpop.xlane.xlu0 %2328
      %v2330 = vsel %vm1568, %v2310, -inf
      %2331 = vmax.xlane.f32.xlu0 %v2330
      %v2332 = vpop.xlane.xlu0 %2331
      %v2333 = vsel %vm1568, %v2312, -inf
      %2334 = vmax.xlane.f32.xlu0 %v2333
      %v2335 = vpop.xlane.xlu0 %2334
      %v2336 = vsel %vm1568, %v2315, -inf
      %2337 = vmax.xlane.f32.xlu0 %v2336
      %v2338 = vpop.xlane.xlu0 %2337
      %v2339 = vsel %vm1568, %v2317, -inf
      %2340 = vmax.xlane.f32.xlu0 %v2339
      %v2341 = vpop.xlane.xlu0 %2340
      %v2342 = vsel %vm1568, %v2320, -inf
      %2343 = vmax.xlane.f32.xlu0 %v2342
      %v2344 = vpop.xlane.xlu0 %2343
      %v2345 = vsel %vm1568, %v2322, -inf
      %2346 = vmax.xlane.f32.xlu0 %v2345
      %v2347 = vpop.xlane.xlu0 %2346
      %v2348 = vsub.f32 %v2305, %v2326
      %v2349 = vsub.f32 %v2307, %v2329
      %v2350 = vsub.f32 %v2310, %v2332
      %v2351 = vsub.f32 %v2312, %v2335
      %v2352 = vsub.f32 %v2315, %v2338
      %v2353 = vsub.f32 %v2317, %v2341
      %v2354 = vsub.f32 %v2320, %v2344
      %v2355 = vsub.f32 %v2322, %v2347
      %v2356 = vmul.f32 %v2348, 1.442695
      %v2357 = vpow.pop %v2356
      %v2358 = vmul.f32 %v2349, 1.442695
      %v2359 = vpow.pop %v2358
      %v2360 = vmul.f32 %v2350, 1.442695
      %v2361 = vpow.pop %v2360
      %v2362 = vmul.f32 %v2351, 1.442695
      %v2363 = vpow.pop %v2362
      %v2364 = vmul.f32 %v2352, 1.442695
      %v2365 = vpow.pop %v2364
      %v2366 = vmul.f32 %v2353, 1.442695
      %v2367 = vpow.pop %v2366
      %v2368 = vmul.f32 %v2354, 1.442695
      %v2369 = vpow.pop %v2368
      %v2370 = vmul.f32 %v2355, 1.442695
      %v2371 = vpow.pop %v2370
      %v2372 = vsel %vm1568, %v2357, 0.0
      %2373 = vadd.xlane.f32.xlu0 %v2372
      %v2374 = vpop.xlane.xlu0 %2373
      %v2375 = vsel %vm1568, %v2359, 0.0
      %2376 = vadd.xlane.f32.xlu0 %v2375
      %v2377 = vpop.xlane.xlu0 %2376
      %v2378 = vsel %vm1568, %v2361, 0.0
      %2379 = vadd.xlane.f32.xlu0 %v2378
      %v2380 = vpop.xlane.xlu0 %2379
      %v2381 = vsel %vm1568, %v2363, 0.0
      %2382 = vadd.xlane.f32.xlu0 %v2381
      %v2383 = vpop.xlane.xlu0 %2382
      %v2384 = vsel %vm1568, %v2365, 0.0
      %2385 = vadd.xlane.f32.xlu0 %v2384
      %v2386 = vpop.xlane.xlu0 %2385
      %v2387 = vsel %vm1568, %v2367, 0.0
      %2388 = vadd.xlane.f32.xlu0 %v2387
      %v2389 = vpop.xlane.xlu0 %2388
      %v2390 = vsel %vm1568, %v2369, 0.0
      %2391 = vadd.xlane.f32.xlu0 %v2390
      %v2392 = vpop.xlane.xlu0 %2391
      %v2393 = vsel %vm1568, %v2371, 0.0
      %2394 = vadd.xlane.f32.xlu0 %v2393
      %v2395 = vpop.xlane.xlu0 %2394
      %v2396 = vrcp.pop %v2374
      %v2397 = vrcp.pop %v2377
      %v2398 = vrcp.pop %v2380
      %v2399 = vrcp.pop %v2383
      %v2400 = vrcp.pop %v2386
      %v2401 = vrcp.pop %v2389
      %v2402 = vrcp.pop %v2392
      %v2403 = vrcp.pop %v2395
      %v2404 = vmul.f32 %v2357, %v2396
      %v2405 = vmul.f32 %v2359, %v2397
      %v2406 = vmul.f32 %v2361, %v2398
      %v2407 = vmul.f32 %v2363, %v2399
      %v2408 = vmul.f32 %v2365, %v2400
      %v2409 = vmul.f32 %v2367, %v2401
      %v2410 = vmul.f32 %v2369, %v2402
      %v2411 = vmul.f32 %v2371, %v2403
      %v2412 = vpack.c.bf16 %v2405, %v2404
      %v2413 = vpack.c.bf16 %v2407, %v2406
      %v2414 = vpack.c.bf16 %v2409, %v2408
      %v2415 = vpack.c.bf16 %v2411, %v2410
      %v2416 = vpack.c.bf16 %v2229, %v2227
      %v2417 = vpack.c.bf16 %v2234, %v2232
      %v2418 = vpack.c.bf16 %v2239, %v2237
      %v2419 = vpack.c.bf16 %v2244, %v2242
      %v2421 = vsel %vm1568, %v2412, 0
      %v2424 = vsel %vm1568, %v2413, 0
      %v2427 = vsel %vm1568, %v2414, 0
      %v2430 = vsel %vm1568, %v2415, 0
      %2432 = vmatpush.bf16.msra.mxu0 0
      %2433 = vmatpush.bf16.msra.mxu0 0
      %2434 = vmatpush.bf16.msra.mxu0 0
      %2435 = vmatpush.bf16.msra.mxu0 0
      %2436 = vmatpush.bf16.msra.mxu0 %v2419
      %2437 = vmatpush.bf16.msra.mxu0 %v2418
      %2438 = vmatpush.bf16.msra.mxu0 %v2417
      %2439 = vmatpush.bf16.msra.mxu0 %v2416
      %2440 = vmatmul.bf16.gmra.mxu0 %v2421
      %v2441 = vpop.f32.mrf.mxu0
      %v2442 = vadd.f32 0.0, %v2441
      %v2443 = vpop.f32.mrf.mxu0
      %v2444 = vadd.f32 0.0, %v2443
      %2445 = vmatmul.bf16.gmra.mxu0 %v2424
      %v2446 = vpop.f32.mrf.mxu0
      %v2447 = vadd.f32 0.0, %v2446
      %v2448 = vpop.f32.mrf.mxu0
      %v2449 = vadd.f32 0.0, %v2448
      %2450 = vmatmul.bf16.gmra.mxu0 %v2427
      %v2451 = vpop.f32.mrf.mxu0
      %v2452 = vadd.f32 0.0, %v2451
      %v2453 = vpop.f32.mrf.mxu0
      %v2454 = vadd.f32 0.0, %v2453
      %2455 = vmatmul.bf16.gmra.mxu0 %v2430
      %v2456 = vpop.f32.mrf.mxu0
      %v2457 = vadd.f32 0.0, %v2456
      %v2458 = vpop.f32.mrf.mxu0
      %v2459 = vadd.f32 0.0, %v2458
      %2460 = vdwg.mxu0
      %2469 = vrot.lane.b32.xlu0 %v2442, 16
      %v2470 = vpop.permute.xlu0 %2469
      %2471 = vrot.lane.b32.xlu0 %v2444, 16
      %v2472 = vpop.permute.xlu0 %2471
      %2473 = vrot.lane.b32.xlu0 %v2447, 16
      %v2474 = vpop.permute.xlu0 %2473
      %2475 = vrot.lane.b32.xlu0 %v2449, 16
      %v2476 = vpop.permute.xlu0 %2475
      %2477 = vrot.lane.b32.xlu0 %v2452, 16
      %v2478 = vpop.permute.xlu0 %2477
      %2479 = vrot.lane.b32.xlu0 %v2454, 16
      %v2480 = vpop.permute.xlu0 %2479
      %2481 = vrot.lane.b32.xlu0 %v2457, 16
      %v2482 = vpop.permute.xlu0 %2481
      %2483 = vrot.lane.b32.xlu0 %v2459, 16
      %v2484 = vpop.permute.xlu0 %2483
      %vm2493 = vcmask 195712
      %2494 = vst.msk [vmem:[#allocation4] sm:$0xff] %vm2493, %v2470
      %2495 = vst.msk [vmem:[#allocation4 + $0x8] sm:$0xff] %vm2493, %v2472
      %2496 = vst.msk [vmem:[#allocation4 + $0x10] sm:$0xff] %vm2493, %v2474
      %2497 = vst.msk [vmem:[#allocation4 + $0x18] sm:$0xff] %vm2493, %v2476
      %2498 = vst.msk [vmem:[#allocation4 + $0x20] sm:$0xff] %vm2493, %v2478
      %2499 = vst.msk [vmem:[#allocation4 + $0x28] sm:$0xff] %vm2493, %v2480
      %2500 = vst.msk [vmem:[#allocation4 + $0x30] sm:$0xff] %vm2493, %v2482
      %2501 = vst.msk [vmem:[#allocation4 + $0x38] sm:$0xff] %vm2493, %v2484
      %s2502 = scalar_lea.vmem %s6, 48
      %v2503 = vld [vmem:[%s2502] sm:$0xf]
      %v2504 = vld [vmem:[%s2502 + $0x4] sm:$0xf]
      %v2505 = vld [vmem:[%s2502 + $0x8] sm:$0xf]
      %v2506 = vld [vmem:[%s2502 + $0xc] sm:$0xf]
      %v2511 = vunpack.c.l.b16 %v2503
      %v2512 = vunpack.c.l.b16 %v2504
      %v2513 = vunpack.c.l.b16 %v2505
      %v2514 = vunpack.c.l.b16 %v2506
      %v2515 = vpack.c.b16 %v2512, %v2511
      %v2516 = vpack.c.b16 %v2514, %v2513
      %2519 = vmatpush.bf16.msra.mxu0 0
      %2520 = vmatpush.bf16.msra.mxu0 0
      %2521 = vmatpush.bf16.msra.mxu0 0
      %2522 = vmatpush.bf16.msra.mxu0 0
      %2523 = vmatpush.bf16.msra.mxu0 0
      %2524 = vmatpush.bf16.msra.mxu0 0
      %2525 = vmatpush.bf16.msra.mxu0 %v2516
      %2526 = vmatpush.bf16.msra.mxu0 %v2515
      %2527 = vmatmul.bf16.gmra.mxu0 %v1360
      %v2528 = vpop.f32.mrf.mxu0
      %v2529 = vadd.f32 0.0, %v2528
      %v2530 = vpop.f32.mrf.mxu0
      %v2531 = vadd.f32 0.0, %v2530
      %2532 = vmatmul.bf16.gmra.mxu0 %v1363
      %v2533 = vpop.f32.mrf.mxu0
      %v2534 = vadd.f32 0.0, %v2533
      %v2535 = vpop.f32.mrf.mxu0
      %v2536 = vadd.f32 0.0, %v2535
      %2537 = vmatmul.bf16.gmra.mxu0 %v1366
      %v2538 = vpop.f32.mrf.mxu0
      %v2539 = vadd.f32 0.0, %v2538
      %v2540 = vpop.f32.mrf.mxu0
      %v2541 = vadd.f32 0.0, %v2540
      %2542 = vmatmul.bf16.gmra.mxu0 %v1369
      %v2543 = vpop.f32.mrf.mxu0
      %v2544 = vadd.f32 0.0, %v2543
      %v2545 = vpop.f32.mrf.mxu0
      %v2546 = vadd.f32 0.0, %v2545
      %2547 = vdwg.mxu0
      %s2548 = scalar_lea.vmem %s7, 48
      %v2549 = vld [vmem:[%s2548] sm:$0xf]
      %v2550 = vld [vmem:[%s2548 + $0x4] sm:$0xf]
      %v2551 = vld [vmem:[%s2548 + $0x8] sm:$0xf]
      %v2552 = vld [vmem:[%s2548 + $0xc] sm:$0xf]
      %v2557 = vunpack.c.l.b16 %v2549
      %v2558 = vunpack.c.l.b16 %v2550
      %v2559 = vunpack.c.l.b16 %v2551
      %v2560 = vunpack.c.l.b16 %v2552
      %v2561 = vpack.c.b16 %v2558, %v2557
      %v2562 = vpack.c.b16 %v2560, %v2559
      %2565 = vmatpush.bf16.msra.mxu0 0
      %2566 = vmatpush.bf16.msra.mxu0 0
      %2567 = vmatpush.bf16.msra.mxu0 0
      %2568 = vmatpush.bf16.msra.mxu0 0
      %2569 = vmatpush.bf16.msra.mxu0 0
      %2570 = vmatpush.bf16.msra.mxu0 0
      %2571 = vmatpush.bf16.msra.mxu0 %v2562
      %2572 = vmatpush.bf16.msra.mxu0 %v2561
      %2573 = vmatmul.bf16.gmra.mxu0 %v1360
      %v2574 = vpop.f32.mrf.mxu0
      %v2575 = vadd.f32 0.0, %v2574
      %v2576 = vpop.f32.mrf.mxu0
      %v2577 = vadd.f32 0.0, %v2576
      %2578 = vmatmul.bf16.gmra.mxu0 %v1363
      %v2579 = vpop.f32.mrf.mxu0
      %v2580 = vadd.f32 0.0, %v2579
      %v2581 = vpop.f32.mrf.mxu0
      %v2582 = vadd.f32 0.0, %v2581
      %2583 = vmatmul.bf16.gmra.mxu0 %v1366
      %v2584 = vpop.f32.mrf.mxu0
      %v2585 = vadd.f32 0.0, %v2584
      %v2586 = vpop.f32.mrf.mxu0
      %v2587 = vadd.f32 0.0, %v2586
      %2588 = vmatmul.bf16.gmra.mxu0 %v1369
      %v2589 = vpop.f32.mrf.mxu0
      %v2590 = vadd.f32 0.0, %v2589
      %v2591 = vpop.f32.mrf.mxu0
      %v2592 = vadd.f32 0.0, %v2591
      %2593 = vdwg.mxu0
      %s2594 = scalar_lea.vmem %s8, 48
      %v2595 = vld [vmem:[%s2594] sm:$0xf]
      %v2596 = vld [vmem:[%s2594 + $0x4] sm:$0xf]
      %v2597 = vld [vmem:[%s2594 + $0x8] sm:$0xf]
      %v2598 = vld [vmem:[%s2594 + $0xc] sm:$0xf]
      %v2603 = vunpack.c.l.b16 %v2595
      %v2604 = vunpack.c.l.b16 %v2596
      %v2605 = vunpack.c.l.b16 %v2597
      %v2606 = vunpack.c.l.b16 %v2598
      %v2607 = vpack.c.b16 %v2604, %v2603
      %v2608 = vpack.c.b16 %v2606, %v2605
      %2611 = vmatpush.bf16.msra.mxu0 0
      %2612 = vmatpush.bf16.msra.mxu0 0
      %2613 = vmatpush.bf16.msra.mxu0 0
      %2614 = vmatpush.bf16.msra.mxu0 0
      %2615 = vmatpush.bf16.msra.mxu0 0
      %2616 = vmatpush.bf16.msra.mxu0 0
      %2617 = vmatpush.bf16.msra.mxu0 %v2608
      %2618 = vmatpush.bf16.msra.mxu0 %v2607
      %2619 = vmatmul.bf16.gmra.mxu0 %v1360
      %v2620 = vpop.f32.mrf.mxu0
      %v2621 = vadd.f32 0.0, %v2620
      %v2622 = vpop.f32.mrf.mxu0
      %v2623 = vadd.f32 0.0, %v2622
      %2624 = vmatmul.bf16.gmra.mxu0 %v1363
      %v2625 = vpop.f32.mrf.mxu0
      %v2626 = vadd.f32 0.0, %v2625
      %v2627 = vpop.f32.mrf.mxu0
      %v2628 = vadd.f32 0.0, %v2627
      %2629 = vmatmul.bf16.gmra.mxu0 %v1366
      %v2630 = vpop.f32.mrf.mxu0
      %v2631 = vadd.f32 0.0, %v2630
      %v2632 = vpop.f32.mrf.mxu0
      %v2633 = vadd.f32 0.0, %v2632
      %2634 = vmatmul.bf16.gmra.mxu0 %v1369
      %v2635 = vpop.f32.mrf.mxu0
      %v2636 = vadd.f32 0.0, %v2635
      %v2637 = vpop.f32.mrf.mxu0
      %v2638 = vadd.f32 0.0, %v2637
      %2639 = vdwg.mxu0
      %v2640 = vpack.c.bf16 %v2531, %v2529
      %v2641 = vpack.c.bf16 %v2536, %v2534
      %v2642 = vpack.c.bf16 %v2541, %v2539
      %v2643 = vpack.c.bf16 %v2546, %v2544
      %v2644 = vpack.c.bf16 %v2577, %v2575
      %v2645 = vpack.c.bf16 %v2582, %v2580
      %v2646 = vpack.c.bf16 %v2587, %v2585
      %v2647 = vpack.c.bf16 %v2592, %v2590
      %s2648 = scalar_lea.vmem %s1, 96
      %v2649 = vld [vmem:[%s2648] sm:$0xf]
      %v2650 = vld [vmem:[%s2648 + $0x4] sm:$0xf]
      %v2651 = vld [vmem:[%s2648 + $0x8] sm:$0xf]
      %v2652 = vld [vmem:[%s2648 + $0xc] sm:$0xf]
      %v2653 = vld [vmem:[%s2648 + $0x10] sm:$0xf]
      %v2654 = vld [vmem:[%s2648 + $0x14] sm:$0xf]
      %v2655 = vld [vmem:[%s2648 + $0x18] sm:$0xf]
      %v2656 = vld [vmem:[%s2648 + $0x1c] sm:$0xf]
      %v2657 = vunpack.c.l.bf16 %v2649
      %v2658 = vunpack.c.l.bf16 %v2650
      %v2659 = vunpack.c.l.bf16 %v2651
      %v2660 = vunpack.c.l.bf16 %v2652
      %v2661 = vunpack.c.l.bf16 %v2653
      %v2662 = vunpack.c.l.bf16 %v2654
      %v2663 = vunpack.c.l.bf16 %v2655
      %v2664 = vunpack.c.l.bf16 %v2656
      %v2666 = vsel %vm1514, %v2640, 0
      %v2669 = vsel %vm1514, %v2641, 0
      %v2672 = vsel %vm1514, %v2642, 0
      %v2675 = vsel %vm1514, %v2643, 0
      %v2678 = vsel %vm1514, %v2644, 0
      %v2681 = vsel %vm1514, %v2645, 0
      %v2684 = vsel %vm1514, %v2646, 0
      %v2687 = vsel %vm1514, %v2647, 0
      %2689 = vmatpush.bf16.xpose.msra.mxu0 0
      %2690 = vmatpush.bf16.xpose.msra.mxu0 0
      %2691 = vmatpush.bf16.xpose.msra.mxu0 0
      %2692 = vmatpush.bf16.xpose.msra.mxu0 0
      %2693 = vmatpush.bf16.xpose.msra.mxu0 %v2687
      %2694 = vmatpush.bf16.xpose.msra.mxu0 %v2684
      %2695 = vmatpush.bf16.xpose.msra.mxu0 %v2681
      %2696 = vmatpush.bf16.xpose.msra.mxu0 %v2678
      %2697 = vmatmul.bf16.gmra.mxu0 %v2666
      %v2698 = vpop.f32.mrf.mxu0
      %v2699 = vadd.f32 %v2657, %v2698
      %v2700 = vpop.f32.mrf.mxu0
      %v2701 = vadd.f32 %v2658, %v2700
      %2702 = vmatmul.bf16.gmra.mxu0 %v2669
      %v2703 = vpop.f32.mrf.mxu0
      %v2704 = vadd.f32 %v2659, %v2703
      %v2705 = vpop.f32.mrf.mxu0
      %v2706 = vadd.f32 %v2660, %v2705
      %2707 = vmatmul.bf16.gmra.mxu0 %v2672
      %v2708 = vpop.f32.mrf.mxu0
      %v2709 = vadd.f32 %v2661, %v2708
      %v2710 = vpop.f32.mrf.mxu0
      %v2711 = vadd.f32 %v2662, %v2710
      %2712 = vmatmul.bf16.gmra.mxu0 %v2675
      %v2713 = vpop.f32.mrf.mxu0
      %v2714 = vadd.f32 %v2663, %v2713
      %v2715 = vpop.f32.mrf.mxu0
      %v2716 = vadd.f32 %v2664, %v2715
      %2717 = vdwg.mxu0
      %v2718 = vsel %vm1568, %v2699, -inf
      %2719 = vmax.xlane.f32.xlu0 %v2718
      %v2720 = vpop.xlane.xlu0 %2719
      %v2721 = vsel %vm1568, %v2701, -inf
      %2722 = vmax.xlane.f32.xlu0 %v2721
      %v2723 = vpop.xlane.xlu0 %2722
      %v2724 = vsel %vm1568, %v2704, -inf
      %2725 = vmax.xlane.f32.xlu0 %v2724
      %v2726 = vpop.xlane.xlu0 %2725
      %v2727 = vsel %vm1568, %v2706, -inf
      %2728 = vmax.xlane.f32.xlu0 %v2727
      %v2729 = vpop.xlane.xlu0 %2728
      %v2730 = vsel %vm1568, %v2709, -inf
      %2731 = vmax.xlane.f32.xlu0 %v2730
      %v2732 = vpop.xlane.xlu0 %2731
      %v2733 = vsel %vm1568, %v2711, -inf
      %2734 = vmax.xlane.f32.xlu0 %v2733
      %v2735 = vpop.xlane.xlu0 %2734
      %v2736 = vsel %vm1568, %v2714, -inf
      %2737 = vmax.xlane.f32.xlu0 %v2736
      %v2738 = vpop.xlane.xlu0 %2737
      %v2739 = vsel %vm1568, %v2716, -inf
      %2740 = vmax.xlane.f32.xlu0 %v2739
      %v2741 = vpop.xlane.xlu0 %2740
      %v2742 = vsub.f32 %v2699, %v2720
      %v2743 = vsub.f32 %v2701, %v2723
      %v2744 = vsub.f32 %v2704, %v2726
      %v2745 = vsub.f32 %v2706, %v2729
      %v2746 = vsub.f32 %v2709, %v2732
      %v2747 = vsub.f32 %v2711, %v2735
      %v2748 = vsub.f32 %v2714, %v2738
      %v2749 = vsub.f32 %v2716, %v2741
      %v2750 = vmul.f32 %v2742, 1.442695
      %v2751 = vpow.pop %v2750
      %v2752 = vmul.f32 %v2743, 1.442695
      %v2753 = vpow.pop %v2752
      %v2754 = vmul.f32 %v2744, 1.442695
      %v2755 = vpow.pop %v2754
      %v2756 = vmul.f32 %v2745, 1.442695
      %v2757 = vpow.pop %v2756
      %v2758 = vmul.f32 %v2746, 1.442695
      %v2759 = vpow.pop %v2758
      %v2760 = vmul.f32 %v2747, 1.442695
      %v2761 = vpow.pop %v2760
      %v2762 = vmul.f32 %v2748, 1.442695
      %v2763 = vpow.pop %v2762
      %v2764 = vmul.f32 %v2749, 1.442695
      %v2765 = vpow.pop %v2764
      %v2766 = vsel %vm1568, %v2751, 0.0
      %2767 = vadd.xlane.f32.xlu0 %v2766
      %v2768 = vpop.xlane.xlu0 %2767
      %v2769 = vsel %vm1568, %v2753, 0.0
      %2770 = vadd.xlane.f32.xlu0 %v2769
      %v2771 = vpop.xlane.xlu0 %2770
      %v2772 = vsel %vm1568, %v2755, 0.0
      %2773 = vadd.xlane.f32.xlu0 %v2772
      %v2774 = vpop.xlane.xlu0 %2773
      %v2775 = vsel %vm1568, %v2757, 0.0
      %2776 = vadd.xlane.f32.xlu0 %v2775
      %v2777 = vpop.xlane.xlu0 %2776
      %v2778 = vsel %vm1568, %v2759, 0.0
      %2779 = vadd.xlane.f32.xlu0 %v2778
      %v2780 = vpop.xlane.xlu0 %2779
      %v2781 = vsel %vm1568, %v2761, 0.0
      %2782 = vadd.xlane.f32.xlu0 %v2781
      %v2783 = vpop.xlane.xlu0 %2782
      %v2784 = vsel %vm1568, %v2763, 0.0
      %2785 = vadd.xlane.f32.xlu0 %v2784
      %v2786 = vpop.xlane.xlu0 %2785
      %v2787 = vsel %vm1568, %v2765, 0.0
      %2788 = vadd.xlane.f32.xlu0 %v2787
      %v2789 = vpop.xlane.xlu0 %2788
      %v2790 = vrcp.pop %v2768
      %v2791 = vrcp.pop %v2771
      %v2792 = vrcp.pop %v2774
      %v2793 = vrcp.pop %v2777
      %v2794 = vrcp.pop %v2780
      %v2795 = vrcp.pop %v2783
      %v2796 = vrcp.pop %v2786
      %v2797 = vrcp.pop %v2789
      %v2798 = vmul.f32 %v2751, %v2790
      %v2799 = vmul.f32 %v2753, %v2791
      %v2800 = vmul.f32 %v2755, %v2792
      %v2801 = vmul.f32 %v2757, %v2793
      %v2802 = vmul.f32 %v2759, %v2794
      %v2803 = vmul.f32 %v2761, %v2795
      %v2804 = vmul.f32 %v2763, %v2796
      %v2805 = vmul.f32 %v2765, %v2797
      %v2806 = vpack.c.bf16 %v2799, %v2798
      %v2807 = vpack.c.bf16 %v2801, %v2800
      %v2808 = vpack.c.bf16 %v2803, %v2802
      %v2809 = vpack.c.bf16 %v2805, %v2804
      %v2810 = vpack.c.bf16 %v2623, %v2621
      %v2811 = vpack.c.bf16 %v2628, %v2626
      %v2812 = vpack.c.bf16 %v2633, %v2631
      %v2813 = vpack.c.bf16 %v2638, %v2636
      %v2815 = vsel %vm1568, %v2806, 0
      %v2818 = vsel %vm1568, %v2807, 0
      %v2821 = vsel %vm1568, %v2808, 0
      %v2824 = vsel %vm1568, %v2809, 0
      %2826 = vmatpush.bf16.msra.mxu0 0
      %2827 = vmatpush.bf16.msra.mxu0 0
      %2828 = vmatpush.bf16.msra.mxu0 0
      %2829 = vmatpush.bf16.msra.mxu0 0
      %2830 = vmatpush.bf16.msra.mxu0 %v2813
      %2831 = vmatpush.bf16.msra.mxu0 %v2812
      %2832 = vmatpush.bf16.msra.mxu0 %v2811
      %2833 = vmatpush.bf16.msra.mxu0 %v2810
      %2834 = vmatmul.bf16.gmra.mxu0 %v2815
      %v2835 = vpop.f32.mrf.mxu0
      %v2836 = vadd.f32 0.0, %v2835
      %v2837 = vpop.f32.mrf.mxu0
      %v2838 = vadd.f32 0.0, %v2837
      %2839 = vmatmul.bf16.gmra.mxu0 %v2818
      %v2840 = vpop.f32.mrf.mxu0
      %v2841 = vadd.f32 0.0, %v2840
      %v2842 = vpop.f32.mrf.mxu0
      %v2843 = vadd.f32 0.0, %v2842
      %2844 = vmatmul.bf16.gmra.mxu0 %v2821
      %v2845 = vpop.f32.mrf.mxu0
      %v2846 = vadd.f32 0.0, %v2845
      %v2847 = vpop.f32.mrf.mxu0
      %v2848 = vadd.f32 0.0, %v2847
      %2849 = vmatmul.bf16.gmra.mxu0 %v2824
      %v2850 = vpop.f32.mrf.mxu0
      %v2851 = vadd.f32 0.0, %v2850
      %v2852 = vpop.f32.mrf.mxu0
      %v2853 = vadd.f32 0.0, %v2852
      %2854 = vdwg.mxu0
      %2863 = vrot.lane.b32.xlu0 %v2836, 24
      %v2864 = vpop.permute.xlu0 %2863
      %2865 = vrot.lane.b32.xlu0 %v2838, 24
      %v2866 = vpop.permute.xlu0 %2865
      %2867 = vrot.lane.b32.xlu0 %v2841, 24
      %v2868 = vpop.permute.xlu0 %2867
      %2869 = vrot.lane.b32.xlu0 %v2843, 24
      %v2870 = vpop.permute.xlu0 %2869
      %2871 = vrot.lane.b32.xlu0 %v2846, 24
      %v2872 = vpop.permute.xlu0 %2871
      %2873 = vrot.lane.b32.xlu0 %v2848, 24
      %v2874 = vpop.permute.xlu0 %2873
      %2875 = vrot.lane.b32.xlu0 %v2851, 24
      %v2876 = vpop.permute.xlu0 %2875
      %2877 = vrot.lane.b32.xlu0 %v2853, 24
      %v2878 = vpop.permute.xlu0 %2877
      %vm2887 = vcmask 261312
      %2888 = vst.msk [vmem:[#allocation4] sm:$0xff] %vm2887, %v2864
      %2889 = vst.msk [vmem:[#allocation4 + $0x8] sm:$0xff] %vm2887, %v2866
      %2890 = vst.msk [vmem:[#allocation4 + $0x10] sm:$0xff] %vm2887, %v2868
      %2891 = vst.msk [vmem:[#allocation4 + $0x18] sm:$0xff] %vm2887, %v2870
      %2892 = vst.msk [vmem:[#allocation4 + $0x20] sm:$0xff] %vm2887, %v2872
      %2893 = vst.msk [vmem:[#allocation4 + $0x28] sm:$0xff] %vm2887, %v2874
      %2894 = vst.msk [vmem:[#allocation4 + $0x30] sm:$0xff] %vm2887, %v2876
      %2895 = vst.msk [vmem:[#allocation4 + $0x38] sm:$0xff] %vm2887, %v2878
      %v2896 = vld [vmem:[#allocation4] sm:$0xff]
      %v2897 = vld [vmem:[#allocation4 + $0x8] sm:$0xff]
      %v2898 = vld [vmem:[#allocation4 + $0x10] sm:$0xff]
      %v2899 = vld [vmem:[#allocation4 + $0x18] sm:$0xff]
      %v2900 = vld [vmem:[#allocation4 + $0x20] sm:$0xff]
      %v2901 = vld [vmem:[#allocation4 + $0x28] sm:$0xff]
      %v2902 = vld [vmem:[#allocation4 + $0x30] sm:$0xff]
      %v2903 = vld [vmem:[#allocation4 + $0x38] sm:$0xff]
      %v2904 = vpack.c.bf16 %v2897, %v2896
      %v2905 = vpack.c.bf16 %v2899, %v2898
      %v2906 = vpack.c.bf16 %v2901, %v2900
      %v2907 = vpack.c.bf16 %v2903, %v2902
      %v2908 = vld [vmem:[%s9] sm:$0xf]
      %v2909 = vld [vmem:[%s9 + $0x4] sm:$0xf]
      %v2910 = vld [vmem:[%s9 + $0x8] sm:$0xf]
      %v2911 = vld [vmem:[%s9 + $0xc] sm:$0xf]
      %v2912 = vld [vmem:[%s10] sm:$0x1]
      %v2914 = vperm.slane %v2912, 0
      %v2920 = vunpack.c.l.b16 %v2908
      %v2921 = vunpack.c.l.b16 %v2909
      %v2922 = vunpack.c.l.b16 %v2910
      %v2923 = vunpack.c.l.b16 %v2911
      %v2924 = vpack.c.b16 %v2921, %v2920
      %v2925 = vpack.c.b16 %v2923, %v2922
      %v2929 = vsel %vm841, %v2904, 0
      %v2932 = vsel %vm841, %v2905, 0
      %v2935 = vsel %vm841, %v2906, 0
      %v2938 = vsel %vm841, %v2907, 0
      %2940 = vmatpush.bf16.msra.mxu0 0
      %2941 = vmatpush.bf16.msra.mxu0 0
      %2942 = vmatpush.bf16.msra.mxu0 0
      %2943 = vmatpush.bf16.msra.mxu0 0
      %2944 = vmatpush.bf16.msra.mxu0 0
      %2945 = vmatpush.bf16.msra.mxu0 0
      %2946 = vmatpush.bf16.msra.mxu0 %v2925
      %2947 = vmatpush.bf16.msra.mxu0 %v2924
      %2948 = vmatmul.bf16.gmra.mxu0 %v2929
      %v2949 = vpop.f32.mrf.mxu0
      %v2950 = vadd.f32 %v2914, %v2949
      %v2951 = vpop.f32.mrf.mxu0
      %v2952 = vadd.f32 %v2914, %v2951
      %2953 = vmatmul.bf16.gmra.mxu0 %v2932
      %v2954 = vpop.f32.mrf.mxu0
      %v2955 = vadd.f32 %v2914, %v2954
      %v2956 = vpop.f32.mrf.mxu0
      %v2957 = vadd.f32 %v2914, %v2956
      %2958 = vmatmul.bf16.gmra.mxu0 %v2935
      %v2959 = vpop.f32.mrf.mxu0
      %v2960 = vadd.f32 %v2914, %v2959
      %v2961 = vpop.f32.mrf.mxu0
      %v2962 = vadd.f32 %v2914, %v2961
      %2963 = vmatmul.bf16.gmra.mxu0 %v2938
      %v2964 = vpop.f32.mrf.mxu0
      %v2965 = vadd.f32 %v2914, %v2964
      %v2966 = vpop.f32.mrf.mxu0
      %v2967 = vadd.f32 %v2914, %v2966
      %2968 = vdwg.mxu0
      %v2969 = vadd.f32 %v1124, %v2950
      %v2970 = vadd.f32 %v1125, %v2952
      %v2971 = vadd.f32 %v1126, %v2955
      %v2972 = vadd.f32 %v1127, %v2957
      %v2973 = vadd.f32 %v1128, %v2960
      %v2974 = vadd.f32 %v1129, %v2962
      %v2975 = vadd.f32 %v1130, %v2965
      %v2976 = vadd.f32 %v1131, %v2967
      %v2977 = vsel %vm841, %v2969, 0.0
      %2978 = vadd.xlane.f32.xlu0 %v2977
      %v2979 = vpop.xlane.xlu0 %2978
      %v2980 = vsel %vm841, %v2970, 0.0
      %2981 = vadd.xlane.f32.xlu0 %v2980
      %v2982 = vpop.xlane.xlu0 %2981
      %v2983 = vsel %vm841, %v2971, 0.0
      %2984 = vadd.xlane.f32.xlu0 %v2983
      %v2985 = vpop.xlane.xlu0 %2984
      %v2986 = vsel %vm841, %v2972, 0.0
      %2987 = vadd.xlane.f32.xlu0 %v2986
      %v2988 = vpop.xlane.xlu0 %2987
      %v2989 = vsel %vm841, %v2973, 0.0
      %2990 = vadd.xlane.f32.xlu0 %v2989
      %v2991 = vpop.xlane.xlu0 %2990
      %v2992 = vsel %vm841, %v2974, 0.0
      %2993 = vadd.xlane.f32.xlu0 %v2992
      %v2994 = vpop.xlane.xlu0 %2993
      %v2995 = vsel %vm841, %v2975, 0.0
      %2996 = vadd.xlane.f32.xlu0 %v2995
      %v2997 = vpop.xlane.xlu0 %2996
      %v2998 = vsel %vm841, %v2976, 0.0
      %2999 = vadd.xlane.f32.xlu0 %v2998
      %v3000 = vpop.xlane.xlu0 %2999
      %v3001 = vmul.f32 %v2979, %v1162
      %v3002 = vmul.f32 %v2982, %v1162
      %v3003 = vmul.f32 %v2985, %v1162
      %v3004 = vmul.f32 %v2988, %v1162
      %v3005 = vmul.f32 %v2991, %v1162
      %v3006 = vmul.f32 %v2994, %v1162
      %v3007 = vmul.f32 %v2997, %v1162
      %v3008 = vmul.f32 %v3000, %v1162
      %v3009 = vsub.f32 %v2969, %v3001
      %v3010 = vsub.f32 %v2970, %v3002
      %v3011 = vsub.f32 %v2971, %v3003
      %v3012 = vsub.f32 %v2972, %v3004
      %v3013 = vsub.f32 %v2973, %v3005
      %v3014 = vsub.f32 %v2974, %v3006
      %v3015 = vsub.f32 %v2975, %v3007
      %v3016 = vsub.f32 %v2976, %v3008
      %v3017 = vmul.f32 %v3009, %v3009
      %v3018 = vmul.f32 %v3010, %v3010
      %v3019 = vmul.f32 %v3011, %v3011
      %v3020 = vmul.f32 %v3012, %v3012
      %v3021 = vmul.f32 %v3013, %v3013
      %v3022 = vmul.f32 %v3014, %v3014
      %v3023 = vmul.f32 %v3015, %v3015
      %v3024 = vmul.f32 %v3016, %v3016
      %v3025 = vsel %vm841, %v3017, 0.0
      %3026 = vadd.xlane.f32.xlu0 %v3025
      %v3027 = vpop.xlane.xlu0 %3026
      %v3028 = vsel %vm841, %v3018, 0.0
      %3029 = vadd.xlane.f32.xlu0 %v3028
      %v3030 = vpop.xlane.xlu0 %3029
      %v3031 = vsel %vm841, %v3019, 0.0
      %3032 = vadd.xlane.f32.xlu0 %v3031
      %v3033 = vpop.xlane.xlu0 %3032
      %v3034 = vsel %vm841, %v3020, 0.0
      %3035 = vadd.xlane.f32.xlu0 %v3034
      %v3036 = vpop.xlane.xlu0 %3035
      %v3037 = vsel %vm841, %v3021, 0.0
      %3038 = vadd.xlane.f32.xlu0 %v3037
      %v3039 = vpop.xlane.xlu0 %3038
      %v3040 = vsel %vm841, %v3022, 0.0
      %3041 = vadd.xlane.f32.xlu0 %v3040
      %v3042 = vpop.xlane.xlu0 %3041
      %v3043 = vsel %vm841, %v3023, 0.0
      %3044 = vadd.xlane.f32.xlu0 %v3043
      %v3045 = vpop.xlane.xlu0 %3044
      %v3046 = vsel %vm841, %v3024, 0.0
      %3047 = vadd.xlane.f32.xlu0 %v3046
      %v3048 = vpop.xlane.xlu0 %3047
      %v3049 = vmul.f32 %v3027, %v1162
      %v3050 = vmul.f32 %v3030, %v1162
      %v3051 = vmul.f32 %v3033, %v1162
      %v3052 = vmul.f32 %v3036, %v1162
      %v3053 = vmul.f32 %v3039, %v1162
      %v3054 = vmul.f32 %v3042, %v1162
      %v3055 = vmul.f32 %v3045, %v1162
      %v3056 = vmul.f32 %v3048, %v1162
      %v3057 = vadd.f32 %v3049, 1e-05
      %v3058 = vadd.f32 %v3050, 1e-05
      %v3059 = vadd.f32 %v3051, 1e-05
      %v3060 = vadd.f32 %v3052, 1e-05
      %v3061 = vadd.f32 %v3053, 1e-05
      %v3062 = vadd.f32 %v3054, 1e-05
      %v3063 = vadd.f32 %v3055, 1e-05
      %v3064 = vadd.f32 %v3056, 1e-05
      %v3065 = vrsqrt.pop %v3057
      %v3066 = vmul.f32 %v3065, %v3057
      %v3067 = vmul.f32 %v3066, %v3065
      %v3068 = vmul.f32 0.5, %v3067
      %v3069 = vsub.f32 1.5, %v3068
      %v3070 = vmul.f32 %v3065, %v3069
      %vm3071 = vweird.f32 %v3057
      %vm3072 = vweird.f32 %v3065
      %vm3073 = vmor %vm3071, %vm3072
      %v3074 = vsel %vm3073, %v3065, %v3070
      %v3075 = vrsqrt.pop %v3058
      %v3076 = vmul.f32 %v3075, %v3058
      %v3077 = vmul.f32 %v3076, %v3075
      %v3078 = vmul.f32 0.5, %v3077
      %v3079 = vsub.f32 1.5, %v3078
      %v3080 = vmul.f32 %v3075, %v3079
      %vm3081 = vweird.f32 %v3058
      %vm3082 = vweird.f32 %v3075
      %vm3083 = vmor %vm3081, %vm3082
      %v3084 = vsel %vm3083, %v3075, %v3080
      %v3085 = vrsqrt.pop %v3059
      %v3086 = vmul.f32 %v3085, %v3059
      %v3087 = vmul.f32 %v3086, %v3085
      %v3088 = vmul.f32 0.5, %v3087
      %v3089 = vsub.f32 1.5, %v3088
      %v3090 = vmul.f32 %v3085, %v3089
      %vm3091 = vweird.f32 %v3059
      %vm3092 = vweird.f32 %v3085
      %vm3093 = vmor %vm3091, %vm3092
      %v3094 = vsel %vm3093, %v3085, %v3090
      %v3095 = vrsqrt.pop %v3060
      %v3096 = vmul.f32 %v3095, %v3060
      %v3097 = vmul.f32 %v3096, %v3095
      %v3098 = vmul.f32 0.5, %v3097
      %v3099 = vsub.f32 1.5, %v3098
      %v3100 = vmul.f32 %v3095, %v3099
      %vm3101 = vweird.f32 %v3060
      %vm3102 = vweird.f32 %v3095
      %vm3103 = vmor %vm3101, %vm3102
      %v3104 = vsel %vm3103, %v3095, %v3100
      %v3105 = vrsqrt.pop %v3061
      %v3106 = vmul.f32 %v3105, %v3061
      %v3107 = vmul.f32 %v3106, %v3105
      %v3108 = vmul.f32 0.5, %v3107
      %v3109 = vsub.f32 1.5, %v3108
      %v3110 = vmul.f32 %v3105, %v3109
      %vm3111 = vweird.f32 %v3061
      %vm3112 = vweird.f32 %v3105
      %vm3113 = vmor %vm3111, %vm3112
      %v3114 = vsel %vm3113, %v3105, %v3110
      %v3115 = vrsqrt.pop %v3062
      %v3116 = vmul.f32 %v3115, %v3062
      %v3117 = vmul.f32 %v3116, %v3115
      %v3118 = vmul.f32 0.5, %v3117
      %v3119 = vsub.f32 1.5, %v3118
      %v3120 = vmul.f32 %v3115, %v3119
      %vm3121 = vweird.f32 %v3062
      %vm3122 = vweird.f32 %v3115
      %vm3123 = vmor %vm3121, %vm3122
      %v3124 = vsel %vm3123, %v3115, %v3120
      %v3125 = vrsqrt.pop %v3063
      %v3126 = vmul.f32 %v3125, %v3063
      %v3127 = vmul.f32 %v3126, %v3125
      %v3128 = vmul.f32 0.5, %v3127
      %v3129 = vsub.f32 1.5, %v3128
      %v3130 = vmul.f32 %v3125, %v3129
      %vm3131 = vweird.f32 %v3063
      %vm3132 = vweird.f32 %v3125
      %vm3133 = vmor %vm3131, %vm3132
      %v3134 = vsel %vm3133, %v3125, %v3130
      %v3135 = vrsqrt.pop %v3064
      %v3136 = vmul.f32 %v3135, %v3064
      %v3137 = vmul.f32 %v3136, %v3135
      %v3138 = vmul.f32 0.5, %v3137
      %v3139 = vsub.f32 1.5, %v3138
      %v3140 = vmul.f32 %v3135, %v3139
      %vm3141 = vweird.f32 %v3064
      %vm3142 = vweird.f32 %v3135
      %vm3143 = vmor %vm3141, %vm3142
      %v3144 = vsel %vm3143, %v3135, %v3140
      %v3145 = vmul.f32 %v3009, %v3074
      %v3146 = vmul.f32 %v3010, %v3084
      %v3147 = vmul.f32 %v3011, %v3094
      %v3148 = vmul.f32 %v3012, %v3104
      %v3149 = vmul.f32 %v3013, %v3114
      %v3150 = vmul.f32 %v3014, %v3124
      %v3151 = vmul.f32 %v3015, %v3134
      %v3152 = vmul.f32 %v3016, %v3144
      %v3153 = vld [vmem:[%s11] sm:$0x1]
      %v3155 = vperm.slane %v3153, 0
      %v3157 = vmul.f32 %v3145, %v3155
      %v3158 = vmul.f32 %v3146, %v3155
      %v3159 = vmul.f32 %v3147, %v3155
      %v3160 = vmul.f32 %v3148, %v3155
      %v3161 = vmul.f32 %v3149, %v3155
      %v3162 = vmul.f32 %v3150, %v3155
      %v3163 = vmul.f32 %v3151, %v3155
      %v3164 = vmul.f32 %v3152, %v3155
      %v3165 = vld [vmem:[%s12] sm:$0x1]
      %v3167 = vperm.slane %v3165, 0
      %v3169 = vadd.f32 %v3157, %v3167
      %v3170 = vadd.f32 %v3158, %v3167
      %v3171 = vadd.f32 %v3159, %v3167
      %v3172 = vadd.f32 %v3160, %v3167
      %v3173 = vadd.f32 %v3161, %v3167
      %v3174 = vadd.f32 %v3162, %v3167
      %v3175 = vadd.f32 %v3163, %v3167
      %v3176 = vadd.f32 %v3164, %v3167
      %v3177 = vpack.c.bf16 %v3170, %v3169
      %v3178 = vpack.c.bf16 %v3172, %v3171
      %v3179 = vpack.c.bf16 %v3174, %v3173
      %v3180 = vpack.c.bf16 %v3176, %v3175
      %v3181 = vld [vmem:[%s13] sm:$0xf]
      %v3182 = vld [vmem:[%s13 + $0x4] sm:$0xf]
      %v3183 = vld [vmem:[%s13 + $0x8] sm:$0xf]
      %v3184 = vld [vmem:[%s13 + $0xc] sm:$0xf]
      %v3185 = vld [vmem:[%s14] sm:$0x1]
      %v3187 = vperm.slane %v3185, 0
      %v3193 = vunpack.c.l.b16 %v3181
      %v3194 = vunpack.c.l.b16 %v3182
      %v3195 = vunpack.c.l.b16 %v3183
      %v3196 = vunpack.c.l.b16 %v3184
      %v3197 = vpack.c.b16 %v3194, %v3193
      %v3198 = vpack.c.b16 %v3196, %v3195
      %v3202 = vsel %vm841, %v3177, 0
      %v3205 = vsel %vm841, %v3178, 0
      %v3208 = vsel %vm841, %v3179, 0
      %v3211 = vsel %vm841, %v3180, 0
      %3213 = vmatpush.bf16.msra.mxu0 0
      %3214 = vmatpush.bf16.msra.mxu0 0
      %3215 = vmatpush.bf16.msra.mxu0 0
      %3216 = vmatpush.bf16.msra.mxu0 0
      %3217 = vmatpush.bf16.msra.mxu0 0
      %3218 = vmatpush.bf16.msra.mxu0 0
      %3219 = vmatpush.bf16.msra.mxu0 %v3198
      %3220 = vmatpush.bf16.msra.mxu0 %v3197
      %3221 = vmatmul.bf16.gmra.mxu0 %v3202
      %v3222 = vpop.f32.mrf.mxu0
      %v3223 = vadd.f32 %v3187, %v3222
      %v3224 = vpop.f32.mrf.mxu0
      %v3225 = vadd.f32 %v3187, %v3224
      %3226 = vmatmul.bf16.gmra.mxu0 %v3205
      %v3227 = vpop.f32.mrf.mxu0
      %v3228 = vadd.f32 %v3187, %v3227
      %v3229 = vpop.f32.mrf.mxu0
      %v3230 = vadd.f32 %v3187, %v3229
      %3231 = vmatmul.bf16.gmra.mxu0 %v3208
      %v3232 = vpop.f32.mrf.mxu0
      %v3233 = vadd.f32 %v3187, %v3232
      %v3234 = vpop.f32.mrf.mxu0
      %v3235 = vadd.f32 %v3187, %v3234
      %3236 = vmatmul.bf16.gmra.mxu0 %v3211
      %v3237 = vpop.f32.mrf.mxu0
      %v3238 = vadd.f32 %v3187, %v3237
      %v3239 = vpop.f32.mrf.mxu0
      %v3240 = vadd.f32 %v3187, %v3239
      %3241 = vdwg.mxu0
      %v3242 = vmul.f32 %v3223, 0.5
      %v3243 = vmul.f32 %v3225, 0.5
      %v3244 = vmul.f32 %v3228, 0.5
      %v3245 = vmul.f32 %v3230, 0.5
      %v3246 = vmul.f32 %v3233, 0.5
      %v3247 = vmul.f32 %v3235, 0.5
      %v3248 = vmul.f32 %v3238, 0.5
      %v3249 = vmul.f32 %v3240, 0.5
      %v3250 = vmul.f32 %v3223, 0.044715
      %v3251 = vmul.f32 %v3225, 0.044715
      %v3252 = vmul.f32 %v3228, 0.044715
      %v3253 = vmul.f32 %v3230, 0.044715
      %v3254 = vmul.f32 %v3233, 0.044715
      %v3255 = vmul.f32 %v3235, 0.044715
      %v3256 = vmul.f32 %v3238, 0.044715
      %v3257 = vmul.f32 %v3240, 0.044715
      %v3258 = vmul.f32 %v3250, %v3223
      %v3259 = vmul.f32 %v3251, %v3225
      %v3260 = vmul.f32 %v3252, %v3228
      %v3261 = vmul.f32 %v3253, %v3230
      %v3262 = vmul.f32 %v3254, %v3233
      %v3263 = vmul.f32 %v3255, %v3235
      %v3264 = vmul.f32 %v3256, %v3238
      %v3265 = vmul.f32 %v3257, %v3240
      %v3266 = vmul.f32 %v3258, %v3223
      %v3267 = vmul.f32 %v3259, %v3225
      %v3268 = vmul.f32 %v3260, %v3228
      %v3269 = vmul.f32 %v3261, %v3230
      %v3270 = vmul.f32 %v3262, %v3233
      %v3271 = vmul.f32 %v3263, %v3235
      %v3272 = vmul.f32 %v3264, %v3238
      %v3273 = vmul.f32 %v3265, %v3240
      %v3274 = vadd.f32 %v3223, %v3266
      %v3275 = vadd.f32 %v3225, %v3267
      %v3276 = vadd.f32 %v3228, %v3268
      %v3277 = vadd.f32 %v3230, %v3269
      %v3278 = vadd.f32 %v3233, %v3270
      %v3279 = vadd.f32 %v3235, %v3271
      %v3280 = vadd.f32 %v3238, %v3272
      %v3281 = vadd.f32 %v3240, %v3273
      %v3282 = vmul.f32 %v3274, 0.7978846
      %v3283 = vmul.f32 %v3275, 0.7978846
      %v3284 = vmul.f32 %v3276, 0.7978846
      %v3285 = vmul.f32 %v3277, 0.7978846
      %v3286 = vmul.f32 %v3278, 0.7978846
      %v3287 = vmul.f32 %v3279, 0.7978846
      %v3288 = vmul.f32 %v3280, 0.7978846
      %v3289 = vmul.f32 %v3281, 0.7978846
      %v3290 = vtanh.pop %v3282
      %v3291 = vtanh.pop %v3283
      %v3292 = vtanh.pop %v3284
      %v3293 = vtanh.pop %v3285
      %v3294 = vtanh.pop %v3286
      %v3295 = vtanh.pop %v3287
      %v3296 = vtanh.pop %v3288
      %v3297 = vtanh.pop %v3289
      %v3298 = vadd.f32 %v3290, 1.0
      %v3299 = vadd.f32 %v3291, 1.0
      %v3300 = vadd.f32 %v3292, 1.0
      %v3301 = vadd.f32 %v3293, 1.0
      %v3302 = vadd.f32 %v3294, 1.0
      %v3303 = vadd.f32 %v3295, 1.0
      %v3304 = vadd.f32 %v3296, 1.0
      %v3305 = vadd.f32 %v3297, 1.0
      %v3306 = vmul.f32 %v3242, %v3298
      %v3307 = vmul.f32 %v3243, %v3299
      %v3308 = vmul.f32 %v3244, %v3300
      %v3309 = vmul.f32 %v3245, %v3301
      %v3310 = vmul.f32 %v3246, %v3302
      %v3311 = vmul.f32 %v3247, %v3303
      %v3312 = vmul.f32 %v3248, %v3304
      %v3313 = vmul.f32 %v3249, %v3305
      %v3314 = vld [vmem:[%s15] sm:$0x1]
      %v3316 = vperm.slane %v3314, 0
      %v3318 = vmul.f32 %v3306, %v3316
      %v3319 = vmul.f32 %v3307, %v3316
      %v3320 = vmul.f32 %v3308, %v3316
      %v3321 = vmul.f32 %v3309, %v3316
      %v3322 = vmul.f32 %v3310, %v3316
      %v3323 = vmul.f32 %v3311, %v3316
      %v3324 = vmul.f32 %v3312, %v3316
      %v3325 = vmul.f32 %v3313, %v3316
      %v3326 = vld [vmem:[%s16] sm:$0x1]
      %v3328 = vperm.slane %v3326, 0
      %v3330 = vadd.f32 %v3318, %v3328
      %v3331 = vadd.f32 %v3319, %v3328
      %v3332 = vadd.f32 %v3320, %v3328
      %v3333 = vadd.f32 %v3321, %v3328
      %v3334 = vadd.f32 %v3322, %v3328
      %v3335 = vadd.f32 %v3323, %v3328
      %v3336 = vadd.f32 %v3324, %v3328
      %v3337 = vadd.f32 %v3325, %v3328
      %3338 = vst [vmem:[#allocation3] sm:$0xff] 0.0
      %3339 = vst [vmem:[#allocation3 + $0x8] sm:$0x1] 0.0
      %3340 = vst [vmem:[#allocation3 + $0x49] sm:$0xff] 0.0
      %3341 = vst [vmem:[#allocation3 + $0x51] sm:$0x1] 0.0
      %3342 = vst [vmem:[#allocation3 + $0x9] sm:$0xff] %v3330
      %3343 = vst [vmem:[#allocation3 + $0x11] sm:$0xff] %v3331
      %3344 = vst [vmem:[#allocation3 + $0x19] sm:$0xff] %v3332
      %3345 = vst [vmem:[#allocation3 + $0x21] sm:$0xff] %v3333
      %3346 = vst [vmem:[#allocation3 + $0x29] sm:$0xff] %v3334
      %3347 = vst [vmem:[#allocation3 + $0x31] sm:$0xff] %v3335
      %3348 = vst [vmem:[#allocation3 + $0x39] sm:$0xff] %v3336
      %3349 = vst [vmem:[#allocation3 + $0x41] sm:$0xff] %v3337
      %v3350 = vld [vmem:[%s17] sm:$0xff]
      %v3351 = vld [vmem:[%s17 + $0x8] sm:$0x1]
      %v3352 = vperm.slane %v3350, 4
      %v3353 = vmul.f32 %v3330, %v3352
      %v3354 = vmul.f32 %v3331, %v3352
      %v3355 = vmul.f32 %v3332, %v3352
      %v3356 = vmul.f32 %v3333, %v3352
      %v3357 = vmul.f32 %v3334, %v3352
      %v3358 = vmul.f32 %v3335, %v3352
      %v3359 = vmul.f32 %v3336, %v3352
      %v3360 = vmul.f32 %v3337, %v3352
      %v3361 = vld [vmem:[%s18] sm:$0x1]
      %v3363 = vperm.slane %v3361, 0
      %v3365 = vadd.f32 %v3353, %v3363
      %v3366 = vadd.f32 %v3354, %v3363
      %v3367 = vadd.f32 %v3355, %v3363
      %v3368 = vadd.f32 %v3356, %v3363
      %v3369 = vadd.f32 %v3357, %v3363
      %v3370 = vadd.f32 %v3358, %v3363
      %v3371 = vadd.f32 %v3359, %v3363
      %v3372 = vadd.f32 %v3360, %v3363
      %v3373 = vld [vmem:[#allocation3] sm:$0xff]
      %v3374 = vld [vmem:[#allocation3 + $0x8] sm:$0xff]
      %v3375 = vld [vmem:[#allocation3 + $0x10] sm:$0xff]
      %v3376 = vld [vmem:[#allocation3 + $0x18] sm:$0xff]
      %v3377 = vld [vmem:[#allocation3 + $0x20] sm:$0xff]
      %v3378 = vld [vmem:[#allocation3 + $0x28] sm:$0xff]
      %v3379 = vld [vmem:[#allocation3 + $0x30] sm:$0xff]
      %v3380 = vld [vmem:[#allocation3 + $0x38] sm:$0xff]
      %v3381 = vperm.slane %v3350, 0
      %v3382 = vmul.f32 %v3373, %v3381
      %v3383 = vmul.f32 %v3374, %v3381
      %v3384 = vmul.f32 %v3375, %v3381
      %v3385 = vmul.f32 %v3376, %v3381
      %v3386 = vmul.f32 %v3377, %v3381
      %v3387 = vmul.f32 %v3378, %v3381
      %v3388 = vmul.f32 %v3379, %v3381
      %v3389 = vmul.f32 %v3380, %v3381
      %v3390 = vsel %vm903, %v3382, 0.0
      %v3391 = vsel %vm904, %v3383, 0.0
      %v3392 = vsel %vm905, %v3384, 0.0
      %v3393 = vsel %vm906, %v3385, 0.0
      %v3394 = vsel %vm907, %v3386, 0.0
      %v3395 = vsel %vm908, %v3387, 0.0
      %v3396 = vsel %vm909, %v3388, 0.0
      %v3397 = vsel %vm910, %v3389, 0.0
      %v3398 = vadd.f32 %v3365, %v3390
      %v3399 = vadd.f32 %v3366, %v3391
      %v3400 = vadd.f32 %v3367, %v3392
      %v3401 = vadd.f32 %v3368, %v3393
      %v3402 = vadd.f32 %v3369, %v3394
      %v3403 = vadd.f32 %v3370, %v3395
      %v3404 = vadd.f32 %v3371, %v3396
      %v3405 = vadd.f32 %v3372, %v3397
      %v3406 = vld [vmem:[#allocation3 + $0x1] sm:$0xff]
      %v3407 = vld [vmem:[#allocation3 + $0x9] sm:$0xff]
      %v3408 = vld [vmem:[#allocation3 + $0x11] sm:$0xff]
      %v3409 = vld [vmem:[#allocation3 + $0x19] sm:$0xff]
      %v3410 = vld [vmem:[#allocation3 + $0x21] sm:$0xff]
      %v3411 = vld [vmem:[#allocation3 + $0x29] sm:$0xff]
      %v3412 = vld [vmem:[#allocation3 + $0x31] sm:$0xff]
      %v3413 = vld [vmem:[#allocation3 + $0x39] sm:$0xff]
      %v3414 = vperm.slane %v3350, 1
      %v3415 = vmul.f32 %v3406, %v3414
      %v3416 = vmul.f32 %v3407, %v3414
      %v3417 = vmul.f32 %v3408, %v3414
      %v3418 = vmul.f32 %v3409, %v3414
      %v3419 = vmul.f32 %v3410, %v3414
      %v3420 = vmul.f32 %v3411, %v3414
      %v3421 = vmul.f32 %v3412, %v3414
      %v3422 = vmul.f32 %v3413, %v3414
      %v3423 = vadd.f32 %v3398, %v3415
      %v3424 = vadd.f32 %v3399, %v3416
      %v3425 = vadd.f32 %v3400, %v3417
      %v3426 = vadd.f32 %v3401, %v3418
      %v3427 = vadd.f32 %v3402, %v3419
      %v3428 = vadd.f32 %v3403, %v3420
      %v3429 = vadd.f32 %v3404, %v3421
      %v3430 = vadd.f32 %v3405, %v3422
      %v3431 = vld [vmem:[#allocation3 + $0x2] sm:$0xff]
      %v3432 = vld [vmem:[#allocation3 + $0xa] sm:$0xff]
      %v3433 = vld [vmem:[#allocation3 + $0x12] sm:$0xff]
      %v3434 = vld [vmem:[#allocation3 + $0x1a] sm:$0xff]
      %v3435 = vld [vmem:[#allocation3 + $0x22] sm:$0xff]
      %v3436 = vld [vmem:[#allocation3 + $0x2a] sm:$0xff]
      %v3437 = vld [vmem:[#allocation3 + $0x32] sm:$0xff]
      %v3438 = vld [vmem:[#allocation3 + $0x3a] sm:$0xff]
      %v3439 = vperm.slane %v3350, 2
      %v3440 = vmul.f32 %v3431, %v3439
      %v3441 = vmul.f32 %v3432, %v3439
      %v3442 = vmul.f32 %v3433, %v3439
      %v3443 = vmul.f32 %v3434, %v3439
      %v3444 = vmul.f32 %v3435, %v3439
      %v3445 = vmul.f32 %v3436, %v3439
      %v3446 = vmul.f32 %v3437, %v3439
      %v3447 = vmul.f32 %v3438, %v3439
      %v3448 = vsel %vm977, %v3440, 0.0
      %v3449 = vsel %vm978, %v3441, 0.0
      %v3450 = vsel %vm979, %v3442, 0.0
      %v3451 = vsel %vm980, %v3443, 0.0
      %v3452 = vsel %vm981, %v3444, 0.0
      %v3453 = vsel %vm982, %v3445, 0.0
      %v3454 = vsel %vm983, %v3446, 0.0
      %v3455 = vsel %vm984, %v3447, 0.0
      %v3456 = vadd.f32 %v3423, %v3448
      %v3457 = vadd.f32 %v3424, %v3449
      %v3458 = vadd.f32 %v3425, %v3450
      %v3459 = vadd.f32 %v3426, %v3451
      %v3460 = vadd.f32 %v3427, %v3452
      %v3461 = vadd.f32 %v3428, %v3453
      %v3462 = vadd.f32 %v3429, %v3454
      %v3463 = vadd.f32 %v3430, %v3455
      %v3464 = vld [vmem:[#allocation3 + $0x40] sm:$0xff]
      %v3465 = vperm.slane %v3350, 3
      %v3466 = vmul.f32 %v3374, %v3465
      %v3467 = vmul.f32 %v3375, %v3465
      %v3468 = vmul.f32 %v3376, %v3465
      %v3469 = vmul.f32 %v3377, %v3465
      %v3470 = vmul.f32 %v3378, %v3465
      %v3471 = vmul.f32 %v3379, %v3465
      %v3472 = vmul.f32 %v3380, %v3465
      %v3473 = vmul.f32 %v3464, %v3465
      %v3474 = vsel %vm903, %v3466, 0.0
      %v3475 = vsel %vm904, %v3467, 0.0
      %v3476 = vsel %vm905, %v3468, 0.0
      %v3477 = vsel %vm906, %v3469, 0.0
      %v3478 = vsel %vm907, %v3470, 0.0
      %v3479 = vsel %vm908, %v3471, 0.0
      %v3480 = vsel %vm909, %v3472, 0.0
      %v3481 = vsel %vm910, %v3473, 0.0
      %v3482 = vadd.f32 %v3456, %v3474
      %v3483 = vadd.f32 %v3457, %v3475
      %v3484 = vadd.f32 %v3458, %v3476
      %v3485 = vadd.f32 %v3459, %v3477
      %v3486 = vadd.f32 %v3460, %v3478
      %v3487 = vadd.f32 %v3461, %v3479
      %v3488 = vadd.f32 %v3462, %v3480
      %v3489 = vadd.f32 %v3463, %v3481
      %v3490 = vld [vmem:[#allocation3 + $0x42] sm:$0xff]
      %v3491 = vperm.slane %v3350, 5
      %v3492 = vmul.f32 %v3432, %v3491
      %v3493 = vmul.f32 %v3433, %v3491
      %v3494 = vmul.f32 %v3434, %v3491
      %v3495 = vmul.f32 %v3435, %v3491
      %v3496 = vmul.f32 %v3436, %v3491
      %v3497 = vmul.f32 %v3437, %v3491
      %v3498 = vmul.f32 %v3438, %v3491
      %v3499 = vmul.f32 %v3490, %v3491
      %v3500 = vsel %vm977, %v3492, 0.0
      %v3501 = vsel %vm978, %v3493, 0.0
      %v3502 = vsel %vm979, %v3494, 0.0
      %v3503 = vsel %vm980, %v3495, 0.0
      %v3504 = vsel %vm981, %v3496, 0.0
      %v3505 = vsel %vm982, %v3497, 0.0
      %v3506 = vsel %vm983, %v3498, 0.0
      %v3507 = vsel %vm984, %v3499, 0.0
      %v3508 = vadd.f32 %v3482, %v3500
      %v3509 = vadd.f32 %v3483, %v3501
      %v3510 = vadd.f32 %v3484, %v3502
      %v3511 = vadd.f32 %v3485, %v3503
      %v3512 = vadd.f32 %v3486, %v3504
      %v3513 = vadd.f32 %v3487, %v3505
      %v3514 = vadd.f32 %v3488, %v3506
      %v3515 = vadd.f32 %v3489, %v3507
      %v3516 = vld [vmem:[#allocation3 + $0x48] sm:$0xff]
      %v3517 = vperm.slane %v3350, 6
      %v3518 = vmul.f32 %v3375, %v3517
      %v3519 = vmul.f32 %v3376, %v3517
      %v3520 = vmul.f32 %v3377, %v3517
      %v3521 = vmul.f32 %v3378, %v3517
      %v3522 = vmul.f32 %v3379, %v3517
      %v3523 = vmul.f32 %v3380, %v3517
      %v3524 = vmul.f32 %v3464, %v3517
      %v3525 = vmul.f32 %v3516, %v3517
      %v3526 = vsel %vm903, %v3518, 0.0
      %v3527 = vsel %vm904, %v3519, 0.0
      %v3528 = vsel %vm905, %v3520, 0.0
      %v3529 = vsel %vm906, %v3521, 0.0
      %v3530 = vsel %vm907, %v3522, 0.0
      %v3531 = vsel %vm908, %v3523, 0.0
      %v3532 = vsel %vm909, %v3524, 0.0
      %v3533 = vsel %vm910, %v3525, 0.0
      %v3534 = vadd.f32 %v3508, %v3526
      %v3535 = vadd.f32 %v3509, %v3527
      %v3536 = vadd.f32 %v3510, %v3528
      %v3537 = vadd.f32 %v3511, %v3529
      %v3538 = vadd.f32 %v3512, %v3530
      %v3539 = vadd.f32 %v3513, %v3531
      %v3540 = vadd.f32 %v3514, %v3532
      %v3541 = vadd.f32 %v3515, %v3533
      %v3542 = vld [vmem:[#allocation3 + $0x41] sm:$0xff]
      %v3543 = vld [vmem:[#allocation3 + $0x49] sm:$0xff]
      %v3544 = vperm.slane %v3350, 7
      %v3545 = vmul.f32 %v3408, %v3544
      %v3546 = vmul.f32 %v3409, %v3544
      %v3547 = vmul.f32 %v3410, %v3544
      %v3548 = vmul.f32 %v3411, %v3544
      %v3549 = vmul.f32 %v3412, %v3544
      %v3550 = vmul.f32 %v3413, %v3544
      %v3551 = vmul.f32 %v3542, %v3544
      %v3552 = vmul.f32 %v3543, %v3544
      %v3553 = vadd.f32 %v3534, %v3545
      %v3554 = vadd.f32 %v3535, %v3546
      %v3555 = vadd.f32 %v3536, %v3547
      %v3556 = vadd.f32 %v3537, %v3548
      %v3557 = vadd.f32 %v3538, %v3549
      %v3558 = vadd.f32 %v3539, %v3550
      %v3559 = vadd.f32 %v3540, %v3551
      %v3560 = vadd.f32 %v3541, %v3552
      %v3561 = vld [vmem:[#allocation3 + $0x12] sm:$0xff]
      %v3562 = vld [vmem:[#allocation3 + $0x1a] sm:$0xff]
      %v3563 = vld [vmem:[#allocation3 + $0x22] sm:$0xff]
      %v3564 = vld [vmem:[#allocation3 + $0x2a] sm:$0xff]
      %v3565 = vld [vmem:[#allocation3 + $0x32] sm:$0xff]
      %v3566 = vld [vmem:[#allocation3 + $0x3a] sm:$0xff]
      %v3567 = vld [vmem:[#allocation3 + $0x42] sm:$0xff]
      %v3568 = vld [vmem:[#allocation3 + $0x4a] sm:$0xff]
      %v3569 = vperm.slane %v3351, 0
      %v3570 = vmul.f32 %v3561, %v3569
      %v3571 = vmul.f32 %v3562, %v3569
      %v3572 = vmul.f32 %v3563, %v3569
      %v3573 = vmul.f32 %v3564, %v3569
      %v3574 = vmul.f32 %v3565, %v3569
      %v3575 = vmul.f32 %v3566, %v3569
      %v3576 = vmul.f32 %v3567, %v3569
      %v3577 = vmul.f32 %v3568, %v3569
      %v3578 = vsel %vm977, %v3570, 0.0
      %v3579 = vsel %vm978, %v3571, 0.0
      %v3580 = vsel %vm979, %v3572, 0.0
      %v3581 = vsel %vm980, %v3573, 0.0
      %v3582 = vsel %vm981, %v3574, 0.0
      %v3583 = vsel %vm982, %v3575, 0.0
      %v3584 = vsel %vm983, %v3576, 0.0
      %v3585 = vsel %vm984, %v3577, 0.0
      %v3586 = vadd.f32 %v3553, %v3578
      %v3587 = vadd.f32 %v3554, %v3579
      %v3588 = vadd.f32 %v3555, %v3580
      %v3589 = vadd.f32 %v3556, %v3581
      %v3590 = vadd.f32 %v3557, %v3582
      %v3591 = vadd.f32 %v3558, %v3583
      %v3592 = vadd.f32 %v3559, %v3584
      %v3593 = vadd.f32 %v3560, %v3585
      %v3594 = vadd.f32 %v3330, %v3586
      %v3595 = vadd.f32 %v3331, %v3587
      %v3596 = vadd.f32 %v3332, %v3588
      %v3597 = vadd.f32 %v3333, %v3589
      %v3598 = vadd.f32 %v3334, %v3590
      %v3599 = vadd.f32 %v3335, %v3591
      %v3600 = vadd.f32 %v3336, %v3592
      %v3601 = vadd.f32 %v3337, %v3593
      %v3602 = vmul.f32 %v3594, 0.5
      %v3603 = vmul.f32 %v3595, 0.5
      %v3604 = vmul.f32 %v3596, 0.5
      %v3605 = vmul.f32 %v3597, 0.5
      %v3606 = vmul.f32 %v3598, 0.5
      %v3607 = vmul.f32 %v3599, 0.5
      %v3608 = vmul.f32 %v3600, 0.5
      %v3609 = vmul.f32 %v3601, 0.5
      %v3610 = vmul.f32 %v3594, 0.044715
      %v3611 = vmul.f32 %v3595, 0.044715
      %v3612 = vmul.f32 %v3596, 0.044715
      %v3613 = vmul.f32 %v3597, 0.044715
      %v3614 = vmul.f32 %v3598, 0.044715
      %v3615 = vmul.f32 %v3599, 0.044715
      %v3616 = vmul.f32 %v3600, 0.044715
      %v3617 = vmul.f32 %v3601, 0.044715
      %v3618 = vmul.f32 %v3610, %v3594
      %v3619 = vmul.f32 %v3611, %v3595
      %v3620 = vmul.f32 %v3612, %v3596
      %v3621 = vmul.f32 %v3613, %v3597
      %v3622 = vmul.f32 %v3614, %v3598
      %v3623 = vmul.f32 %v3615, %v3599
      %v3624 = vmul.f32 %v3616, %v3600
      %v3625 = vmul.f32 %v3617, %v3601
      %v3626 = vmul.f32 %v3618, %v3594
      %v3627 = vmul.f32 %v3619, %v3595
      %v3628 = vmul.f32 %v3620, %v3596
      %v3629 = vmul.f32 %v3621, %v3597
      %v3630 = vmul.f32 %v3622, %v3598
      %v3631 = vmul.f32 %v3623, %v3599
      %v3632 = vmul.f32 %v3624, %v3600
      %v3633 = vmul.f32 %v3625, %v3601
      %v3634 = vadd.f32 %v3594, %v3626
      %v3635 = vadd.f32 %v3595, %v3627
      %v3636 = vadd.f32 %v3596, %v3628
      %v3637 = vadd.f32 %v3597, %v3629
      %v3638 = vadd.f32 %v3598, %v3630
      %v3639 = vadd.f32 %v3599, %v3631
      %v3640 = vadd.f32 %v3600, %v3632
      %v3641 = vadd.f32 %v3601, %v3633
      %v3642 = vmul.f32 %v3634, 0.7978846
      %v3643 = vmul.f32 %v3635, 0.7978846
      %v3644 = vmul.f32 %v3636, 0.7978846
      %v3645 = vmul.f32 %v3637, 0.7978846
      %v3646 = vmul.f32 %v3638, 0.7978846
      %v3647 = vmul.f32 %v3639, 0.7978846
      %v3648 = vmul.f32 %v3640, 0.7978846
      %v3649 = vmul.f32 %v3641, 0.7978846
      %v3650 = vtanh.pop %v3642
      %v3651 = vtanh.pop %v3643
      %v3652 = vtanh.pop %v3644
      %v3653 = vtanh.pop %v3645
      %v3654 = vtanh.pop %v3646
      %v3655 = vtanh.pop %v3647
      %v3656 = vtanh.pop %v3648
      %v3657 = vtanh.pop %v3649
      %v3658 = vadd.f32 %v3650, 1.0
      %v3659 = vadd.f32 %v3651, 1.0
      %v3660 = vadd.f32 %v3652, 1.0
      %v3661 = vadd.f32 %v3653, 1.0
      %v3662 = vadd.f32 %v3654, 1.0
      %v3663 = vadd.f32 %v3655, 1.0
      %v3664 = vadd.f32 %v3656, 1.0
      %v3665 = vadd.f32 %v3657, 1.0
      %v3666 = vmul.f32 %v3602, %v3658
      %v3667 = vmul.f32 %v3603, %v3659
      %v3668 = vmul.f32 %v3604, %v3660
      %v3669 = vmul.f32 %v3605, %v3661
      %v3670 = vmul.f32 %v3606, %v3662
      %v3671 = vmul.f32 %v3607, %v3663
      %v3672 = vmul.f32 %v3608, %v3664
      %v3673 = vmul.f32 %v3609, %v3665
      %v3674 = vld [vmem:[%s19] sm:$0x1]
      %v3676 = vperm.slane %v3674, 0
      %v3678 = vmul.f32 %v3666, %v3676
      %v3679 = vmul.f32 %v3667, %v3676
      %v3680 = vmul.f32 %v3668, %v3676
      %v3681 = vmul.f32 %v3669, %v3676
      %v3682 = vmul.f32 %v3670, %v3676
      %v3683 = vmul.f32 %v3671, %v3676
      %v3684 = vmul.f32 %v3672, %v3676
      %v3685 = vmul.f32 %v3673, %v3676
      %v3686 = vld [vmem:[%s20] sm:$0x1]
      %v3688 = vperm.slane %v3686, 0
      %v3690 = vadd.f32 %v3678, %v3688
      %v3691 = vadd.f32 %v3679, %v3688
      %v3692 = vadd.f32 %v3680, %v3688
      %v3693 = vadd.f32 %v3681, %v3688
      %v3694 = vadd.f32 %v3682, %v3688
      %v3695 = vadd.f32 %v3683, %v3688
      %v3696 = vadd.f32 %v3684, %v3688
      %v3697 = vadd.f32 %v3685, %v3688
      %v3698 = vpack.c.bf16 %v3691, %v3690
      %v3699 = vpack.c.bf16 %v3693, %v3692
      %v3700 = vpack.c.bf16 %v3695, %v3694
      %v3701 = vpack.c.bf16 %v3697, %v3696
      %v3702 = vld [vmem:[%s21] sm:$0xf]
      %v3703 = vld [vmem:[%s21 + $0x4] sm:$0xf]
      %v3704 = vld [vmem:[%s21 + $0x8] sm:$0xf]
      %v3705 = vld [vmem:[%s21 + $0xc] sm:$0xf]
      %v3706 = vld [vmem:[%s21 + $0x10] sm:$0xf]
      %v3707 = vld [vmem:[%s21 + $0x14] sm:$0xf]
      %v3708 = vld [vmem:[%s21 + $0x18] sm:$0xf]
      %v3709 = vld [vmem:[%s21 + $0x1c] sm:$0xf]
      %v3710 = vld [vmem:[%s21 + $0x20] sm:$0xf]
      %v3711 = vld [vmem:[%s21 + $0x24] sm:$0xf]
      %v3712 = vld [vmem:[%s21 + $0x28] sm:$0xf]
      %v3713 = vld [vmem:[%s21 + $0x2c] sm:$0xf]
      %v3714 = vld [vmem:[%s21 + $0x30] sm:$0xf]
      %v3715 = vld [vmem:[%s21 + $0x34] sm:$0xf]
      %v3716 = vld [vmem:[%s21 + $0x38] sm:$0xf]
      %v3717 = vld [vmem:[%s21 + $0x3c] sm:$0xf]
      %v3718 = vld [vmem:[%s22] sm:$0x1]
      %v3720 = vperm.slane %v3718, 0
      %v3738 = vunpack.c.l.b16 %v3702
      %v3739 = vunpack.c.l.b16 %v3703
      %v3740 = vunpack.c.l.b16 %v3704
      %v3741 = vunpack.c.l.b16 %v3705
      %v3742 = vunpack.c.l.b16 %v3706
      %v3743 = vunpack.c.l.b16 %v3707
      %v3744 = vunpack.c.l.b16 %v3708
      %v3745 = vunpack.c.l.b16 %v3709
      %v3746 = vunpack.c.l.b16 %v3710
      %v3747 = vunpack.c.l.b16 %v3711
      %v3748 = vunpack.c.l.b16 %v3712
      %v3749 = vunpack.c.l.b16 %v3713
      %v3750 = vunpack.c.l.b16 %v3714
      %v3751 = vunpack.c.l.b16 %v3715
      %v3752 = vunpack.c.l.b16 %v3716
      %v3753 = vunpack.c.l.b16 %v3717
      %v3754 = vpack.c.b16 %v3739, %v3738
      %v3755 = vpack.c.b16 %v3741, %v3740
      %v3756 = vpack.c.b16 %v3743, %v3742
      %v3757 = vpack.c.b16 %v3745, %v3744
      %v3758 = vpack.c.b16 %v3747, %v3746
      %v3759 = vpack.c.b16 %v3749, %v3748
      %v3760 = vpack.c.b16 %v3751, %v3750
      %v3761 = vpack.c.b16 %v3753, %v3752
      %3770 = vmatpush.bf16.msra.mxu0 %v3761
      %3771 = vmatpush.bf16.msra.mxu0 %v3760
      %3772 = vmatpush.bf16.msra.mxu0 %v3759
      %3773 = vmatpush.bf16.msra.mxu0 %v3758
      %3774 = vmatpush.bf16.msra.mxu0 %v3757
      %3775 = vmatpush.bf16.msra.mxu0 %v3756
      %3776 = vmatpush.bf16.msra.mxu0 %v3755
      %3777 = vmatpush.bf16.msra.mxu0 %v3754
      %3778 = vmatmul.bf16.gmra.mxu0 %v3698
      %v3779 = vpop.f32.mrf.mxu0
      %v3780 = vadd.f32 %v3720, %v3779
      %v3781 = vpop.f32.mrf.mxu0
      %v3782 = vadd.f32 %v3720, %v3781
      %3783 = vmatmul.bf16.gmra.mxu0 %v3699
      %v3784 = vpop.f32.mrf.mxu0
      %v3785 = vadd.f32 %v3720, %v3784
      %v3786 = vpop.f32.mrf.mxu0
      %v3787 = vadd.f32 %v3720, %v3786
      %3788 = vmatmul.bf16.gmra.mxu0 %v3700
      %v3789 = vpop.f32.mrf.mxu0
      %v3790 = vadd.f32 %v3720, %v3789
      %v3791 = vpop.f32.mrf.mxu0
      %v3792 = vadd.f32 %v3720, %v3791
      %3793 = vmatmul.bf16.gmra.mxu0 %v3701
      %v3794 = vpop.f32.mrf.mxu0
      %v3795 = vadd.f32 %v3720, %v3794
      %v3796 = vpop.f32.mrf.mxu0
      %v3797 = vadd.f32 %v3720, %v3796
      %3798 = vdwg.mxu0
      %v3799 = vadd.f32 %v2969, %v3780
      %v3800 = vadd.f32 %v2970, %v3782
      %v3801 = vadd.f32 %v2971, %v3785
      %v3802 = vadd.f32 %v2972, %v3787
      %v3803 = vadd.f32 %v2973, %v3790
      %v3804 = vadd.f32 %v2974, %v3792
      %v3805 = vadd.f32 %v2975, %v3795
      %v3806 = vadd.f32 %v2976, %v3797
      %3807 = vst.msk [vmem:[%s710] sm:$0xff] %vm841, %v3799
      %3808 = vst.msk [vmem:[%s710 + $0x8] sm:$0xff] %vm841, %v3800
      %3809 = vst.msk [vmem:[%s710 + $0x10] sm:$0xff] %vm841, %v3801
      %3810 = vst.msk [vmem:[%s710 + $0x18] sm:$0xff] %vm841, %v3802
      %3811 = vst.msk [vmem:[%s710 + $0x20] sm:$0xff] %vm841, %v3803
      %3812 = vst.msk [vmem:[%s710 + $0x28] sm:$0xff] %vm841, %v3804
      %3813 = vst.msk [vmem:[%s710 + $0x30] sm:$0xff] %vm841, %v3805
      %3814 = vst.msk [vmem:[%s710 + $0x38] sm:$0xff] %vm841, %v3806
      %p3815 = scmp.lt.s32.totalorder %s34, 1
      %s3816 = scalar_select %p3815, %s34, 1
      %s3817 = smul.addr %s3816, 8
      %s3818 = smul.addr %s3817, 8
      %s3819 = scalar_lea.vmem %s23, %s3818
      // Predicated region
      $region113: #{tpu_custom_call.1} parent=111 // pred_check
        %p3820 = pneg %p540
      $region114: #{tpu_custom_call.1} parent=111 // pred_check_branch
        %3822 = sbr.rel (%p3820) target = $region116
      $region115: #{tpu_custom_call.1} parent=111 // pred_region
        _
      $region116: #{tpu_custom_call.1} parent=111 // pred_fallthru
        _
    $region112: #{tpu_custom_call.1} parent=5 // pred_fallthru
      _
    %p3823 = scmp.le.s32.totalorder 2, %s29
    // Predicated region
    $region117: #{tpu_custom_call.1} parent=5 // pred_check
      %p3824 = pneg %p3823
    $region118: #{tpu_custom_call.1} parent=5 // pred_check_branch
      %3826 = sbr.rel (%p3824) target = $region120
    $region119: #{tpu_custom_call.1} parent=5 // pred_region
      %s3827 = ssub.s32 %s29, 2
      // Predicated region
      $region121: #{tpu_custom_call.1} parent=119 // pred_check
        %p3828 = pneg %p546
      $region122: #{tpu_custom_call.1} parent=119 // pred_check_branch
        %3830 = sbr.rel (%p3828) target = $region124
      $region123: #{tpu_custom_call.1} parent=119 // pred_region
        %p3831 = scmp.lt.s32.totalorder %s35, 1
        %s3832 = scalar_select %p3831, %s35, 1
        %s3833 = smul.addr %s3832, 8
        %s3834 = smul.addr %s3833, 8
        %s3835 = scalar_lea.vmem %s23, %s3834
      $region124: #{tpu_custom_call.1} parent=119 // pred_fallthru
        _
    $region120: #{tpu_custom_call.1} parent=5 // pred_fallthru
      _
  $region6: #{tpu_custom_call.1} parent=0 // loop_footer
    %s33 = sadd.s32 1, %s29
  $region7: #{tpu_custom_call.1} parent=0 // loop_footer_branch
    %28 = sbr.rel target = $region3
  $region8: #{tpu_custom_call.1} parent=0 // loop_exit
    _

</llo_original>
